<compile_context>
chip_gen: v5e
topology: v5e:2x2
jax: 0.10.0
libtpu: 0.0.40
codegen_flags: <defaults>
</compile_context>

<pallas_src>
import jax
import jax.numpy as jnp
from jax.experimental import pallas as pl
from jax.experimental.pallas import tpu as pltpu

_VMEM_LIMIT = 48 * 1024 * 1024   # < 64 MiB physical VMEM on v7x; fine on v5e/v6e.


def _largest_divisor_leq(n, target):
    """Largest divisor of n that is <= target (>= 1)."""
    n = int(n)
    target = max(1, min(n, int(target)))
    for d in range(target, 0, -1):
        if n % d == 0:
            return d
    return 1


# ----------------------------------------------------------------------------
# Generic fused sum-reduction kernel.
#
# All `arrays` share one shape (..., h, w); they are reshaped (free, leading dims
# only) to (L, h, w) and tiled over the leading axis with the largest block that
# fits the VMEM budget (blocks keep the full (h, w) trailing dims so the (8,128)
# divisibility rule is satisfied for any resolution and no padding is needed).
# `compute_sums(list_of_f32_blocks)` returns `n_out` scalar partial sums which are
# accumulated across the grid in f32 accumulator slabs (one slab per split).
# ----------------------------------------------------------------------------
def _fused_sums(arrays, compute_sums, n_out, budget_bytes=8 * 1024 * 1024):
    shape = arrays[0].shape
    h, w = int(shape[-2]), int(shape[-1])
    lead = 1
    for s in shape[:-2]:
        lead *= int(s)
    arrs = [a.reshape(lead, h, w) for a in arrays]
    n_in = len(arrs)

    itemsize = max(int(a.dtype.itemsize) for a in arrs)
    per_row = n_in * 2 * h * w * itemsize              # all streams, double-buffered
    cb = _largest_divisor_leq(lead, max(1, budget_bytes // max(per_row, 1)))
    num_blocks = lead // cb
    # Split the reduction across two partial accumulators so the "parallel" grid
    # axis can be sharded over v7x's two TensorCores (no-op on v5e/v6e).
    nsplit = 2 if (num_blocks % 2 == 0 and num_blocks > 1) else 1
    steps = num_blocks // nsplit

    def kernel(*refs):
        in_refs = refs[:n_in]
        out_refs = refs[n_in:]

        @pl.when(pl.program_id(1) == 0)
        def _():
            for o in out_refs:
                o[...] = jnp.zeros_like(o)

        blocks = [r[...].astype(jnp.float32) for r in in_refs]
        sums = compute_sums(blocks)
        for o, s in zip(out_refs, sums):
            o[...] += s          # broadcast the scalar partial sum into the slab

    in_spec = pl.BlockSpec((cb, h, w),
                           lambda sp, i, _steps=steps: (sp * _steps + i, 0, 0))
    out_spec = pl.BlockSpec((1, 8, 128), lambda sp, i: (sp, 0, 0))

    outs = pl.pallas_call(
        kernel,
        out_shape=tuple(jax.ShapeDtypeStruct((nsplit, 8, 128), jnp.float32)
                        for _ in range(n_out)),
        grid_spec=pltpu.PrefetchScalarGridSpec(
            num_scalar_prefetch=0,
            grid=(nsplit, steps),
            in_specs=[in_spec] * n_in,
            out_specs=[out_spec] * n_out,
        ),
        compiler_params=pltpu.CompilerParams(
            dimension_semantics=("parallel", "arbitrary"),
            vmem_limit_bytes=_VMEM_LIMIT),
    )(*arrs)
    if not isinstance(outs, (list, tuple)):
        outs = (outs,)
    # Every element of a slab holds the same partial sum; [s, 0, 0] is split s's total.
    return tuple(jnp.sum(o[:, 0, 0]) for o in outs)


# ---- per-call-site reduction bodies -----------------------------------------
def _iframe_sums(blocks):
    ifr, ftp, g0, g1 = blocks
    d = ftp - ifr
    return (jnp.sum(jnp.abs(d)),
            jnp.sum(d * d),
            jnp.sum(jnp.abs(g0 - ifr)),
            jnp.sum(jnp.abs(g1 - ifr)))


def _warp_sums(blocks):
    w0, i1, w1, i0 = blocks
    return (jnp.sum(jnp.abs(w0 - i1)), jnp.sum(jnp.abs(w1 - i0)))


def _pair_abs_sum(blocks):
    a, b = blocks
    return (jnp.sum(jnp.abs(a - b)),)


def _smooth_sums(blocks):
    # Horizontal + vertical total-variation sums for both flow tensors,
    # computed from a single read of each flow (blocks hold whole images,
    # so both shifted diffs are fully contained in the block).
    def hv(f):
        dh = f[:, :, 1:] - f[:, :, :-1]
        dv = f[:, 1:, :] - f[:, :-1, :]
        return jnp.sum(jnp.abs(dh)), jnp.sum(jnp.abs(dv))

    f10, f01 = blocks
    h10, v10 = hv(f10)
    h01, v01 = hv(f01)
    return (h10, v10, h01, v01)


# ----------------------------------------------------------------------------
# Bicubic resize (align_corners=True) as separable matmuls, batched over images:
#   out = Wy @ img @ Wx^T   with Wy: (out_h, in_h), Wx^T: (in_w, out_w).
# B images per grid step; the width pass runs as a single (B*H, W)@(W, out_w)
# matmul so the MXU sees a tall M dimension instead of one tiny image at a time.
# ----------------------------------------------------------------------------
def _resize_kernel(wy_ref, wxt_ref, img_ref, o_ref):
    B, H, W = img_ref.shape
    OW = wxt_ref.shape[1]
    wy = wy_ref[...]
    wxt = wxt_ref[...]
    x = img_ref[...].astype(jnp.float32)

    if H % 8 == 0:
        # Width pass: one big matmul with M = B*H (layout-free reshape: H % 8 == 0).
        t = jnp.dot(x.reshape(B * H, W), wxt,
                    preferred_element_type=jnp.float32).reshape(B, H, OW)
        for b in range(B):
            o_ref[b] = jnp.dot(wy, t[b], preferred_element_type=jnp.float32)
    else:
        # Fallback: per-image separable matmuls (still B images per grid step).
        for b in range(B):
            tb = jnp.dot(x[b], wxt, preferred_element_type=jnp.float32)
            o_ref[b] = jnp.dot(wy, tb, preferred_element_type=jnp.float32)


def _bicubic_weight_matrix(out_size, in_size):
    """PyTorch-style bicubic (A=-0.75), align_corners=True, index clamping."""
    A = -0.75
    i = jnp.arange(out_size, dtype=jnp.float32)
    if out_size == 1:
        src = jnp.zeros_like(i)
    else:
        src = i * (in_size - 1) / (out_size - 1)
    x0 = jnp.floor(src)
    t = src - x0

    def c1(x):  # |x| <= 1
        return ((A + 2.0) * x - (A + 3.0)) * x * x + 1.0

    def c2(x):  # 1 < |x| < 2
        return ((A * x - 5.0 * A) * x + 8.0 * A) * x - 4.0 * A

    w = jnp.stack([c2(t + 1.0), c1(t), c1(1.0 - t), c2(2.0 - t)], axis=1)   # (out, 4)
    idx = x0[:, None].astype(jnp.int32) + jnp.arange(-1, 3)[None, :]        # (out, 4)
    idx = jnp.clip(idx, 0, in_size - 1)
    onehot = jax.nn.one_hot(idx, in_size, dtype=jnp.float32)                # (out, 4, in)
    return jnp.sum(w[:, :, None] * onehot, axis=1)                          # (out, in)


def bicubic_resize(imgs, out_h, out_w, budget_bytes=4 * 1024 * 1024):
    """imgs: (N, C, H, W) -> (N, C, out_h, out_w), bicubic align_corners=True, f32."""
    N, C, H, W = imgs.shape
    NC = N * C
    Wy = _bicubic_weight_matrix(out_h, H)                  # (out_h, H)
    WxT = _bicubic_weight_matrix(out_w, W).T               # (W, out_w)
    flat = imgs.reshape(NC, H, W)                          # native dtype; cast in-kernel

    per_img = (H * W + out_h * out_w) * 4 * 2              # in+out, double buffered, f32
    b_target = min(32, max(1, budget_bytes // max(per_img, 1)))
    B = _largest_divisor_leq(NC, b_target)

    out = pl.pallas_call(
        _resize_kernel,
        out_shape=jax.ShapeDtypeStruct((NC, out_h, out_w), jnp.float32),
        grid_spec=pltpu.PrefetchScalarGridSpec(
            num_scalar_prefetch=0,
            grid=(NC // B,),
            in_specs=[pl.BlockSpec((out_h, H), lambda b: (0, 0)),
                      pl.BlockSpec((W, out_w), lambda b: (0, 0)),
                      pl.BlockSpec((B, H, W), lambda b: (b, 0, 0))],
            out_specs=pl.BlockSpec((B, out_h, out_w), lambda b: (b, 0, 0)),
        ),
        compiler_params=pltpu.CompilerParams(
            dimension_semantics=("parallel",),
            vmem_limit_bytes=_VMEM_LIMIT),
    )(Wy, WxT, flat)
    return out.reshape(N, C, out_h, out_w)


# ----------------------------------------------------------------------------
# flow_warp: bilinear backward warp (img sampled at pixel + flow), zero padding.
# TODO(synk): flow_warp's exact definition is not in the provided source; this is the
#             standard SuperSloMo-style bilinear grid_sample warp, done in plain JAX
#             because it is a data-dependent gather.
# ----------------------------------------------------------------------------
def flow_warp(img, flow):
    # img: (N, C, H, W), flow: (N, 2, H, W) with [dx, dy]
    N, C, H, W = img.shape
    gy = jnp.arange(H, dtype=jnp.float32)[:, None]
    gx = jnp.arange(W, dtype=jnp.float32)[None, :]
    x = gx[None, :, :] + flow[:, 0]     # (N, H, W)
    y = gy[None, :, :] + flow[:, 1]

    x0 = jnp.floor(x)
    y0 = jnp.floor(y)
    x1 = x0 + 1.0
    y1 = y0 + 1.0
    wx1 = x - x0
    wx0 = 1.0 - wx1
    wy1 = y - y0
    wy0 = 1.0 - wy1

    flat = img.reshape(N, C, H * W)

    def gather(yy, xx):
        valid = ((xx >= 0) & (xx <= W - 1) & (yy >= 0) & (yy <= H - 1)).astype(img.dtype)
        xc = jnp.clip(xx, 0, W - 1).astype(jnp.int32)
        yc = jnp.clip(yy, 0, H - 1).astype(jnp.int32)
        idx = (yc * W + xc).reshape(N, 1, H * W)
        idx = jnp.broadcast_to(idx, (N, C, H * W))
        g = jnp.take_along_axis(flat, idx, axis=2).reshape(N, C, H, W)
        return g * valid.reshape(N, 1, H, W)

    out = (gather(y0, x0) * (wy0 * wx0)[:, None]
           + gather(y0, x1) * (wy0 * wx1)[:, None]
           + gather(y1, x0) * (wy1 * wx0)[:, None]
           + gather(y1, x1) * (wy1 * wx1)[:, None])
    return out


# ----------------------------------------------------------------------------
# MyPixelWiseLoss forward (loss_weight=1.0, reduction='mean' for L1Loss / MSELoss).
# ----------------------------------------------------------------------------
class MyPixelWiseLoss:
    def __init__(self, H=None, W=None):
        # The torch grid buffer is only used inside flow_warp; it is rebuilt there.
        self.H = H
        self.W = W

    def __call__(self, result_output, gt):
        Ft_p = result_output['Ft_p']            # (n, fs, c, h, w)
        I0 = result_output['I0']                # (n*fs, c, h, w)
        I1 = result_output['I1']
        g_I0_F_t_0 = result_output['g_I0_F_t_0']
        g_I1_F_t_1 = result_output['g_I1_F_t_1']
        F_1_0 = result_output['F_1_0']          # (n*fs, 2, h, w)
        F_0_1 = result_output['F_0_1']
        output = result_output['output']        # same shape as gt

        n, fs, c, h, w = Ft_p.shape
        vfi_gt = gt[:, 1:-1]                    # (n, fs, c, uph, upw)
        uph, upw = vfi_gt.shape[-2:]

        Ft_p_f = Ft_p.reshape(-1, c, h, w)
        IFrame = vfi_gt.reshape(-1, c, uph, upw)
        IFrame = bicubic_resize(IFrame, h, w)   # Pallas batched-matmul kernel

        # One fused pass over IFrame / Ft_p / g_I0 / g_I1 (IFrame streamed once).
        abs_rec, sq_rec, abs_g0, abs_g1 = _fused_sums(
            [IFrame, Ft_p_f, g_I0_F_t_0, g_I1_F_t_1], _iframe_sums, 4)
        numel = Ft_p_f.size
        recnLoss = abs_rec / numel
        prcpLoss = sq_rec / numel

        # One fused pass for both backward-warp L1 terms.
        w0 = flow_warp(I0, F_1_0)
        w1 = flow_warp(I1, F_0_1)
        abs_w0, abs_w1 = _fused_sums([w0, I1, w1, I0], _warp_sums, 2)
        warpLoss = (abs_g0 + abs_g1 + abs_w0 + abs_w1) / numel

        # One fused pass for all four smoothness sums (each flow read once;
        # no F[..., :-1]/F[..., 1:] slice materialization in HBM).
        h10, v10, h01, v01 = _fused_sums([F_1_0, F_0_1], _smooth_sums, 4)
        fn_, fc_, fh_, fw_ = F_1_0.shape
        nh = fn_ * fc_ * fh_ * (fw_ - 1)
        nv = fn_ * fc_ * (fh_ - 1) * fw_
        loss_smooth = (h10 / nh + v10 / nv) + (h01 / nh + v01 / nv)

        # L1(gt, output).
        (abs_out,) = _fused_sums([gt, output], _pair_abs_sum, 1)
        out_l1 = abs_out / gt.size

        loss = (204.0 * recnLoss + 102.0 * warpLoss + 0.005 * prcpLoss
                + loss_smooth + 204.0 * out_l1)
        return loss


if __name__ == "__main__":
    key = jax.random.PRNGKey(0)
    keys = jax.random.split(key, 9)

    # Small shapes consistent with the forward:
    n, fs, c = 2, 3, 3
    h = w = 16
    uph = upw = 32
    nf = n * fs

    Ft_p = jax.random.normal(keys[0], (n, fs, c, h, w), jnp.float32)
    I0 = jax.random.normal(keys[1], (nf, c, h, w), jnp.float32)
    I1 = jax.random.normal(keys[2], (nf, c, h, w), jnp.float32)
    g_I0_F_t_0 = jax.random.normal(keys[3], (nf, c, h, w), jnp.float32)
    g_I1_F_t_1 = jax.random.normal(keys[4], (nf, c, h, w), jnp.float32)
    F_1_0 = jax.random.normal(keys[5], (nf, 2, h, w), jnp.float32)
    F_0_1 = jax.random.normal(keys[6], (nf, 2, h, w), jnp.float32)
    gt = jax.random.normal(keys[7], (n, fs + 2, c, uph, upw), jnp.float32)
    output = jax.random.normal(keys[8], (n, fs + 2, c, uph, upw), jnp.float32)

    result_output = {
        'Ft_p': Ft_p, 'I0': I0, 'I1': I1,
        'g_I0_F_t_0': g_I0_F_t_0, 'g_I1_F_t_1': g_I1_F_t_1,
        'F_1_0': F_1_0, 'F_0_1': F_0_1, 'output': output,
    }

    loss_fn = MyPixelWiseLoss(H=h, W=w)
    loss = jax.jit(lambda ro, g: loss_fn(ro, g))(result_output, gt)
    loss = jax.block_until_ready(loss)
    assert loss.shape == () and bool(jnp.isfinite(loss))
    print("KERNEL_OK")
</pallas_src>

<mosaic_0001>
module attributes {stable_mosaic.version = 11 : i64} {
  func.func @kernel(%arg0: i32, %arg1: i32, %arg2: memref<18x16x16xf32, #tpu.memory_space<vmem>>, %arg3: memref<18x16x16xf32, #tpu.memory_space<vmem>>, %arg4: memref<18x16x16xf32, #tpu.memory_space<vmem>>, %arg5: memref<18x16x16xf32, #tpu.memory_space<vmem>>, %arg6: memref<1x8x128xf32, #tpu.memory_space<vmem>>, %arg7: memref<1x8x128xf32, #tpu.memory_space<vmem>>) attributes {dimension_semantics = [#tpu.dimension_semantics<parallel>, #tpu.dimension_semantics<arbitrary>], iteration_bounds = array<i64: 1, 1>, scalar_prefetch = 0 : i64, scratch_operands = 0 : i64, tpu.core_type = #tpu.core_type<tc>, window_params = [{transform_indices = @transform_0, window_bounds = array<i64: 18, 16, 16>}, {transform_indices = @transform_1, window_bounds = array<i64: 18, 16, 16>}, {transform_indices = @transform_2, window_bounds = array<i64: 18, 16, 16>}, {transform_indices = @transform_3, window_bounds = array<i64: 18, 16, 16>}, {transform_indices = @transform_4, window_bounds = array<i64: 1, 8, 128>}, {transform_indices = @transform_5, window_bounds = array<i64: 1, 8, 128>}]} {
    %c0_i32 = arith.constant 0 : i32
    %0 = arith.cmpi eq, %arg1, %c0_i32 : i32
    %1 = arith.extui %0 : i1 to i32
    %c0_i32_0 = arith.constant 0 : i32
    %2 = arith.cmpi ne, %1, %c0_i32_0 : i32
    scf.if %2 {
      %cst_25 = arith.constant 0.000000e+00 : f32
      %27 = vector.broadcast %cst_25 : f32 to vector<1x8x128xf32>
      %c0_26 = arith.constant 0 : index
      %c0_27 = arith.constant 0 : index
      %c0_28 = arith.constant 0 : index
      %28 = vector.load %arg6[%c0_26, %c0_27, %c0_28] : memref<1x8x128xf32, #tpu.memory_space<vmem>>, vector<1x8x128xf32>
      tpu.vector_store %arg6[%c0_26, %c0_27, %c0_28], %27 {strides = array<i32>} : memref<1x8x128xf32, #tpu.memory_space<vmem>>, vector<1x8x128xf32>,
      %cst_29 = arith.constant 0.000000e+00 : f32
      %29 = vector.broadcast %cst_29 : f32 to vector<1x8x128xf32>
      %c0_30 = arith.constant 0 : index
      %c0_31 = arith.constant 0 : index
      %c0_32 = arith.constant 0 : index
      %30 = vector.load %arg7[%c0_30, %c0_31, %c0_32] : memref<1x8x128xf32, #tpu.memory_space<vmem>>, vector<1x8x128xf32>
      tpu.vector_store %arg7[%c0_30, %c0_31, %c0_32], %29 {strides = array<i32>} : memref<1x8x128xf32, #tpu.memory_space<vmem>>, vector<1x8x128xf32>,
    } else {
    }
    %c0 = arith.constant 0 : index
    %c0_1 = arith.constant 0 : index
    %c0_2 = arith.constant 0 : index
    %3 = vector.load %arg2[%c0, %c0_1, %c0_2] : memref<18x16x16xf32, #tpu.memory_space<vmem>>, vector<18x16x16xf32>
    %c0_3 = arith.constant 0 : index
    %c0_4 = arith.constant 0 : index
    %c0_5 = arith.constant 0 : index
    %4 = vector.load %arg3[%c0_3, %c0_4, %c0_5] : memref<18x16x16xf32, #tpu.memory_space<vmem>>, vector<18x16x16xf32>
    %c0_6 = arith.constant 0 : index
    %c0_7 = arith.constant 0 : index
    %c0_8 = arith.constant 0 : index
    %5 = vector.load %arg4[%c0_6, %c0_7, %c0_8] : memref<18x16x16xf32, #tpu.memory_space<vmem>>, vector<18x16x16xf32>
    %c0_9 = arith.constant 0 : index
    %c0_10 = arith.constant 0 : index
    %c0_11 = arith.constant 0 : index
    %6 = vector.load %arg5[%c0_9, %c0_10, %c0_11] : memref<18x16x16xf32, #tpu.memory_space<vmem>>, vector<18x16x16xf32>
    %7 = arith.subf %3, %4 : vector<18x16x16xf32>
    %8 = math.absf %7 : vector<18x16x16xf32>
    %9 = vector.shape_cast %8 : vector<18x16x16xf32> to vector<1x18x16x16xf32>
    %cst = arith.constant dense<0.000000e+00> : vector<1xf32>
    %10 = vector.multi_reduction <add>, %9, %cst [1, 2, 3] : vector<1x18x16x16xf32> to vector<1xf32>
    %11 = vector.shape_cast %10 : vector<1xf32> to vector<1x1x1x1xf32>
    %12 = vector.extract %11[0, 0, 0, 0] : f32 from vector<1x1x1x1xf32>
    %13 = arith.subf %5, %6 : vector<18x16x16xf32>
    %14 = math.absf %13 : vector<18x16x16xf32>
    %15 = vector.shape_cast %14 : vector<18x16x16xf32> to vector<1x18x16x16xf32>
    %cst_12 = arith.constant dense<0.000000e+00> : vector<1xf32>
    %16 = vector.multi_reduction <add>, %15, %cst_12 [1, 2, 3] : vector<1x18x16x16xf32> to vector<1xf32>
    %17 = vector.shape_cast %16 : vector<1xf32> to vector<1x1x1x1xf32>
    %18 = vector.extract %17[0, 0, 0, 0] : f32 from vector<1x1x1x1xf32>
    %c0_13 = arith.constant 0 : index
    %c0_14 = arith.constant 0 : index
    %c0_15 = arith.constant 0 : index
    %19 = vector.load %arg6[%c0_13, %c0_14, %c0_15] : memref<1x8x128xf32, #tpu.memory_space<vmem>>, vector<1x8x128xf32>
    %20 = vector.broadcast %12 : f32 to vector<1x8x128xf32>
    %21 = arith.addf %19, %20 : vector<1x8x128xf32>
    %c0_16 = arith.constant 0 : index
    %c0_17 = arith.constant 0 : index
    %c0_18 = arith.constant 0 : index
    %22 = vector.load %arg6[%c0_16, %c0_17, %c0_18] : memref<1x8x128xf32, #tpu.memory_space<vmem>>, vector<1x8x128xf32>
    tpu.vector_store %arg6[%c0_16, %c0_17, %c0_18], %21 {strides = array<i32>} : memref<1x8x128xf32, #tpu.memory_space<vmem>>, vector<1x8x128xf32>,
    %c0_19 = arith.constant 0 : index
    %c0_20 = arith.constant 0 : index
    %c0_21 = arith.constant 0 : index
    %23 = vector.load %arg7[%c0_19, %c0_20, %c0_21] : memref<1x8x128xf32, #tpu.memory_space<vmem>>, vector<1x8x128xf32>
    %24 = vector.broadcast %18 : f32 to vector<1x8x128xf32>
    %25 = arith.addf %23, %24 : vector<1x8x128xf32>
    %c0_22 = arith.constant 0 : index
    %c0_23 = arith.constant 0 : index
    %c0_24 = arith.constant 0 : index
    %26 = vector.load %arg7[%c0_22, %c0_23, %c0_24] : memref<1x8x128xf32, #tpu.memory_space<vmem>>, vector<1x8x128xf32>
    tpu.vector_store %arg7[%c0_22, %c0_23, %c0_24], %25 {strides = array<i32>} : memref<1x8x128xf32, #tpu.memory_space<vmem>>, vector<1x8x128xf32>,
    return
  }
  func.func @transform_0(%arg0: i32, %arg1: i32) -> (i32, i32, i32) {
    %c1_i32 = arith.constant 1 : i32
    %0 = arith.muli %arg0, %c1_i32 : i32
    %1 = arith.addi %0, %arg1 : i32
    %c0_i32 = arith.constant 0 : i32
    %c0_i32_0 = arith.constant 0 : i32
    %c0_i32_1 = arith.constant 0 : i32
    return %1, %c0_i32, %c0_i32_0 : i32, i32, i32
  }
  func.func @transform_1(%arg0: i32, %arg1: i32) -> (i32, i32, i32) {
    %c1_i32 = arith.constant 1 : i32
    %0 = arith.muli %arg0, %c1_i32 : i32
    %1 = arith.addi %0, %arg1 : i32
    %c0_i32 = arith.constant 0 : i32
    %c0_i32_0 = arith.constant 0 : i32
    %c0_i32_1 = arith.constant 0 : i32
    return %1, %c0_i32, %c0_i32_0 : i32, i32, i32
  }
  func.func @transform_2(%arg0: i32, %arg1: i32) -> (i32, i32, i32) {
    %c1_i32 = arith.constant 1 : i32
    %0 = arith.muli %arg0, %c1_i32 : i32
    %1 = arith.addi %0, %arg1 : i32
    %c0_i32 = arith.constant 0 : i32
    %c0_i32_0 = arith.constant 0 : i32
    %c0_i32_1 = arith.constant 0 : i32
    return %1, %c0_i32, %c0_i32_0 : i32, i32, i32
  }
  func.func @transform_3(%arg0: i32, %arg1: i32) -> (i32, i32, i32) {
    %c1_i32 = arith.constant 1 : i32
    %0 = arith.muli %arg0, %c1_i32 : i32
    %1 = arith.addi %0, %arg1 : i32
    %c0_i32 = arith.constant 0 : i32
    %c0_i32_0 = arith.constant 0 : i32
    %c0_i32_1 = arith.constant 0 : i32
    return %1, %c0_i32, %c0_i32_0 : i32, i32, i32
  }
  func.func @transform_4(%arg0: i32, %arg1: i32) -> (i32, i32, i32) {
    %c0_i32 = arith.constant 0 : i32
    %c0_i32_0 = arith.constant 0 : i32
    %c0_i32_1 = arith.constant 0 : i32
    return %arg0, %c0_i32, %c0_i32_0 : i32, i32, i32
  }
  func.func @transform_5(%arg0: i32, %arg1: i32) -> (i32, i32, i32) {
    %c0_i32 = arith.constant 0 : i32
    %c0_i32_0 = arith.constant 0 : i32
    %c0_i32_1 = arith.constant 0 : i32
    return %arg0, %c0_i32, %c0_i32_0 : i32, i32, i32
  }
}

module attributes {stable_mosaic.version = 11 : i64} {
  func.func @_resize_kernel(%arg0: i32, %arg1: memref<16x32xf32, #tpu.memory_space<vmem>>, %arg2: memref<32x16xf32, #tpu.memory_space<vmem>>, %arg3: memref<18x32x32xf32, #tpu.memory_space<vmem>>, %arg4: memref<18x16x16xf32, #tpu.memory_space<vmem>>) attributes {dimension_semantics = [#tpu.dimension_semantics<parallel>], iteration_bounds = array<i64: 1>, scalar_prefetch = 0 : i64, scratch_operands = 0 : i64, tpu.core_type = #tpu.core_type<tc>, window_params = [{pipeline_mode = #tpu.pipeline_mode<synchronous>, transform_indices = @transform_0, window_bounds = array<i64: 16, 32>}, {pipeline_mode = #tpu.pipeline_mode<synchronous>, transform_indices = @transform_1, window_bounds = array<i64: 32, 16>}, {transform_indices = @transform_2, window_bounds = array<i64: 18, 32, 32>}, {transform_indices = @transform_3, window_bounds = array<i64: 18, 16, 16>}]} {
    %c0 = arith.constant 0 : index
    %c0_0 = arith.constant 0 : index
    %0 = vector.load %arg1[%c0, %c0_0] : memref<16x32xf32, #tpu.memory_space<vmem>>, vector<16x32xf32>
    %c0_1 = arith.constant 0 : index
    %c0_2 = arith.constant 0 : index
    %1 = vector.load %arg2[%c0_1, %c0_2] : memref<32x16xf32, #tpu.memory_space<vmem>>, vector<32x16xf32>
    %c0_3 = arith.constant 0 : index
    %c0_4 = arith.constant 0 : index
    %c0_5 = arith.constant 0 : index
    %2 = vector.load %arg3[%c0_3, %c0_4, %c0_5] : memref<18x32x32xf32, #tpu.memory_space<vmem>>, vector<18x32x32xf32>
    %3 = vector.shape_cast %2 : vector<18x32x32xf32> to vector<576x32xf32>
    %cst = arith.constant dense<0.000000e+00> : vector<576x16xf32>
    %4 = tpu.matmul %3, %1, %cst {dimension_numbers = #tpu.dot_dimension_numbers<[1], [0], [0], [1], [0, 0, 1, 1], [], []>} : vector<576x32xf32>, vector<32x16xf32>, vector<576x16xf32> -> vector<576x16xf32>
    %5 = vector.shape_cast %4 : vector<576x16xf32> to vector<18x32x16xf32>
    %6 = vector.extract_strided_slice %5 {offsets = [0, 0, 0], sizes = [1, 32, 16], strides = [1, 1, 1]} : vector<18x32x16xf32> to vector<1x32x16xf32>
    %7 = vector.shape_cast %6 : vector<1x32x16xf32> to vector<32x16xf32>
    %cst_6 = arith.constant dense<0.000000e+00> : vector<16x16xf32>
    %8 = tpu.matmul %0, %7, %cst_6 {dimension_numbers = #tpu.dot_dimension_numbers<[1], [0], [0], [1], [0, 0, 1, 1], [], []>} : vector<16x32xf32>, vector<32x16xf32>, vector<16x16xf32> -> vector<16x16xf32>
    %c0_7 = arith.constant 0 : index
    %c0_8 = arith.constant 0 : index
    %c0_9 = arith.constant 0 : index
    %9 = vector.load %arg4[%c0_7, %c0_8, %c0_9] : memref<18x16x16xf32, #tpu.memory_space<vmem>>, vector<1x16x16xf32>
    %10 = vector.shape_cast %9 : vector<1x16x16xf32> to vector<16x16xf32>
    %11 = vector.shape_cast %8 : vector<16x16xf32> to vector<1x16x16xf32>
    tpu.vector_store %arg4[%c0_7, %c0_8, %c0_9], %11 {strides = array<i32>} : memref<18x16x16xf32, #tpu.memory_space<vmem>>, vector<1x16x16xf32>,
    %12 = vector.extract_strided_slice %5 {offsets = [1, 0, 0], sizes = [1, 32, 16], strides = [1, 1, 1]} : vector<18x32x16xf32> to vector<1x32x16xf32>
    %13 = vector.shape_cast %12 : vector<1x32x16xf32> to vector<32x16xf32>
    %cst_10 = arith.constant dense<0.000000e+00> : vector<16x16xf32>
    %14 = tpu.matmul %0, %13, %cst_10 {dimension_numbers = #tpu.dot_dimension_numbers<[1], [0], [0], [1], [0, 0, 1, 1], [], []>} : vector<16x32xf32>, vector<32x16xf32>, vector<16x16xf32> -> vector<16x16xf32>
    %c1 = arith.constant 1 : index
    %c0_11 = arith.constant 0 : index
    %c0_12 = arith.constant 0 : index
    %15 = vector.load %arg4[%c1, %c0_11, %c0_12] : memref<18x16x16xf32, #tpu.memory_space<vmem>>, vector<1x16x16xf32>
    %16 = vector.shape_cast %15 : vector<1x16x16xf32> to vector<16x16xf32>
    %17 = vector.shape_cast %14 : vector<16x16xf32> to vector<1x16x16xf32>
    tpu.vector_store %arg4[%c1, %c0_11, %c0_12], %17 {strides = array<i32>} : memref<18x16x16xf32, #tpu.memory_space<vmem>>, vector<1x16x16xf32>,
    %18 = vector.extract_strided_slice %5 {offsets = [2, 0, 0], sizes = [1, 32, 16], strides = [1, 1, 1]} : vector<18x32x16xf32> to vector<1x32x16xf32>
    %19 = vector.shape_cast %18 : vector<1x32x16xf32> to vector<32x16xf32>
    %cst_13 = arith.constant dense<0.000000e+00> : vector<16x16xf32>
    %20 = tpu.matmul %0, %19, %cst_13 {dimension_numbers = #tpu.dot_dimension_numbers<[1], [0], [0], [1], [0, 0, 1, 1], [], []>} : vector<16x32xf32>, vector<32x16xf32>, vector<16x16xf32> -> vector<16x16xf32>
    %c2 = arith.constant 2 : index
    %c0_14 = arith.constant 0 : index
    %c0_15 = arith.constant 0 : index
    %21 = vector.load %arg4[%c2, %c0_14, %c0_15] : memref<18x16x16xf32, #tpu.memory_space<vmem>>, vector<1x16x16xf32>
    %22 = vector.shape_cast %21 : vector<1x16x16xf32> to vector<16x16xf32>
    %23 = vector.shape_cast %20 : vector<16x16xf32> to vector<1x16x16xf32>
    tpu.vector_store %arg4[%c2, %c0_14, %c0_15], %23 {strides = array<i32>} : memref<18x16x16xf32, #tpu.memory_space<vmem>>, vector<1x16x16xf32>,
    %24 = vector.extract_strided_slice %5 {offsets = [3, 0, 0], sizes = [1, 32, 16], strides = [1, 1, 1]} : vector<18x32x16xf32> to vector<1x32x16xf32>
    %25 = vector.shape_cast %24 : vector<1x32x16xf32> to vector<32x16xf32>
    %cst_16 = arith.constant dense<0.000000e+00> : vector<16x16xf32>
    %26 = tpu.matmul %0, %25, %cst_16 {dimension_numbers = #tpu.dot_dimension_numbers<[1], [0], [0], [1], [0, 0, 1, 1], [], []>} : vector<16x32xf32>, vector<32x16xf32>, vector<16x16xf32> -> vector<16x16xf32>
    %c3 = arith.constant 3 : index
    %c0_17 = arith.constant 0 : index
    %c0_18 = arith.constant 0 : index
    %27 = vector.load %arg4[%c3, %c0_17, %c0_18] : memref<18x16x16xf32, #tpu.memory_space<vmem>>, vector<1x16x16xf32>
    %28 = vector.shape_cast %27 : vector<1x16x16xf32> to vector<16x16xf32>
    %29 = vector.shape_cast %26 : vector<16x16xf32> to vector<1x16x16xf32>
    tpu.vector_store %arg4[%c3, %c0_17, %c0_18], %29 {strides = array<i32>} : memref<18x16x16xf32, #tpu.memory_space<vmem>>, vector<1x16x16xf32>,
    %30 = vector.extract_strided_slice %5 {offsets = [4, 0, 0], sizes = [1, 32, 16], strides = [1, 1, 1]} : vector<18x32x16xf32> to vector<1x32x16xf32>
    %31 = vector.shape_cast %30 : vector<1x32x16xf32> to vector<32x16xf32>
    %cst_19 = arith.constant dense<0.000000e+00> : vector<16x16xf32>
    %32 = tpu.matmul %0, %31, %cst_19 {dimension_numbers = #tpu.dot_dimension_numbers<[1], [0], [0], [1], [0, 0, 1, 1], [], []>} : vector<16x32xf32>, vector<32x16xf32>, vector<16x16xf32> -> vector<16x16xf32>
    %c4 = arith.constant 4 : index
    %c0_20 = arith.constant 0 : index
    %c0_21 = arith.constant 0 : index
    %33 = vector.load %arg4[%c4, %c0_20, %c0_21] : memref<18x16x16xf32, #tpu.memory_space<vmem>>, vector<1x16x16xf32>
    %34 = vector.shape_cast %33 : vector<1x16x16xf32> to vector<16x16xf32>
    %35 = vector.shape_cast %32 : vector<16x16xf32> to vector<1x16x16xf32>
    tpu.vector_store %arg4[%c4, %c0_20, %c0_21], %35 {strides = array<i32>} : memref<18x16x16xf32, #tpu.memory_space<vmem>>, vector<1x16x16xf32>,
    %36 = vector.extract_strided_slice %5 {offsets = [5, 0, 0], sizes = [1, 32, 16], strides = [1, 1, 1]} : vector<18x32x16xf32> to vector<1x32x16xf32>
    %37 = vector.shape_cast %36 : vector<1x32x16xf32> to vector<32x16xf32>
    %cst_22 = arith.constant dense<0.000000e+00> : vector<16x16xf32>
    %38 = tpu.matmul %0, %37, %cst_22 {dimension_numbers = #tpu.dot_dimension_numbers<[1], [0], [0], [1], [0, 0, 1, 1], [], []>} : vector<16x32xf32>, vector<32x16xf32>, vector<16x16xf32> -> vector<16x16xf32>
    %c5 = arith.constant 5 : index
    %c0_23 = arith.constant 0 : index
    %c0_24 = arith.constant 0 : index
    %39 = vector.load %arg4[%c5, %c0_23, %c0_24] : memref<18x16x16xf32, #tpu.memory_space<vmem>>, vector<1x16x16xf32>
    %40 = vector.shape_cast %39 : vector<1x16x16xf32> to vector<16x16xf32>
    %41 = vector.shape_cast %38 : vector<16x16xf32> to vector<1x16x16xf32>
    tpu.vector_store %arg4[%c5, %c0_23, %c0_24], %41 {strides = array<i32>} : memref<18x16x16xf32, #tpu.memory_space<vmem>>, vector<1x16x16xf32>,
    %42 = vector.extract_strided_slice %5 {offsets = [6, 0, 0], sizes = [1, 32, 16], strides = [1, 1, 1]} : vector<18x32x16xf32> to vector<1x32x16xf32>
    %43 = vector.shape_cast %42 : vector<1x32x16xf32> to vector<32x16xf32>
    %cst_25 = arith.constant dense<0.000000e+00> : vector<16x16xf32>
    %44 = tpu.matmul %0, %43, %cst_25 {dimension_numbers = #tpu.dot_dimension_numbers<[1], [0], [0], [1], [0, 0, 1, 1], [], []>} : vector<16x32xf32>, vector<32x16xf32>, vector<16x16xf32> -> vector<16x16xf32>
    %c6 = arith.constant 6 : index
    %c0_26 = arith.constant 0 : index
    %c0_27 = arith.constant 0 : index
    %45 = vector.load %arg4[%c6, %c0_26, %c0_27] : memref<18x16x16xf32, #tpu.memory_space<vmem>>, vector<1x16x16xf32>
    %46 = vector.shape_cast %45 : vector<1x16x16xf32> to vector<16x16xf32>
    %47 = vector.shape_cast %44 : vector<16x16xf32> to vector<1x16x16xf32>
    tpu.vector_store %arg4[%c6, %c0_26, %c0_27], %47 {strides = array<i32>} : memref<18x16x16xf32, #tpu.memory_space<vmem>>, vector<1x16x16xf32>,
    %48 = vector.extract_strided_slice %5 {offsets = [7, 0, 0], sizes = [1, 32, 16], strides = [1, 1, 1]} : vector<18x32x16xf32> to vector<1x32x16xf32>
    %49 = vector.shape_cast %48 : vector<1x32x16xf32> to vector<32x16xf32>
    %cst_28 = arith.constant dense<0.000000e+00> : vector<16x16xf32>
    %50 = tpu.matmul %0, %49, %cst_28 {dimension_numbers = #tpu.dot_dimension_numbers<[1], [0], [0], [1], [0, 0, 1, 1], [], []>} : vector<16x32xf32>, vector<32x16xf32>, vector<16x16xf32> -> vector<16x16xf32>
    %c7 = arith.constant 7 : index
    %c0_29 = arith.constant 0 : index
    %c0_30 = arith.constant 0 : index
    %51 = vector.load %arg4[%c7, %c0_29, %c0_30] : memref<18x16x16xf32, #tpu.memory_space<vmem>>, vector<1x16x16xf32>
    %52 = vector.shape_cast %51 : vector<1x16x16xf32> to vector<16x16xf32>
    %53 = vector.shape_cast %50 : vector<16x16xf32> to vector<1x16x16xf32>
    tpu.vector_store %arg4[%c7, %c0_29, %c0_30], %53 {strides = array<i32>} : memref<18x16x16xf32, #tpu.memory_space<vmem>>, vector<1x16x16xf32>,
    %54 = vector.extract_strided_slice %5 {offsets = [8, 0, 0], sizes = [1, 32, 16], strides = [1, 1, 1]} : vector<18x32x16xf32> to vector<1x32x16xf32>
    %55 = vector.shape_cast %54 : vector<1x32x16xf32> to vector<32x16xf32>
    %cst_31 = arith.constant dense<0.000000e+00> : vector<16x16xf32>
    %56 = tpu.matmul %0, %55, %cst_31 {dimension_numbers = #tpu.dot_dimension_numbers<[1], [0], [0], [1], [0, 0, 1, 1], [], []>} : vector<16x32xf32>, vector<32x16xf32>, vector<16x16xf32> -> vector<16x16xf32>
    %c8 = arith.constant 8 : index
    %c0_32 = arith.constant 0 : index
    %c0_33 = arith.constant 0 : index
    %57 = vector.load %arg4[%c8, %c0_32, %c0_33] : memref<18x16x16xf32, #tpu.memory_space<vmem>>, vector<1x16x16xf32>
    %58 = vector.shape_cast %57 : vector<1x16x16xf32> to vector<16x16xf32>
    %59 = vector.shape_cast %56 : vector<16x16xf32> to vector<1x16x16xf32>
    tpu.vector_store %arg4[%c8, %c0_32, %c0_33], %59 {strides = array<i32>} : memref<18x16x16xf32, #tpu.memory_space<vmem>>, vector<1x16x16xf32>,
    %60 = vector.extract_strided_slice %5 {offsets = [9, 0, 0], sizes = [1, 32, 16], strides = [1, 1, 1]} : vector<18x32x16xf32> to vector<1x32x16xf32>
    %61 = vector.shape_cast %60 : vector<1x32x16xf32> to vector<32x16xf32>
    %cst_34 = arith.constant dense<0.000000e+00> : vector<16x16xf32>
    %62 = tpu.matmul %0, %61, %cst_34 {dimension_numbers = #tpu.dot_dimension_numbers<[1], [0], [0], [1], [0, 0, 1, 1], [], []>} : vector<16x32xf32>, vector<32x16xf32>, vector<16x16xf32> -> vector<16x16xf32>
    %c9 = arith.constant 9 : index
    %c0_35 = arith.constant 0 : index
    %c0_36 = arith.constant 0 : index
    %63 = vector.load %arg4[%c9, %c0_35, %c0_36] : memref<18x16x16xf32, #tpu.memory_space<vmem>>, vector<1x16x16xf32>
    %64 = vector.shape_cast %63 : vector<1x16x16xf32> to vector<16x16xf32>
    %65 = vector.shape_cast %62 : vector<16x16xf32> to vector<1x16x16xf32>
    tpu.vector_store %arg4[%c9, %c0_35, %c0_36], %65 {strides = array<i32>} : memref<18x16x16xf32, #tpu.memory_space<vmem>>, vector<1x16x16xf32>,
    %66 = vector.extract_strided_slice %5 {offsets = [10, 0, 0], sizes = [1, 32, 16], strides = [1, 1, 1]} : vector<18x32x16xf32> to vector<1x32x16xf32>
    %67 = vector.shape_cast %66 : vector<1x32x16xf32> to vector<32x16xf32>
    %cst_37 = arith.constant dense<0.000000e+00> : vector<16x16xf32>
    %68 = tpu.matmul %0, %67, %cst_37 {dimension_numbers = #tpu.dot_dimension_numbers<[1], [0], [0], [1], [0, 0, 1, 1], [], []>} : vector<16x32xf32>, vector<32x16xf32>, vector<16x16xf32> -> vector<16x16xf32>
    %c10 = arith.constant 10 : index
    %c0_38 = arith.constant 0 : index
    %c0_39 = arith.constant 0 : index
    %69 = vector.load %arg4[%c10, %c0_38, %c0_39] : memref<18x16x16xf32, #tpu.memory_space<vmem>>, vector<1x16x16xf32>
    %70 = vector.shape_cast %69 : vector<1x16x16xf32> to vector<16x16xf32>
    %71 = vector.shape_cast %68 : vector<16x16xf32> to vector<1x16x16xf32>
    tpu.vector_store %arg4[%c10, %c0_38, %c0_39], %71 {strides = array<i32>} : memref<18x16x16xf32, #tpu.memory_space<vmem>>, vector<1x16x16xf32>,
    %72 = vector.extract_strided_slice %5 {offsets = [11, 0, 0], sizes = [1, 32, 16], strides = [1, 1, 1]} : vector<18x32x16xf32> to vector<1x32x16xf32>
    %73 = vector.shape_cast %72 : vector<1x32x16xf32> to vector<32x16xf32>
    %cst_40 = arith.constant dense<0.000000e+00> : vector<16x16xf32>
    %74 = tpu.matmul %0, %73, %cst_40 {dimension_numbers = #tpu.dot_dimension_numbers<[1], [0], [0], [1], [0, 0, 1, 1], [], []>} : vector<16x32xf32>, vector<32x16xf32>, vector<16x16xf32> -> vector<16x16xf32>
    %c11 = arith.constant 11 : index
    %c0_41 = arith.constant 0 : index
    %c0_42 = arith.constant 0 : index
    %75 = vector.load %arg4[%c11, %c0_41, %c0_42] : memref<18x16x16xf32, #tpu.memory_space<vmem>>, vector<1x16x16xf32>
    %76 = vector.shape_cast %75 : vector<1x16x16xf32> to vector<16x16xf32>
    %77 = vector.shape_cast %74 : vector<16x16xf32> to vector<1x16x16xf32>
    tpu.vector_store %arg4[%c11, %c0_41, %c0_42], %77 {strides = array<i32>} : memref<18x16x16xf32, #tpu.memory_space<vmem>>, vector<1x16x16xf32>,
    %78 = vector.extract_strided_slice %5 {offsets = [12, 0, 0], sizes = [1, 32, 16], strides = [1, 1, 1]} : vector<18x32x16xf32> to vector<1x32x16xf32>
    %79 = vector.shape_cast %78 : vector<1x32x16xf32> to vector<32x16xf32>
    %cst_43 = arith.constant dense<0.000000e+00> : vector<16x16xf32>
    %80 = tpu.matmul %0, %79, %cst_43 {dimension_numbers = #tpu.dot_dimension_numbers<[1], [0], [0], [1], [0, 0, 1, 1], [], []>} : vector<16x32xf32>, vector<32x16xf32>, vector<16x16xf32> -> vector<16x16xf32>
    %c12 = arith.constant 12 : index
    %c0_44 = arith.constant 0 : index
    %c0_45 = arith.constant 0 : index
    %81 = vector.load %arg4[%c12, %c0_44, %c0_45] : memref<18x16x16xf32, #tpu.memory_space<vmem>>, vector<1x16x16xf32>
    %82 = vector.shape_cast %81 : vector<1x16x16xf32> to vector<16x16xf32>
    %83 = vector.shape_cast %80 : vector<16x16xf32> to vector<1x16x16xf32>
    tpu.vector_store %arg4[%c12, %c0_44, %c0_45], %83 {strides = array<i32>} : memref<18x16x16xf32, #tpu.memory_space<vmem>>, vector<1x16x16xf32>,
    %84 = vector.extract_strided_slice %5 {offsets = [13, 0, 0], sizes = [1, 32, 16], strides = [1, 1, 1]} : vector<18x32x16xf32> to vector<1x32x16xf32>
    %85 = vector.shape_cast %84 : vector<1x32x16xf32> to vector<32x16xf32>
    %cst_46 = arith.constant dense<0.000000e+00> : vector<16x16xf32>
    %86 = tpu.matmul %0, %85, %cst_46 {dimension_numbers = #tpu.dot_dimension_numbers<[1], [0], [0], [1], [0, 0, 1, 1], [], []>} : vector<16x32xf32>, vector<32x16xf32>, vector<16x16xf32> -> vector<16x16xf32>
    %c13 = arith.constant 13 : index
    %c0_47 = arith.constant 0 : index
    %c0_48 = arith.constant 0 : index
    %87 = vector.load %arg4[%c13, %c0_47, %c0_48] : memref<18x16x16xf32, #tpu.memory_space<vmem>>, vector<1x16x16xf32>
    %88 = vector.shape_cast %87 : vector<1x16x16xf32> to vector<16x16xf32>
    %89 = vector.shape_cast %86 : vector<16x16xf32> to vector<1x16x16xf32>
    tpu.vector_store %arg4[%c13, %c0_47, %c0_48], %89 {strides = array<i32>} : memref<18x16x16xf32, #tpu.memory_space<vmem>>, vector<1x16x16xf32>,
    %90 = vector.extract_strided_slice %5 {offsets = [14, 0, 0], sizes = [1, 32, 16], strides = [1, 1, 1]} : vector<18x32x16xf32> to vector<1x32x16xf32>
    %91 = vector.shape_cast %90 : vector<1x32x16xf32> to vector<32x16xf32>
    %cst_49 = arith.constant dense<0.000000e+00> : vector<16x16xf32>
    %92 = tpu.matmul %0, %91, %cst_49 {dimension_numbers = #tpu.dot_dimension_numbers<[1], [0], [0], [1], [0, 0, 1, 1], [], []>} : vector<16x32xf32>, vector<32x16xf32>, vector<16x16xf32> -> vector<16x16xf32>
    %c14 = arith.constant 14 : index
    %c0_50 = arith.constant 0 : index
    %c0_51 = arith.constant 0 : index
    %93 = vector.load %arg4[%c14, %c0_50, %c0_51] : memref<18x16x16xf32, #tpu.memory_space<vmem>>, vector<1x16x16xf32>
    %94 = vector.shape_cast %93 : vector<1x16x16xf32> to vector<16x16xf32>
    %95 = vector.shape_cast %92 : vector<16x16xf32> to vector<1x16x16xf32>
    tpu.vector_store %arg4[%c14, %c0_50, %c0_51], %95 {strides = array<i32>} : memref<18x16x16xf32, #tpu.memory_space<vmem>>, vector<1x16x16xf32>,
    %96 = vector.extract_strided_slice %5 {offsets = [15, 0, 0], sizes = [1, 32, 16], strides = [1, 1, 1]} : vector<18x32x16xf32> to vector<1x32x16xf32>
    %97 = vector.shape_cast %96 : vector<1x32x16xf32> to vector<32x16xf32>
    %cst_52 = arith.constant dense<0.000000e+00> : vector<16x16xf32>
    %98 = tpu.matmul %0, %97, %cst_52 {dimension_numbers = #tpu.dot_dimension_numbers<[1], [0], [0], [1], [0, 0, 1, 1], [], []>} : vector<16x32xf32>, vector<32x16xf32>, vector<16x16xf32> -> vector<16x16xf32>
    %c15 = arith.constant 15 : index
    %c0_53 = arith.constant 0 : index
    %c0_54 = arith.constant 0 : index
    %99 = vector.load %arg4[%c15, %c0_53, %c0_54] : memref<18x16x16xf32, #tpu.memory_space<vmem>>, vector<1x16x16xf32>
    %100 = vector.shape_cast %99 : vector<1x16x16xf32> to vector<16x16xf32>
    %101 = vector.shape_cast %98 : vector<16x16xf32> to vector<1x16x16xf32>
    tpu.vector_store %arg4[%c15, %c0_53, %c0_54], %101 {strides = array<i32>} : memref<18x16x16xf32, #tpu.memory_space<vmem>>, vector<1x16x16xf32>,
    %102 = vector.extract_strided_slice %5 {offsets = [16, 0, 0], sizes = [1, 32, 16], strides = [1, 1, 1]} : vector<18x32x16xf32> to vector<1x32x16xf32>
    %103 = vector.shape_cast %102 : vector<1x32x16xf32> to vector<32x16xf32>
    %cst_55 = arith.constant dense<0.000000e+00> : vector<16x16xf32>
    %104 = tpu.matmul %0, %103, %cst_55 {dimension_numbers = #tpu.dot_dimension_numbers<[1], [0], [0], [1], [0, 0, 1, 1], [], []>} : vector<16x32xf32>, vector<32x16xf32>, vector<16x16xf32> -> vector<16x16xf32>
    %c16 = arith.constant 16 : index
    %c0_56 = arith.constant 0 : index
    %c0_57 = arith.constant 0 : index
    %105 = vector.load %arg4[%c16, %c0_56, %c0_57] : memref<18x16x16xf32, #tpu.memory_space<vmem>>, vector<1x16x16xf32>
    %106 = vector.shape_cast %105 : vector<1x16x16xf32> to vector<16x16xf32>
    %107 = vector.shape_cast %104 : vector<16x16xf32> to vector<1x16x16xf32>
    tpu.vector_store %arg4[%c16, %c0_56, %c0_57], %107 {strides = array<i32>} : memref<18x16x16xf32, #tpu.memory_space<vmem>>, vector<1x16x16xf32>,
    %108 = vector.extract_strided_slice %5 {offsets = [17, 0, 0], sizes = [1, 32, 16], strides = [1, 1, 1]} : vector<18x32x16xf32> to vector<1x32x16xf32>
    %109 = vector.shape_cast %108 : vector<1x32x16xf32> to vector<32x16xf32>
    %cst_58 = arith.constant dense<0.000000e+00> : vector<16x16xf32>
    %110 = tpu.matmul %0, %109, %cst_58 {dimension_numbers = #tpu.dot_dimension_numbers<[1], [0], [0], [1], [0, 0, 1, 1], [], []>} : vector<16x32xf32>, vector<32x16xf32>, vector<16x16xf32> -> vector<16x16xf32>
    %c17 = arith.constant 17 : index
    %c0_59 = arith.constant 0 : index
    %c0_60 = arith.constant 0 : index
    %111 = vector.load %arg4[%c17, %c0_59, %c0_60] : memref<18x16x16xf32, #tpu.memory_space<vmem>>, vector<1x16x16xf32>
    %112 = vector.shape_cast %111 : vector<1x16x16xf32> to vector<16x16xf32>
    %113 = vector.shape_cast %110 : vector<16x16xf32> to vector<1x16x16xf32>
    tpu.vector_store %arg4[%c17, %c0_59, %c0_60], %113 {strides = array<i32>} : memref<18x16x16xf32, #tpu.memory_space<vmem>>, vector<1x16x16xf32>,
    return
  }
  func.func @transform_0(%arg0: i32) -> (i32, i32) {
    %c0_i32 = arith.constant 0 : i32
    %c0_i32_0 = arith.constant 0 : i32
    %c0_i32_1 = arith.constant 0 : i32
    return %c0_i32, %c0_i32_0 : i32, i32
  }
  func.func @transform_1(%arg0: i32) -> (i32, i32) {
    %c0_i32 = arith.constant 0 : i32
    %c0_i32_0 = arith.constant 0 : i32
    %c0_i32_1 = arith.constant 0 : i32
    return %c0_i32, %c0_i32_0 : i32, i32
  }
  func.func @transform_2(%arg0: i32) -> (i32, i32, i32) {
    %c0_i32 = arith.constant 0 : i32
    %c0_i32_0 = arith.constant 0 : i32
    %c0_i32_1 = arith.constant 0 : i32
    return %arg0, %c0_i32, %c0_i32_0 : i32, i32, i32
  }
  func.func @transform_3(%arg0: i32) -> (i32, i32, i32) {
    %c0_i32 = arith.constant 0 : i32
    %c0_i32_0 = arith.constant 0 : i32
    %c0_i32_1 = arith.constant 0 : i32
    return %arg0, %c0_i32, %c0_i32_0 : i32, i32, i32
  }
}

module attributes {stable_mosaic.version = 11 : i64} {
  func.func @kernel(%arg0: i32, %arg1: i32, %arg2: memref<18x16x16xf32, #tpu.memory_space<vmem>>, %arg3: memref<18x16x16xf32, #tpu.memory_space<vmem>>, %arg4: memref<18x16x16xf32, #tpu.memory_space<vmem>>, %arg5: memref<18x16x16xf32, #tpu.memory_space<vmem>>, %arg6: memref<1x8x128xf32, #tpu.memory_space<vmem>>, %arg7: memref<1x8x128xf32, #tpu.memory_space<vmem>>, %arg8: memref<1x8x128xf32, #tpu.memory_space<vmem>>, %arg9: memref<1x8x128xf32, #tpu.memory_space<vmem>>) attributes {dimension_semantics = [#tpu.dimension_semantics<parallel>, #tpu.dimension_semantics<arbitrary>], iteration_bounds = array<i64: 1, 1>, scalar_prefetch = 0 : i64, scratch_operands = 0 : i64, tpu.core_type = #tpu.core_type<tc>, window_params = [{transform_indices = @transform_0, window_bounds = array<i64: 18, 16, 16>}, {transform_indices = @transform_1, window_bounds = array<i64: 18, 16, 16>}, {transform_indices = @transform_2, window_bounds = array<i64: 18, 16, 16>}, {transform_indices = @transform_3, window_bounds = array<i64: 18, 16, 16>}, {transform_indices = @transform_4, window_bounds = array<i64: 1, 8, 128>}, {transform_indices = @transform_5, window_bounds = array<i64: 1, 8, 128>}, {transform_indices = @transform_6, window_bounds = array<i64: 1, 8, 128>}, {transform_indices = @transform_7, window_bounds = array<i64: 1, 8, 128>}]} {
    %c0_i32 = arith.constant 0 : i32
    %0 = arith.cmpi eq, %arg1, %c0_i32 : i32
    %1 = arith.extui %0 : i1 to i32
    %c0_i32_0 = arith.constant 0 : i32
    %2 = arith.cmpi ne, %1, %c0_i32_0 : i32
    scf.if %2 {
      %cst_39 = arith.constant 0.000000e+00 : f32
      %46 = vector.broadcast %cst_39 : f32 to vector<1x8x128xf32>
      %c0_40 = arith.constant 0 : index
      %c0_41 = arith.constant 0 : index
      %c0_42 = arith.constant 0 : index
      %47 = vector.load %arg6[%c0_40, %c0_41, %c0_42] : memref<1x8x128xf32, #tpu.memory_space<vmem>>, vector<1x8x128xf32>
      tpu.vector_store %arg6[%c0_40, %c0_41, %c0_42], %46 {strides = array<i32>} : memref<1x8x128xf32, #tpu.memory_space<vmem>>, vector<1x8x128xf32>,
      %cst_43 = arith.constant 0.000000e+00 : f32
      %48 = vector.broadcast %cst_43 : f32 to vector<1x8x128xf32>
      %c0_44 = arith.constant 0 : index
      %c0_45 = arith.constant 0 : index
      %c0_46 = arith.constant 0 : index
      %49 = vector.load %arg7[%c0_44, %c0_45, %c0_46] : memref<1x8x128xf32, #tpu.memory_space<vmem>>, vector<1x8x128xf32>
      tpu.vector_store %arg7[%c0_44, %c0_45, %c0_46], %48 {strides = array<i32>} : memref<1x8x128xf32, #tpu.memory_space<vmem>>, vector<1x8x128xf32>,
      %cst_47 = arith.constant 0.000000e+00 : f32
      %50 = vector.broadcast %cst_47 : f32 to vector<1x8x128xf32>
      %c0_48 = arith.constant 0 : index
      %c0_49 = arith.constant 0 : index
      %c0_50 = arith.constant 0 : index
      %51 = vector.load %arg8[%c0_48, %c0_49, %c0_50] : memref<1x8x128xf32, #tpu.memory_space<vmem>>, vector<1x8x128xf32>
      tpu.vector_store %arg8[%c0_48, %c0_49, %c0_50], %50 {strides = array<i32>} : memref<1x8x128xf32, #tpu.memory_space<vmem>>, vector<1x8x128xf32>,
      %cst_51 = arith.constant 0.000000e+00 : f32
      %52 = vector.broadcast %cst_51 : f32 to vector<1x8x128xf32>
      %c0_52 = arith.constant 0 : index
      %c0_53 = arith.constant 0 : index
      %c0_54 = arith.constant 0 : index
      %53 = vector.load %arg9[%c0_52, %c0_53, %c0_54] : memref<1x8x128xf32, #tpu.memory_space<vmem>>, vector<1x8x128xf32>
      tpu.vector_store %arg9[%c0_52, %c0_53, %c0_54], %52 {strides = array<i32>} : memref<1x8x128xf32, #tpu.memory_space<vmem>>, vector<1x8x128xf32>,
    } else {
    }
    %c0 = arith.constant 0 : index
    %c0_1 = arith.constant 0 : index
    %c0_2 = arith.constant 0 : index
    %3 = vector.load %arg2[%c0, %c0_1, %c0_2] : memref<18x16x16xf32, #tpu.memory_space<vmem>>, vector<18x16x16xf32>
    %c0_3 = arith.constant 0 : index
    %c0_4 = arith.constant 0 : index
    %c0_5 = arith.constant 0 : index
    %4 = vector.load %arg3[%c0_3, %c0_4, %c0_5] : memref<18x16x16xf32, #tpu.memory_space<vmem>>, vector<18x16x16xf32>
    %c0_6 = arith.constant 0 : index
    %c0_7 = arith.constant 0 : index
    %c0_8 = arith.constant 0 : index
    %5 = vector.load %arg4[%c0_6, %c0_7, %c0_8] : memref<18x16x16xf32, #tpu.memory_space<vmem>>, vector<18x16x16xf32>
    %c0_9 = arith.constant 0 : index
    %c0_10 = arith.constant 0 : index
    %c0_11 = arith.constant 0 : index
    %6 = vector.load %arg5[%c0_9, %c0_10, %c0_11] : memref<18x16x16xf32, #tpu.memory_space<vmem>>, vector<18x16x16xf32>
    %7 = arith.subf %4, %3 : vector<18x16x16xf32>
    %8 = math.absf %7 : vector<18x16x16xf32>
    %9 = vector.shape_cast %8 : vector<18x16x16xf32> to vector<1x18x16x16xf32>
    %cst = arith.constant dense<0.000000e+00> : vector<1xf32>
    %10 = vector.multi_reduction <add>, %9, %cst [1, 2, 3] : vector<1x18x16x16xf32> to vector<1xf32>
    %11 = vector.shape_cast %10 : vector<1xf32> to vector<1x1x1x1xf32>
    %12 = vector.extract %11[0, 0, 0, 0] : f32 from vector<1x1x1x1xf32>
    %13 = arith.mulf %7, %7 : vector<18x16x16xf32>
    %14 = vector.shape_cast %13 : vector<18x16x16xf32> to vector<1x18x16x16xf32>
    %cst_12 = arith.constant dense<0.000000e+00> : vector<1xf32>
    %15 = vector.multi_reduction <add>, %14, %cst_12 [1, 2, 3] : vector<1x18x16x16xf32> to vector<1xf32>
    %16 = vector.shape_cast %15 : vector<1xf32> to vector<1x1x1x1xf32>
    %17 = vector.extract %16[0, 0, 0, 0] : f32 from vector<1x1x1x1xf32>
    %18 = arith.subf %5, %3 : vector<18x16x16xf32>
    %19 = math.absf %18 : vector<18x16x16xf32>
    %20 = vector.shape_cast %19 : vector<18x16x16xf32> to vector<1x18x16x16xf32>
    %cst_13 = arith.constant dense<0.000000e+00> : vector<1xf32>
    %21 = vector.multi_reduction <add>, %20, %cst_13 [1, 2, 3] : vector<1x18x16x16xf32> to vector<1xf32>
    %22 = vector.shape_cast %21 : vector<1xf32> to vector<1x1x1x1xf32>
    %23 = vector.extract %22[0, 0, 0, 0] : f32 from vector<1x1x1x1xf32>
    %24 = arith.subf %6, %3 : vector<18x16x16xf32>
    %25 = math.absf %24 : vector<18x16x16xf32>
    %26 = vector.shape_cast %25 : vector<18x16x16xf32> to vector<1x18x16x16xf32>
    %cst_14 = arith.constant dense<0.000000e+00> : vector<1xf32>
    %27 = vector.multi_reduction <add>, %26, %cst_14 [1, 2, 3] : vector<1x18x16x16xf32> to vector<1xf32>
    %28 = vector.shape_cast %27 : vector<1xf32> to vector<1x1x1x1xf32>
    %29 = vector.extract %28[0, 0, 0, 0] : f32 from vector<1x1x1x1xf32>
    %c0_15 = arith.constant 0 : index
    %c0_16 = arith.constant 0 : index
    %c0_17 = arith.constant 0 : index
    %30 = vector.load %arg6[%c0_15, %c0_16, %c0_17] : memref<1x8x128xf32, #tpu.memory_space<vmem>>, vector<1x8x128xf32>
    %31 = vector.broadcast %12 : f32 to vector<1x8x128xf32>
    %32 = arith.addf %30, %31 : vector<1x8x128xf32>
    %c0_18 = arith.constant 0 : index
    %c0_19 = arith.constant 0 : index
    %c0_20 = arith.constant 0 : index
    %33 = vector.load %arg6[%c0_18, %c0_19, %c0_20] : memref<1x8x128xf32, #tpu.memory_space<vmem>>, vector<1x8x128xf32>
    tpu.vector_store %arg6[%c0_18, %c0_19, %c0_20], %32 {strides = array<i32>} : memref<1x8x128xf32, #tpu.memory_space<vmem>>, vector<1x8x128xf32>,
    %c0_21 = arith.constant 0 : index
    %c0_22 = arith.constant 0 : index
    %c0_23 = arith.constant 0 : index
    %34 = vector.load %arg7[%c0_21, %c0_22, %c0_23] : memref<1x8x128xf32, #tpu.memory_space<vmem>>, vector<1x8x128xf32>
    %35 = vector.broadcast %17 : f32 to vector<1x8x128xf32>
    %36 = arith.addf %34, %35 : vector<1x8x128xf32>
    %c0_24 = arith.constant 0 : index
    %c0_25 = arith.constant 0 : index
    %c0_26 = arith.constant 0 : index
    %37 = vector.load %arg7[%c0_24, %c0_25, %c0_26] : memref<1x8x128xf32, #tpu.memory_space<vmem>>, vector<1x8x128xf32>
    tpu.vector_store %arg7[%c0_24, %c0_25, %c0_26], %36 {strides = array<i32>} : memref<1x8x128xf32, #tpu.memory_space<vmem>>, vector<1x8x128xf32>,
    %c0_27 = arith.constant 0 : index
    %c0_28 = arith.constant 0 : index
    %c0_29 = arith.constant 0 : index
    %38 = vector.load %arg8[%c0_27, %c0_28, %c0_29] : memref<1x8x128xf32, #tpu.memory_space<vmem>>, vector<1x8x128xf32>
    %39 = vector.broadcast %23 : f32 to vector<1x8x128xf32>
    %40 = arith.addf %38, %39 : vector<1x8x128xf32>
    %c0_30 = arith.constant 0 : index
    %c0_31 = arith.constant 0 : index
    %c0_32 = arith.constant 0 : index
    %41 = vector.load %arg8[%c0_30, %c0_31, %c0_32] : memref<1x8x128xf32, #tpu.memory_space<vmem>>, vector<1x8x128xf32>
    tpu.vector_store %arg8[%c0_30, %c0_31, %c0_32], %40 {strides = array<i32>} : memref<1x8x128xf32, #tpu.memory_space<vmem>>, vector<1x8x128xf32>,
    %c0_33 = arith.constant 0 : index
    %c0_34 = arith.constant 0 : index
    %c0_35 = arith.constant 0 : index
    %42 = vector.load %arg9[%c0_33, %c0_34, %c0_35] : memref<1x8x128xf32, #tpu.memory_space<vmem>>, vector<1x8x128xf32>
    %43 = vector.broadcast %29 : f32 to vector<1x8x128xf32>
    %44 = arith.addf %42, %43 : vector<1x8x128xf32>
    %c0_36 = arith.constant 0 : index
    %c0_37 = arith.constant 0 : index
    %c0_38 = arith.constant 0 : index
    %45 = vector.load %arg9[%c0_36, %c0_37, %c0_38] : memref<1x8x128xf32, #tpu.memory_space<vmem>>, vector<1x8x128xf32>
    tpu.vector_store %arg9[%c0_36, %c0_37, %c0_38], %44 {strides = array<i32>} : memref<1x8x128xf32, #tpu.memory_space<vmem>>, vector<1x8x128xf32>,
    return
  }
  func.func @transform_0(%arg0: i32, %arg1: i32) -> (i32, i32, i32) {
    %c1_i32 = arith.constant 1 : i32
    %0 = arith.muli %arg0, %c1_i32 : i32
    %1 = arith.addi %0, %arg1 : i32
    %c0_i32 = arith.constant 0 : i32
    %c0_i32_0 = arith.constant 0 : i32
    %c0_i32_1 = arith.constant 0 : i32
    return %1, %c0_i32, %c0_i32_0 : i32, i32, i32
  }
  func.func @transform_1(%arg0: i32, %arg1: i32) -> (i32, i32, i32) {
    %c1_i32 = arith.constant 1 : i32
    %0 = arith.muli %arg0, %c1_i32 : i32
    %1 = arith.addi %0, %arg1 : i32
    %c0_i32 = arith.constant 0 : i32
    %c0_i32_0 = arith.constant 0 : i32
    %c0_i32_1 = arith.constant 0 : i32
    return %1, %c0_i32, %c0_i32_0 : i32, i32, i32
  }
  func.func @transform_2(%arg0: i32, %arg1: i32) -> (i32, i32, i32) {
    %c1_i32 = arith.constant 1 : i32
    %0 = arith.muli %arg0, %c1_i32 : i32
    %1 = arith.addi %0, %arg1 : i32
    %c0_i32 = arith.constant 0 : i32
    %c0_i32_0 = arith.constant 0 : i32
    %c0_i32_1 = arith.constant 0 : i32
    return %1, %c0_i32, %c0_i32_0 : i32, i32, i32
  }
  func.func @transform_3(%arg0: i32, %arg1: i32) -> (i32, i32, i32) {
    %c1_i32 = arith.constant 1 : i32
    %0 = arith.muli %arg0, %c1_i32 : i32
    %1 = arith.addi %0, %arg1 : i32
    %c0_i32 = arith.constant 0 : i32
    %c0_i32_0 = arith.constant 0 : i32
    %c0_i32_1 = arith.constant 0 : i32
    return %1, %c0_i32, %c0_i32_0 : i32, i32, i32
  }
  func.func @transform_4(%arg0: i32, %arg1: i32) -> (i32, i32, i32) {
    %c0_i32 = arith.constant 0 : i32
    %c0_i32_0 = arith.constant 0 : i32
    %c0_i32_1 = arith.constant 0 : i32
    return %arg0, %c0_i32, %c0_i32_0 : i32, i32, i32
  }
  func.func @transform_5(%arg0: i32, %arg1: i32) -> (i32, i32, i32) {
    %c0_i32 = arith.constant 0 : i32
    %c0_i32_0 = arith.constant 0 : i32
    %c0_i32_1 = arith.constant 0 : i32
    return %arg0, %c0_i32, %c0_i32_0 : i32, i32, i32
  }
  func.func @transform_6(%arg0: i32, %arg1: i32) -> (i32, i32, i32) {
    %c0_i32 = arith.constant 0 : i32
    %c0_i32_0 = arith.constant 0 : i32
    %c0_i32_1 = arith.constant 0 : i32
    return %arg0, %c0_i32, %c0_i32_0 : i32, i32, i32
  }
  func.func @transform_7(%arg0: i32, %arg1: i32) -> (i32, i32, i32) {
    %c0_i32 = arith.constant 0 : i32
    %c0_i32_0 = arith.constant 0 : i32
    %c0_i32_1 = arith.constant 0 : i32
    return %arg0, %c0_i32, %c0_i32_0 : i32, i32, i32
  }
}

module attributes {stable_mosaic.version = 11 : i64} {
  func.func @kernel(%arg0: i32, %arg1: i32, %arg2: memref<12x16x16xf32, #tpu.memory_space<vmem>>, %arg3: memref<12x16x16xf32, #tpu.memory_space<vmem>>, %arg4: memref<1x8x128xf32, #tpu.memory_space<vmem>>, %arg5: memref<1x8x128xf32, #tpu.memory_space<vmem>>, %arg6: memref<1x8x128xf32, #tpu.memory_space<vmem>>, %arg7: memref<1x8x128xf32, #tpu.memory_space<vmem>>) attributes {dimension_semantics = [#tpu.dimension_semantics<parallel>, #tpu.dimension_semantics<arbitrary>], iteration_bounds = array<i64: 1, 1>, scalar_prefetch = 0 : i64, scratch_operands = 0 : i64, tpu.core_type = #tpu.core_type<tc>, window_params = [{transform_indices = @transform_0, window_bounds = array<i64: 12, 16, 16>}, {transform_indices = @transform_1, window_bounds = array<i64: 12, 16, 16>}, {transform_indices = @transform_2, window_bounds = array<i64: 1, 8, 128>}, {transform_indices = @transform_3, window_bounds = array<i64: 1, 8, 128>}, {transform_indices = @transform_4, window_bounds = array<i64: 1, 8, 128>}, {transform_indices = @transform_5, window_bounds = array<i64: 1, 8, 128>}]} {
    %c0_i32 = arith.constant 0 : i32
    %0 = arith.cmpi eq, %arg1, %c0_i32 : i32
    %1 = arith.extui %0 : i1 to i32
    %c0_i32_0 = arith.constant 0 : i32
    %2 = arith.cmpi ne, %1, %c0_i32_0 : i32
    scf.if %2 {
      %cst_33 = arith.constant 0.000000e+00 : f32
      %53 = vector.broadcast %cst_33 : f32 to vector<1x8x128xf32>
      %c0_34 = arith.constant 0 : index
      %c0_35 = arith.constant 0 : index
      %c0_36 = arith.constant 0 : index
      %54 = vector.load %arg4[%c0_34, %c0_35, %c0_36] : memref<1x8x128xf32, #tpu.memory_space<vmem>>, vector<1x8x128xf32>
      tpu.vector_store %arg4[%c0_34, %c0_35, %c0_36], %53 {strides = array<i32>} : memref<1x8x128xf32, #tpu.memory_space<vmem>>, vector<1x8x128xf32>,
      %cst_37 = arith.constant 0.000000e+00 : f32
      %55 = vector.broadcast %cst_37 : f32 to vector<1x8x128xf32>
      %c0_38 = arith.constant 0 : index
      %c0_39 = arith.constant 0 : index
      %c0_40 = arith.constant 0 : index
      %56 = vector.load %arg5[%c0_38, %c0_39, %c0_40] : memref<1x8x128xf32, #tpu.memory_space<vmem>>, vector<1x8x128xf32>
      tpu.vector_store %arg5[%c0_38, %c0_39, %c0_40], %55 {strides = array<i32>} : memref<1x8x128xf32, #tpu.memory_space<vmem>>, vector<1x8x128xf32>,
      %cst_41 = arith.constant 0.000000e+00 : f32
      %57 = vector.broadcast %cst_41 : f32 to vector<1x8x128xf32>
      %c0_42 = arith.constant 0 : index
      %c0_43 = arith.constant 0 : index
      %c0_44 = arith.constant 0 : index
      %58 = vector.load %arg6[%c0_42, %c0_43, %c0_44] : memref<1x8x128xf32, #tpu.memory_space<vmem>>, vector<1x8x128xf32>
      tpu.vector_store %arg6[%c0_42, %c0_43, %c0_44], %57 {strides = array<i32>} : memref<1x8x128xf32, #tpu.memory_space<vmem>>, vector<1x8x128xf32>,
      %cst_45 = arith.constant 0.000000e+00 : f32
      %59 = vector.broadcast %cst_45 : f32 to vector<1x8x128xf32>
      %c0_46 = arith.constant 0 : index
      %c0_47 = arith.constant 0 : index
      %c0_48 = arith.constant 0 : index
      %60 = vector.load %arg7[%c0_46, %c0_47, %c0_48] : memref<1x8x128xf32, #tpu.memory_space<vmem>>, vector<1x8x128xf32>
      tpu.vector_store %arg7[%c0_46, %c0_47, %c0_48], %59 {strides = array<i32>} : memref<1x8x128xf32, #tpu.memory_space<vmem>>, vector<1x8x128xf32>,
    } else {
    }
    %c0 = arith.constant 0 : index
    %c0_1 = arith.constant 0 : index
    %c0_2 = arith.constant 0 : index
    %3 = vector.load %arg2[%c0, %c0_1, %c0_2] : memref<12x16x16xf32, #tpu.memory_space<vmem>>, vector<12x16x16xf32>
    %c0_3 = arith.constant 0 : index
    %c0_4 = arith.constant 0 : index
    %c0_5 = arith.constant 0 : index
    %4 = vector.load %arg3[%c0_3, %c0_4, %c0_5] : memref<12x16x16xf32, #tpu.memory_space<vmem>>, vector<12x16x16xf32>
    %5 = vector.extract_strided_slice %3 {offsets = [0, 0, 1], sizes = [12, 16, 15], strides = [1, 1, 1]} : vector<12x16x16xf32> to vector<12x16x15xf32>
    %6 = vector.extract_strided_slice %3 {offsets = [0, 0, 0], sizes = [12, 16, 15], strides = [1, 1, 1]} : vector<12x16x16xf32> to vector<12x16x15xf32>
    %7 = arith.subf %5, %6 : vector<12x16x15xf32>
    %8 = vector.extract_strided_slice %3 {offsets = [0, 1, 0], sizes = [12, 15, 16], strides = [1, 1, 1]} : vector<12x16x16xf32> to vector<12x15x16xf32>
    %9 = vector.extract_strided_slice %3 {offsets = [0, 0, 0], sizes = [12, 15, 16], strides = [1, 1, 1]} : vector<12x16x16xf32> to vector<12x15x16xf32>
    %10 = arith.subf %8, %9 : vector<12x15x16xf32>
    %11 = math.absf %7 : vector<12x16x15xf32>
    %12 = vector.shape_cast %11 : vector<12x16x15xf32> to vector<1x12x16x15xf32>
    %cst = arith.constant dense<0.000000e+00> : vector<1xf32>
    %13 = vector.multi_reduction <add>, %12, %cst [1, 2, 3] : vector<1x12x16x15xf32> to vector<1xf32>
    %14 = vector.shape_cast %13 : vector<1xf32> to vector<1x1x1x1xf32>
    %15 = vector.extract %14[0, 0, 0, 0] : f32 from vector<1x1x1x1xf32>
    %16 = math.absf %10 : vector<12x15x16xf32>
    %17 = vector.shape_cast %16 : vector<12x15x16xf32> to vector<1x12x15x16xf32>
    %cst_6 = arith.constant dense<0.000000e+00> : vector<1xf32>
    %18 = vector.multi_reduction <add>, %17, %cst_6 [1, 2, 3] : vector<1x12x15x16xf32> to vector<1xf32>
    %19 = vector.shape_cast %18 : vector<1xf32> to vector<1x1x1x1xf32>
    %20 = vector.extract %19[0, 0, 0, 0] : f32 from vector<1x1x1x1xf32>
    %21 = vector.extract_strided_slice %4 {offsets = [0, 0, 1], sizes = [12, 16, 15], strides = [1, 1, 1]} : vector<12x16x16xf32> to vector<12x16x15xf32>
    %22 = vector.extract_strided_slice %4 {offsets = [0, 0, 0], sizes = [12, 16, 15], strides = [1, 1, 1]} : vector<12x16x16xf32> to vector<12x16x15xf32>
    %23 = arith.subf %21, %22 : vector<12x16x15xf32>
    %24 = vector.extract_strided_slice %4 {offsets = [0, 1, 0], sizes = [12, 15, 16], strides = [1, 1, 1]} : vector<12x16x16xf32> to vector<12x15x16xf32>
    %25 = vector.extract_strided_slice %4 {offsets = [0, 0, 0], sizes = [12, 15, 16], strides = [1, 1, 1]} : vector<12x16x16xf32> to vector<12x15x16xf32>
    %26 = arith.subf %24, %25 : vector<12x15x16xf32>
    %27 = math.absf %23 : vector<12x16x15xf32>
    %28 = vector.shape_cast %27 : vector<12x16x15xf32> to vector<1x12x16x15xf32>
    %cst_7 = arith.constant dense<0.000000e+00> : vector<1xf32>
    %29 = vector.multi_reduction <add>, %28, %cst_7 [1, 2, 3] : vector<1x12x16x15xf32> to vector<1xf32>
    %30 = vector.shape_cast %29 : vector<1xf32> to vector<1x1x1x1xf32>
    %31 = vector.extract %30[0, 0, 0, 0] : f32 from vector<1x1x1x1xf32>
    %32 = math.absf %26 : vector<12x15x16xf32>
    %33 = vector.shape_cast %32 : vector<12x15x16xf32> to vector<1x12x15x16xf32>
    %cst_8 = arith.constant dense<0.000000e+00> : vector<1xf32>
    %34 = vector.multi_reduction <add>, %33, %cst_8 [1, 2, 3] : vector<1x12x15x16xf32> to vector<1xf32>
    %35 = vector.shape_cast %34 : vector<1xf32> to vector<1x1x1x1xf32>
    %36 = vector.extract %35[0, 0, 0, 0] : f32 from vector<1x1x1x1xf32>
    %c0_9 = arith.constant 0 : index
    %c0_10 = arith.constant 0 : index
    %c0_11 = arith.constant 0 : index
    %37 = vector.load %arg4[%c0_9, %c0_10, %c0_11] : memref<1x8x128xf32, #tpu.memory_space<vmem>>, vector<1x8x128xf32>
    %38 = vector.broadcast %15 : f32 to vector<1x8x128xf32>
    %39 = arith.addf %37, %38 : vector<1x8x128xf32>
    %c0_12 = arith.constant 0 : index
    %c0_13 = arith.constant 0 : index
    %c0_14 = arith.constant 0 : index
    %40 = vector.load %arg4[%c0_12, %c0_13, %c0_14] : memref<1x8x128xf32, #tpu.memory_space<vmem>>, vector<1x8x128xf32>
    tpu.vector_store %arg4[%c0_12, %c0_13, %c0_14], %39 {strides = array<i32>} : memref<1x8x128xf32, #tpu.memory_space<vmem>>, vector<1x8x128xf32>,
    %c0_15 = arith.constant 0 : index
    %c0_16 = arith.constant 0 : index
    %c0_17 = arith.constant 0 : index
    %41 = vector.load %arg5[%c0_15, %c0_16, %c0_17] : memref<1x8x128xf32, #tpu.memory_space<vmem>>, vector<1x8x128xf32>
    %42 = vector.broadcast %20 : f32 to vector<1x8x128xf32>
    %43 = arith.addf %41, %42 : vector<1x8x128xf32>
    %c0_18 = arith.constant 0 : index
    %c0_19 = arith.constant 0 : index
    %c0_20 = arith.constant 0 : index
    %44 = vector.load %arg5[%c0_18, %c0_19, %c0_20] : memref<1x8x128xf32, #tpu.memory_space<vmem>>, vector<1x8x128xf32>
    tpu.vector_store %arg5[%c0_18, %c0_19, %c0_20], %43 {strides = array<i32>} : memref<1x8x128xf32, #tpu.memory_space<vmem>>, vector<1x8x128xf32>,
    %c0_21 = arith.constant 0 : index
    %c0_22 = arith.constant 0 : index
    %c0_23 = arith.constant 0 : index
    %45 = vector.load %arg6[%c0_21, %c0_22, %c0_23] : memref<1x8x128xf32, #tpu.memory_space<vmem>>, vector<1x8x128xf32>
    %46 = vector.broadcast %31 : f32 to vector<1x8x128xf32>
    %47 = arith.addf %45, %46 : vector<1x8x128xf32>
    %c0_24 = arith.constant 0 : index
    %c0_25 = arith.constant 0 : index
    %c0_26 = arith.constant 0 : index
    %48 = vector.load %arg6[%c0_24, %c0_25, %c0_26] : memref<1x8x128xf32, #tpu.memory_space<vmem>>, vector<1x8x128xf32>
    tpu.vector_store %arg6[%c0_24, %c0_25, %c0_26], %47 {strides = array<i32>} : memref<1x8x128xf32, #tpu.memory_space<vmem>>, vector<1x8x128xf32>,
    %c0_27 = arith.constant 0 : index
    %c0_28 = arith.constant 0 : index
    %c0_29 = arith.constant 0 : index
    %49 = vector.load %arg7[%c0_27, %c0_28, %c0_29] : memref<1x8x128xf32, #tpu.memory_space<vmem>>, vector<1x8x128xf32>
    %50 = vector.broadcast %36 : f32 to vector<1x8x128xf32>
    %51 = arith.addf %49, %50 : vector<1x8x128xf32>
    %c0_30 = arith.constant 0 : index
    %c0_31 = arith.constant 0 : index
    %c0_32 = arith.constant 0 : index
    %52 = vector.load %arg7[%c0_30, %c0_31, %c0_32] : memref<1x8x128xf32, #tpu.memory_space<vmem>>, vector<1x8x128xf32>
    tpu.vector_store %arg7[%c0_30, %c0_31, %c0_32], %51 {strides = array<i32>} : memref<1x8x128xf32, #tpu.memory_space<vmem>>, vector<1x8x128xf32>,
    return
  }
  func.func @transform_0(%arg0: i32, %arg1: i32) -> (i32, i32, i32) {
    %c1_i32 = arith.constant 1 : i32
    %0 = arith.muli %arg0, %c1_i32 : i32
    %1 = arith.addi %0, %arg1 : i32
    %c0_i32 = arith.constant 0 : i32
    %c0_i32_0 = arith.constant 0 : i32
    %c0_i32_1 = arith.constant 0 : i32
    return %1, %c0_i32, %c0_i32_0 : i32, i32, i32
  }
  func.func @transform_1(%arg0: i32, %arg1: i32) -> (i32, i32, i32) {
    %c1_i32 = arith.constant 1 : i32
    %0 = arith.muli %arg0, %c1_i32 : i32
    %1 = arith.addi %0, %arg1 : i32
    %c0_i32 = arith.constant 0 : i32
    %c0_i32_0 = arith.constant 0 : i32
    %c0_i32_1 = arith.constant 0 : i32
    return %1, %c0_i32, %c0_i32_0 : i32, i32, i32
  }
  func.func @transform_2(%arg0: i32, %arg1: i32) -> (i32, i32, i32) {
    %c0_i32 = arith.constant 0 : i32
    %c0_i32_0 = arith.constant 0 : i32
    %c0_i32_1 = arith.constant 0 : i32
    return %arg0, %c0_i32, %c0_i32_0 : i32, i32, i32
  }
  func.func @transform_3(%arg0: i32, %arg1: i32) -> (i32, i32, i32) {
    %c0_i32 = arith.constant 0 : i32
    %c0_i32_0 = arith.constant 0 : i32
    %c0_i32_1 = arith.constant 0 : i32
    return %arg0, %c0_i32, %c0_i32_0 : i32, i32, i32
  }
  func.func @transform_4(%arg0: i32, %arg1: i32) -> (i32, i32, i32) {
    %c0_i32 = arith.constant 0 : i32
    %c0_i32_0 = arith.constant 0 : i32
    %c0_i32_1 = arith.constant 0 : i32
    return %arg0, %c0_i32, %c0_i32_0 : i32, i32, i32
  }
  func.func @transform_5(%arg0: i32, %arg1: i32) -> (i32, i32, i32) {
    %c0_i32 = arith.constant 0 : i32
    %c0_i32_0 = arith.constant 0 : i32
    %c0_i32_1 = arith.constant 0 : i32
    return %arg0, %c0_i32, %c0_i32_0 : i32, i32, i32
  }
}

module attributes {stable_mosaic.version = 11 : i64} {
  func.func @kernel(%arg0: i32, %arg1: i32, %arg2: memref<30x32x32xf32, #tpu.memory_space<vmem>>, %arg3: memref<30x32x32xf32, #tpu.memory_space<vmem>>, %arg4: memref<1x8x128xf32, #tpu.memory_space<vmem>>) attributes {dimension_semantics = [#tpu.dimension_semantics<parallel>, #tpu.dimension_semantics<arbitrary>], iteration_bounds = array<i64: 1, 1>, scalar_prefetch = 0 : i64, scratch_operands = 0 : i64, tpu.core_type = #tpu.core_type<tc>, window_params = [{transform_indices = @transform_0, window_bounds = array<i64: 30, 32, 32>}, {transform_indices = @transform_1, window_bounds = array<i64: 30, 32, 32>}, {transform_indices = @transform_2, window_bounds = array<i64: 1, 8, 128>}]} {
    %c0_i32 = arith.constant 0 : i32
    %0 = arith.cmpi eq, %arg1, %c0_i32 : i32
    %1 = arith.extui %0 : i1 to i32
    %c0_i32_0 = arith.constant 0 : i32
    %2 = arith.cmpi ne, %1, %c0_i32_0 : i32
    scf.if %2 {
      %cst_12 = arith.constant 0.000000e+00 : f32
      %15 = vector.broadcast %cst_12 : f32 to vector<1x8x128xf32>
      %c0_13 = arith.constant 0 : index
      %c0_14 = arith.constant 0 : index
      %c0_15 = arith.constant 0 : index
      %16 = vector.load %arg4[%c0_13, %c0_14, %c0_15] : memref<1x8x128xf32, #tpu.memory_space<vmem>>, vector<1x8x128xf32>
      tpu.vector_store %arg4[%c0_13, %c0_14, %c0_15], %15 {strides = array<i32>} : memref<1x8x128xf32, #tpu.memory_space<vmem>>, vector<1x8x128xf32>,
    } else {
    }
    %c0 = arith.constant 0 : index
    %c0_1 = arith.constant 0 : index
    %c0_2 = arith.constant 0 : index
    %3 = vector.load %arg2[%c0, %c0_1, %c0_2] : memref<30x32x32xf32, #tpu.memory_space<vmem>>, vector<30x32x32xf32>
    %c0_3 = arith.constant 0 : index
    %c0_4 = arith.constant 0 : index
    %c0_5 = arith.constant 0 : index
    %4 = vector.load %arg3[%c0_3, %c0_4, %c0_5] : memref<30x32x32xf32, #tpu.memory_space<vmem>>, vector<30x32x32xf32>
    %5 = arith.subf %3, %4 : vector<30x32x32xf32>
    %6 = math.absf %5 : vector<30x32x32xf32>
    %7 = vector.shape_cast %6 : vector<30x32x32xf32> to vector<1x30x32x32xf32>
    %cst = arith.constant dense<0.000000e+00> : vector<1xf32>
    %8 = vector.multi_reduction <add>, %7, %cst [1, 2, 3] : vector<1x30x32x32xf32> to vector<1xf32>
    %9 = vector.shape_cast %8 : vector<1xf32> to vector<1x1x1x1xf32>
    %10 = vector.extract %9[0, 0, 0, 0] : f32 from vector<1x1x1x1xf32>
    %c0_6 = arith.constant 0 : index
    %c0_7 = arith.constant 0 : index
    %c0_8 = arith.constant 0 : index
    %11 = vector.load %arg4[%c0_6, %c0_7, %c0_8] : memref<1x8x128xf32, #tpu.memory_space<vmem>>, vector<1x8x128xf32>
    %12 = vector.broadcast %10 : f32 to vector<1x8x128xf32>
    %13 = arith.addf %11, %12 : vector<1x8x128xf32>
    %c0_9 = arith.constant 0 : index
    %c0_10 = arith.constant 0 : index
    %c0_11 = arith.constant 0 : index
    %14 = vector.load %arg4[%c0_9, %c0_10, %c0_11] : memref<1x8x128xf32, #tpu.memory_space<vmem>>, vector<1x8x128xf32>
    tpu.vector_store %arg4[%c0_9, %c0_10, %c0_11], %13 {strides = array<i32>} : memref<1x8x128xf32, #tpu.memory_space<vmem>>, vector<1x8x128xf32>,
    return
  }
  func.func @transform_0(%arg0: i32, %arg1: i32) -> (i32, i32, i32) {
    %c1_i32 = arith.constant 1 : i32
    %0 = arith.muli %arg0, %c1_i32 : i32
    %1 = arith.addi %0, %arg1 : i32
    %c0_i32 = arith.constant 0 : i32
    %c0_i32_0 = arith.constant 0 : i32
    %c0_i32_1 = arith.constant 0 : i32
    return %1, %c0_i32, %c0_i32_0 : i32, i32, i32
  }
  func.func @transform_1(%arg0: i32, %arg1: i32) -> (i32, i32, i32) {
    %c1_i32 = arith.constant 1 : i32
    %0 = arith.muli %arg0, %c1_i32 : i32
    %1 = arith.addi %0, %arg1 : i32
    %c0_i32 = arith.constant 0 : i32
    %c0_i32_0 = arith.constant 0 : i32
    %c0_i32_1 = arith.constant 0 : i32
    return %1, %c0_i32, %c0_i32_0 : i32, i32, i32
  }
  func.func @transform_2(%arg0: i32, %arg1: i32) -> (i32, i32, i32) {
    %c0_i32 = arith.constant 0 : i32
    %c0_i32_0 = arith.constant 0 : i32
    %c0_i32_1 = arith.constant 0 : i32
    return %arg0, %c0_i32, %c0_i32_0 : i32, i32, i32
  }
}

</mosaic_0001>

<llo_original>
// kernel: _lambda_.7
$region0: #{_lambda_.7}
  #allocation0 [shape = 'u32[]', space=smem, size = 0x4, offset = 0x4, fixed_abs, tag = 'smem constant byte address 0x4 - core index']
  #allocation1 [shape = 'u32[72,128]{1,0:T(1,128)}', space=vmem, size = 0x9000, scoped, tag = 'internal scratch']
  %s0 = inlined_call_operand.vmem [shape: f32[18,16,16], index: 0, kind: input, shape index: {}]
  %s1 = inlined_call_operand.vmem [shape: f32[18,16,16], index: 1, kind: input, shape index: {}]
  %s2 = inlined_call_operand.vmem [shape: f32[18,16,16], index: 2, kind: input, shape index: {}]
  %s3 = inlined_call_operand.vmem [shape: f32[18,16,16], index: 3, kind: input, shape index: {}]
  %s4 = inlined_call_operand.vmem [shape: f32[1,8,128], index: 4, kind: output, shape index: {0}]
  %s5 = inlined_call_operand.vmem [shape: f32[1,8,128], index: 5, kind: output, shape index: {1}]
  %6 = xla_tuple %s4, %s5
  %s7 = sld [smem:[#allocation0]]
  $region38: #{_lambda_.7} parent=0
    _
  %s9 = ssub.s32 1, %s7
  %s10 = scalar_select 0, %s9, %s7
  // Predicated region
  $region2: #{_lambda_.7} parent=0 // pred_check
    _
  $region3: #{_lambda_.7} parent=0 // pred_check_branch
    %12 = sbr.rel (0) target = $region5
  $region4: #{_lambda_.7} parent=0 // pred_region
    %s13 = sadd.s32 0, 0
    %s14 = smul.u32 18, %s13
    %p15 = scmp.lt.s32.totalorder %s14, 17
    %s16 = scalar_select %p15, %s14, 17
    %s17 = smul.addr %s16, 2
    %s18 = smul.addr %s17, 8
    %s19 = scalar_lea.vmem %s0, %s18
    %s20 = sadd.s32 0, 0
    %s21 = smul.u32 18, %s20
  $region5: #{_lambda_.7} parent=0 // pred_fallthru
    _
  // Predicated region
  $region6: #{_lambda_.7} parent=0 // pred_check
    _
  $region7: #{_lambda_.7} parent=0 // pred_check_branch
    %23 = sbr.rel (0) target = $region9
  $region8: #{_lambda_.7} parent=0 // pred_region
    %s24 = sadd.s32 0, 0
    %s25 = smul.u32 18, %s24
    %p26 = scmp.lt.s32.totalorder %s25, 17
    %s27 = scalar_select %p26, %s25, 17
    %s28 = smul.addr %s27, 2
    %s29 = smul.addr %s28, 8
    %s30 = scalar_lea.vmem %s1, %s29
    %s31 = sadd.s32 0, 0
    %s32 = smul.u32 18, %s31
  $region9: #{_lambda_.7} parent=0 // pred_fallthru
    _
  // Predicated region
  $region10: #{_lambda_.7} parent=0 // pred_check
    _
  $region11: #{_lambda_.7} parent=0 // pred_check_branch
    %34 = sbr.rel (0) target = $region13
  $region12: #{_lambda_.7} parent=0 // pred_region
    %s35 = sadd.s32 0, 0
    %s36 = smul.u32 18, %s35
    %p37 = scmp.lt.s32.totalorder %s36, 17
    %s38 = scalar_select %p37, %s36, 17
    %s39 = smul.addr %s38, 2
    %s40 = smul.addr %s39, 8
    %s41 = scalar_lea.vmem %s2, %s40
    %s42 = sadd.s32 0, 0
    %s43 = smul.u32 18, %s42
  $region13: #{_lambda_.7} parent=0 // pred_fallthru
    _
  // Predicated region
  $region14: #{_lambda_.7} parent=0 // pred_check
    _
  $region15: #{_lambda_.7} parent=0 // pred_check_branch
    %45 = sbr.rel (0) target = $region17
  $region16: #{_lambda_.7} parent=0 // pred_region
    %s46 = sadd.s32 0, 0
    %s47 = smul.u32 18, %s46
    %p48 = scmp.lt.s32.totalorder %s47, 17
    %s49 = scalar_select %p48, %s47, 17
    %s50 = smul.addr %s49, 2
    %s51 = smul.addr %s50, 8
    %s52 = scalar_lea.vmem %s3, %s51
    %s53 = sadd.s32 0, 0
    %s54 = smul.u32 18, %s53
  $region17: #{_lambda_.7} parent=0 // pred_fallthru
    _
  %s55 = sadd.s32 0, 0
  %s56 = smul.u32 18, %s55
  %p57 = scmp.lt.s32.totalorder %s56, 17
  %s58 = scalar_select %p57, %s56, 17
  %s59 = smul.addr %s58, 2
  %s60 = smul.addr %s59, 8
  %s61 = scalar_lea.vmem %s0, %s60
  %s62 = sadd.s32 0, 0
  %s63 = smul.u32 18, %s62
  %p64 = scmp.lt.s32.totalorder %s63, 17
  %s65 = scalar_select %p64, %s63, 17
  %s66 = smul.addr %s65, 2
  %s67 = smul.addr %s66, 8
  %s68 = scalar_lea.vmem %s1, %s67
  %s69 = sadd.s32 0, 0
  %s70 = smul.u32 18, %s69
  %p71 = scmp.lt.s32.totalorder %s70, 17
  %s72 = scalar_select %p71, %s70, 17
  %s73 = smul.addr %s72, 2
  %s74 = smul.addr %s73, 8
  %s75 = scalar_lea.vmem %s2, %s74
  %s76 = sadd.s32 0, 0
  %s77 = smul.u32 18, %s76
  %p78 = scmp.lt.s32.totalorder %s77, 17
  %s79 = scalar_select %p78, %s77, 17
  %s80 = smul.addr %s79, 2
  %s81 = smul.addr %s80, 8
  %s82 = scalar_lea.vmem %s3, %s81
  %s83 = sadd.s32 0, 0
  %s84 = smul.u32 18, %s83
  %p85 = scmp.lt.s32.totalorder %s84, 17
  %s86 = scalar_select %p85, %s84, 17
  %s87 = smul.addr %s86, 2
  %s88 = smul.addr %s87, 8
  %s89 = scalar_lea.vmem %s0, %s88
  %s90 = sadd.s32 0, 0
  %s91 = smul.u32 18, %s90
  %s92 = sadd.s32 0, 0
  %s93 = smul.u32 18, %s92
  %p94 = scmp.lt.s32.totalorder %s93, 17
  %s95 = scalar_select %p94, %s93, 17
  %s96 = smul.addr %s95, 2
  %s97 = smul.addr %s96, 8
  %s98 = scalar_lea.vmem %s1, %s97
  %s99 = sadd.s32 0, 0
  %s100 = smul.u32 18, %s99
  %s101 = sadd.s32 0, 0
  %s102 = smul.u32 18, %s101
  %p103 = scmp.lt.s32.totalorder %s102, 17
  %s104 = scalar_select %p103, %s102, 17
  %s105 = smul.addr %s104, 2
  %s106 = smul.addr %s105, 8
  %s107 = scalar_lea.vmem %s2, %s106
  %s108 = sadd.s32 0, 0
  %s109 = smul.u32 18, %s108
  %s110 = sadd.s32 0, 0
  %s111 = smul.u32 18, %s110
  %p112 = scmp.lt.s32.totalorder %s111, 17
  %s113 = scalar_select %p112, %s111, 17
  %s114 = smul.addr %s113, 2
  %s115 = smul.addr %s114, 8
  %s116 = scalar_lea.vmem %s3, %s115
  %s117 = sadd.s32 0, 0
  %s118 = smul.u32 18, %s117
  %p119 = scmp.eq.s32.totalorder 0, 0
  // Predicated region
  $region18: #{_lambda_.7} parent=0 // pred_check
    %p120 = pneg %p119
  $region19: #{_lambda_.7} parent=0 // pred_check_branch
    %122 = sbr.rel (%p120) target = $region21
  $region20: #{_lambda_.7} parent=0 // pred_region
    %123 = vst [vmem:[%s4] sm:$0xff] 0.0
    %124 = vst [vmem:[%s5] sm:$0xff] 0.0
  $region21: #{_lambda_.7} parent=0 // pred_fallthru
    _
  %v125 = vld [vmem:[%s89] sm:$0xff]
  %v126 = vld [vmem:[%s89 + $0x8] sm:$0xff]
  %v127 = vld [vmem:[%s89 + $0x10] sm:$0xff]
  %v128 = vld [vmem:[%s89 + $0x18] sm:$0xff]
  %v129 = vld [vmem:[%s89 + $0x20] sm:$0xff]
  %v130 = vld [vmem:[%s89 + $0x28] sm:$0xff]
  %v131 = vld [vmem:[%s89 + $0x30] sm:$0xff]
  %v132 = vld [vmem:[%s89 + $0x38] sm:$0xff]
  %v133 = vld [vmem:[%s89 + $0x40] sm:$0xff]
  %v134 = vld [vmem:[%s89 + $0x48] sm:$0xff]
  %v135 = vld [vmem:[%s89 + $0x50] sm:$0xff]
  %v136 = vld [vmem:[%s89 + $0x58] sm:$0xff]
  %v137 = vld [vmem:[%s89 + $0x60] sm:$0xff]
  %v138 = vld [vmem:[%s89 + $0x68] sm:$0xff]
  %v139 = vld [vmem:[%s89 + $0x70] sm:$0xff]
  %v140 = vld [vmem:[%s89 + $0x78] sm:$0xff]
  %v141 = vld [vmem:[%s89 + $0x80] sm:$0xff]
  %v142 = vld [vmem:[%s89 + $0x88] sm:$0xff]
  %v143 = vld [vmem:[%s89 + $0x90] sm:$0xff]
  %v144 = vld [vmem:[%s89 + $0x98] sm:$0xff]
  %v145 = vld [vmem:[%s89 + $0xa0] sm:$0xff]
  %v146 = vld [vmem:[%s89 + $0xa8] sm:$0xff]
  %v147 = vld [vmem:[%s89 + $0xb0] sm:$0xff]
  %v148 = vld [vmem:[%s89 + $0xb8] sm:$0xff]
  %v149 = vld [vmem:[%s89 + $0xc0] sm:$0xff]
  %v150 = vld [vmem:[%s89 + $0xc8] sm:$0xff]
  %v151 = vld [vmem:[%s89 + $0xd0] sm:$0xff]
  %v152 = vld [vmem:[%s89 + $0xd8] sm:$0xff]
  %v153 = vld [vmem:[%s89 + $0xe0] sm:$0xff]
  %v154 = vld [vmem:[%s89 + $0xe8] sm:$0xff]
  %v155 = vld [vmem:[%s89 + $0xf0] sm:$0xff]
  %v156 = vld [vmem:[%s89 + $0xf8] sm:$0xff]
  %v157 = vld [vmem:[%s89 + $0x100] sm:$0xff]
  %v158 = vld [vmem:[%s89 + $0x108] sm:$0xff]
  %v159 = vld [vmem:[%s89 + $0x110] sm:$0xff]
  %v160 = vld [vmem:[%s89 + $0x118] sm:$0xff]
  %v161 = vld [vmem:[%s98] sm:$0xff]
  %v162 = vld [vmem:[%s98 + $0x8] sm:$0xff]
  %v163 = vld [vmem:[%s98 + $0x10] sm:$0xff]
  %v164 = vld [vmem:[%s98 + $0x18] sm:$0xff]
  %v165 = vld [vmem:[%s98 + $0x20] sm:$0xff]
  %v166 = vld [vmem:[%s98 + $0x28] sm:$0xff]
  %v167 = vld [vmem:[%s98 + $0x30] sm:$0xff]
  %v168 = vld [vmem:[%s98 + $0x38] sm:$0xff]
  %v169 = vld [vmem:[%s98 + $0x40] sm:$0xff]
  %v170 = vld [vmem:[%s98 + $0x48] sm:$0xff]
  %v171 = vld [vmem:[%s98 + $0x50] sm:$0xff]
  %v172 = vld [vmem:[%s98 + $0x58] sm:$0xff]
  %v173 = vld [vmem:[%s98 + $0x60] sm:$0xff]
  %v174 = vld [vmem:[%s98 + $0x68] sm:$0xff]
  %v175 = vld [vmem:[%s98 + $0x70] sm:$0xff]
  %v176 = vld [vmem:[%s98 + $0x78] sm:$0xff]
  %v177 = vld [vmem:[%s98 + $0x80] sm:$0xff]
  %v178 = vld [vmem:[%s98 + $0x88] sm:$0xff]
  %v179 = vld [vmem:[%s98 + $0x90] sm:$0xff]
  %v180 = vld [vmem:[%s98 + $0x98] sm:$0xff]
  %v181 = vld [vmem:[%s98 + $0xa0] sm:$0xff]
  %v182 = vld [vmem:[%s98 + $0xa8] sm:$0xff]
  %v183 = vld [vmem:[%s98 + $0xb0] sm:$0xff]
  %v184 = vld [vmem:[%s98 + $0xb8] sm:$0xff]
  %v185 = vld [vmem:[%s98 + $0xc0] sm:$0xff]
  %v186 = vld [vmem:[%s98 + $0xc8] sm:$0xff]
  %v187 = vld [vmem:[%s98 + $0xd0] sm:$0xff]
  %v188 = vld [vmem:[%s98 + $0xd8] sm:$0xff]
  %v189 = vld [vmem:[%s98 + $0xe0] sm:$0xff]
  %v190 = vld [vmem:[%s98 + $0xe8] sm:$0xff]
  %v191 = vld [vmem:[%s98 + $0xf0] sm:$0xff]
  %v192 = vld [vmem:[%s98 + $0xf8] sm:$0xff]
  %v193 = vld [vmem:[%s98 + $0x100] sm:$0xff]
  %v194 = vld [vmem:[%s98 + $0x108] sm:$0xff]
  %v195 = vld [vmem:[%s98 + $0x110] sm:$0xff]
  %v196 = vld [vmem:[%s98 + $0x118] sm:$0xff]
  %v197 = vld [vmem:[%s107] sm:$0xff]
  %v198 = vld [vmem:[%s107 + $0x8] sm:$0xff]
  %v199 = vld [vmem:[%s107 + $0x10] sm:$0xff]
  %v200 = vld [vmem:[%s107 + $0x18] sm:$0xff]
  %v201 = vld [vmem:[%s107 + $0x20] sm:$0xff]
  %v202 = vld [vmem:[%s107 + $0x28] sm:$0xff]
  %v203 = vld [vmem:[%s107 + $0x30] sm:$0xff]
  %v204 = vld [vmem:[%s107 + $0x38] sm:$0xff]
  %v205 = vld [vmem:[%s107 + $0x40] sm:$0xff]
  %v206 = vld [vmem:[%s107 + $0x48] sm:$0xff]
  %v207 = vld [vmem:[%s107 + $0x50] sm:$0xff]
  %v208 = vld [vmem:[%s107 + $0x58] sm:$0xff]
  %v209 = vld [vmem:[%s107 + $0x60] sm:$0xff]
  %v210 = vld [vmem:[%s107 + $0x68] sm:$0xff]
  %v211 = vld [vmem:[%s107 + $0x70] sm:$0xff]
  %v212 = vld [vmem:[%s107 + $0x78] sm:$0xff]
  %v213 = vld [vmem:[%s107 + $0x80] sm:$0xff]
  %v214 = vld [vmem:[%s107 + $0x88] sm:$0xff]
  %v215 = vld [vmem:[%s107 + $0x90] sm:$0xff]
  %v216 = vld [vmem:[%s107 + $0x98] sm:$0xff]
  %v217 = vld [vmem:[%s107 + $0xa0] sm:$0xff]
  %v218 = vld [vmem:[%s107 + $0xa8] sm:$0xff]
  %v219 = vld [vmem:[%s107 + $0xb0] sm:$0xff]
  %v220 = vld [vmem:[%s107 + $0xb8] sm:$0xff]
  %v221 = vld [vmem:[%s107 + $0xc0] sm:$0xff]
  %v222 = vld [vmem:[%s107 + $0xc8] sm:$0xff]
  %v223 = vld [vmem:[%s107 + $0xd0] sm:$0xff]
  %v224 = vld [vmem:[%s107 + $0xd8] sm:$0xff]
  %v225 = vld [vmem:[%s107 + $0xe0] sm:$0xff]
  %v226 = vld [vmem:[%s107 + $0xe8] sm:$0xff]
  %v227 = vld [vmem:[%s107 + $0xf0] sm:$0xff]
  %v228 = vld [vmem:[%s107 + $0xf8] sm:$0xff]
  %v229 = vld [vmem:[%s107 + $0x100] sm:$0xff]
  %v230 = vld [vmem:[%s107 + $0x108] sm:$0xff]
  %v231 = vld [vmem:[%s107 + $0x110] sm:$0xff]
  %v232 = vld [vmem:[%s107 + $0x118] sm:$0xff]
  %v233 = vld [vmem:[%s116] sm:$0xff]
  %v234 = vld [vmem:[%s116 + $0x8] sm:$0xff]
  %v235 = vld [vmem:[%s116 + $0x10] sm:$0xff]
  %v236 = vld [vmem:[%s116 + $0x18] sm:$0xff]
  %v237 = vld [vmem:[%s116 + $0x20] sm:$0xff]
  %v238 = vld [vmem:[%s116 + $0x28] sm:$0xff]
  %v239 = vld [vmem:[%s116 + $0x30] sm:$0xff]
  %v240 = vld [vmem:[%s116 + $0x38] sm:$0xff]
  %v241 = vld [vmem:[%s116 + $0x40] sm:$0xff]
  %v242 = vld [vmem:[%s116 + $0x48] sm:$0xff]
  %v243 = vld [vmem:[%s116 + $0x50] sm:$0xff]
  %v244 = vld [vmem:[%s116 + $0x58] sm:$0xff]
  %v245 = vld [vmem:[%s116 + $0x60] sm:$0xff]
  %v246 = vld [vmem:[%s116 + $0x68] sm:$0xff]
  %v247 = vld [vmem:[%s116 + $0x70] sm:$0xff]
  %v248 = vld [vmem:[%s116 + $0x78] sm:$0xff]
  %v249 = vld [vmem:[%s116 + $0x80] sm:$0xff]
  %v250 = vld [vmem:[%s116 + $0x88] sm:$0xff]
  %v251 = vld [vmem:[%s116 + $0x90] sm:$0xff]
  %v252 = vld [vmem:[%s116 + $0x98] sm:$0xff]
  %v253 = vld [vmem:[%s116 + $0xa0] sm:$0xff]
  %v254 = vld [vmem:[%s116 + $0xa8] sm:$0xff]
  %v255 = vld [vmem:[%s116 + $0xb0] sm:$0xff]
  %v256 = vld [vmem:[%s116 + $0xb8] sm:$0xff]
  %v257 = vld [vmem:[%s116 + $0xc0] sm:$0xff]
  %v258 = vld [vmem:[%s116 + $0xc8] sm:$0xff]
  %v259 = vld [vmem:[%s116 + $0xd0] sm:$0xff]
  %v260 = vld [vmem:[%s116 + $0xd8] sm:$0xff]
  %v261 = vld [vmem:[%s116 + $0xe0] sm:$0xff]
  %v262 = vld [vmem:[%s116 + $0xe8] sm:$0xff]
  %v263 = vld [vmem:[%s116 + $0xf0] sm:$0xff]
  %v264 = vld [vmem:[%s116 + $0xf8] sm:$0xff]
  %v265 = vld [vmem:[%s116 + $0x100] sm:$0xff]
  %v266 = vld [vmem:[%s116 + $0x108] sm:$0xff]
  %v267 = vld [vmem:[%s116 + $0x110] sm:$0xff]
  %v268 = vld [vmem:[%s116 + $0x118] sm:$0xff]
  %v269 = vsub.f32 %v125, %v161
  %v270 = vsub.f32 %v126, %v162
  %v271 = vsub.f32 %v127, %v163
  %v272 = vsub.f32 %v128, %v164
  %v273 = vsub.f32 %v129, %v165
  %v274 = vsub.f32 %v130, %v166
  %v275 = vsub.f32 %v131, %v167
  %v276 = vsub.f32 %v132, %v168
  %v277 = vsub.f32 %v133, %v169
  %v278 = vsub.f32 %v134, %v170
  %v279 = vsub.f32 %v135, %v171
  %v280 = vsub.f32 %v136, %v172
  %v281 = vsub.f32 %v137, %v173
  %v282 = vsub.f32 %v138, %v174
  %v283 = vsub.f32 %v139, %v175
  %v284 = vsub.f32 %v140, %v176
  %v285 = vsub.f32 %v141, %v177
  %v286 = vsub.f32 %v142, %v178
  %v287 = vsub.f32 %v143, %v179
  %v288 = vsub.f32 %v144, %v180
  %v289 = vsub.f32 %v145, %v181
  %v290 = vsub.f32 %v146, %v182
  %v291 = vsub.f32 %v147, %v183
  %v292 = vsub.f32 %v148, %v184
  %v293 = vsub.f32 %v149, %v185
  %v294 = vsub.f32 %v150, %v186
  %v295 = vsub.f32 %v151, %v187
  %v296 = vsub.f32 %v152, %v188
  %v297 = vsub.f32 %v153, %v189
  %v298 = vsub.f32 %v154, %v190
  %v299 = vsub.f32 %v155, %v191
  %v300 = vsub.f32 %v156, %v192
  %v301 = vsub.f32 %v157, %v193
  %v302 = vsub.f32 %v158, %v194
  %v303 = vsub.f32 %v159, %v195
  %v304 = vsub.f32 %v160, %v196
  %v305 = vand.u32 2147483647, %v269
  %v306 = vand.u32 2147483647, %v270
  %v307 = vand.u32 2147483647, %v271
  %v308 = vand.u32 2147483647, %v272
  %v309 = vand.u32 2147483647, %v273
  %v310 = vand.u32 2147483647, %v274
  %v311 = vand.u32 2147483647, %v275
  %v312 = vand.u32 2147483647, %v276
  %v313 = vand.u32 2147483647, %v277
  %v314 = vand.u32 2147483647, %v278
  %v315 = vand.u32 2147483647, %v279
  %v316 = vand.u32 2147483647, %v280
  %v317 = vand.u32 2147483647, %v281
  %v318 = vand.u32 2147483647, %v282
  %v319 = vand.u32 2147483647, %v283
  %v320 = vand.u32 2147483647, %v284
  %v321 = vand.u32 2147483647, %v285
  %v322 = vand.u32 2147483647, %v286
  %v323 = vand.u32 2147483647, %v287
  %v324 = vand.u32 2147483647, %v288
  %v325 = vand.u32 2147483647, %v289
  %v326 = vand.u32 2147483647, %v290
  %v327 = vand.u32 2147483647, %v291
  %v328 = vand.u32 2147483647, %v292
  %v329 = vand.u32 2147483647, %v293
  %v330 = vand.u32 2147483647, %v294
  %v331 = vand.u32 2147483647, %v295
  %v332 = vand.u32 2147483647, %v296
  %v333 = vand.u32 2147483647, %v297
  %v334 = vand.u32 2147483647, %v298
  %v335 = vand.u32 2147483647, %v299
  %v336 = vand.u32 2147483647, %v300
  %v337 = vand.u32 2147483647, %v301
  %v338 = vand.u32 2147483647, %v302
  %v339 = vand.u32 2147483647, %v303
  %v340 = vand.u32 2147483647, %v304
  %vm341 = vcmask 130048
  %v342 = vsel %vm341, %v305, 0.0
  %v343 = vsel %vm341, %v306, 0.0
  %v344 = vadd.f32 %v342, %v343
  %v345 = vsel %vm341, %v307, 0.0
  %v346 = vadd.f32 %v344, %v345
  %v347 = vsel %vm341, %v308, 0.0
  %v348 = vadd.f32 %v346, %v347
  %v349 = vsel %vm341, %v309, 0.0
  %v350 = vadd.f32 %v348, %v349
  %v351 = vsel %vm341, %v310, 0.0
  %v352 = vadd.f32 %v350, %v351
  %v353 = vsel %vm341, %v311, 0.0
  %v354 = vadd.f32 %v352, %v353
  %v355 = vsel %vm341, %v312, 0.0
  %v356 = vadd.f32 %v354, %v355
  %v357 = vsel %vm341, %v313, 0.0
  %v358 = vadd.f32 %v356, %v357
  %v359 = vsel %vm341, %v314, 0.0
  %v360 = vadd.f32 %v358, %v359
  %v361 = vsel %vm341, %v315, 0.0
  %v362 = vadd.f32 %v360, %v361
  %v363 = vsel %vm341, %v316, 0.0
  %v364 = vadd.f32 %v362, %v363
  %v365 = vsel %vm341, %v317, 0.0
  %v366 = vadd.f32 %v364, %v365
  %v367 = vsel %vm341, %v318, 0.0
  %v368 = vadd.f32 %v366, %v367
  %v369 = vsel %vm341, %v319, 0.0
  %v370 = vadd.f32 %v368, %v369
  %v371 = vsel %vm341, %v320, 0.0
  %v372 = vadd.f32 %v370, %v371
  %v373 = vsel %vm341, %v321, 0.0
  %v374 = vadd.f32 %v372, %v373
  %v375 = vsel %vm341, %v322, 0.0
  %v376 = vadd.f32 %v374, %v375
  %v377 = vsel %vm341, %v323, 0.0
  %v378 = vadd.f32 %v376, %v377
  %v379 = vsel %vm341, %v324, 0.0
  %v380 = vadd.f32 %v378, %v379
  %v381 = vsel %vm341, %v325, 0.0
  %v382 = vadd.f32 %v380, %v381
  %v383 = vsel %vm341, %v326, 0.0
  %v384 = vadd.f32 %v382, %v383
  %v385 = vsel %vm341, %v327, 0.0
  %v386 = vadd.f32 %v384, %v385
  %v387 = vsel %vm341, %v328, 0.0
  %v388 = vadd.f32 %v386, %v387
  %v389 = vsel %vm341, %v329, 0.0
  %v390 = vadd.f32 %v388, %v389
  %v391 = vsel %vm341, %v330, 0.0
  %v392 = vadd.f32 %v390, %v391
  %v393 = vsel %vm341, %v331, 0.0
  %v394 = vadd.f32 %v392, %v393
  %v395 = vsel %vm341, %v332, 0.0
  %v396 = vadd.f32 %v394, %v395
  %v397 = vsel %vm341, %v333, 0.0
  %v398 = vadd.f32 %v396, %v397
  %v399 = vsel %vm341, %v334, 0.0
  %v400 = vadd.f32 %v398, %v399
  %v401 = vsel %vm341, %v335, 0.0
  %v402 = vadd.f32 %v400, %v401
  %v403 = vsel %vm341, %v336, 0.0
  %v404 = vadd.f32 %v402, %v403
  %v405 = vsel %vm341, %v337, 0.0
  %v406 = vadd.f32 %v404, %v405
  %v407 = vsel %vm341, %v338, 0.0
  %v408 = vadd.f32 %v406, %v407
  %v409 = vsel %vm341, %v339, 0.0
  %v410 = vadd.f32 %v408, %v409
  %v411 = vsel %vm341, %v340, 0.0
  %v412 = vadd.f32 %v410, %v411
  %413 = vadd.xlane.f32.xlu0 %v412
  %v414 = vpop.xlane.xlu0 %413
  %v415 = vrot.slane %v414, 4
  %v416 = vadd.f32 %v414, %v415
  %v417 = vrot.slane %v416, 2
  %v418 = vadd.f32 %v416, %v417
  %v419 = vrot.slane %v418, 1
  %v420 = vadd.f32 %v418, %v419
  %s421 = vtos %v420
  %v422 = vsub.f32 %v197, %v233
  %v423 = vsub.f32 %v198, %v234
  %v424 = vsub.f32 %v199, %v235
  %v425 = vsub.f32 %v200, %v236
  %v426 = vsub.f32 %v201, %v237
  %v427 = vsub.f32 %v202, %v238
  %v428 = vsub.f32 %v203, %v239
  %v429 = vsub.f32 %v204, %v240
  %v430 = vsub.f32 %v205, %v241
  %v431 = vsub.f32 %v206, %v242
  %v432 = vsub.f32 %v207, %v243
  %v433 = vsub.f32 %v208, %v244
  %v434 = vsub.f32 %v209, %v245
  %v435 = vsub.f32 %v210, %v246
  %v436 = vsub.f32 %v211, %v247
  %v437 = vsub.f32 %v212, %v248
  %v438 = vsub.f32 %v213, %v249
  %v439 = vsub.f32 %v214, %v250
  %v440 = vsub.f32 %v215, %v251
  %v441 = vsub.f32 %v216, %v252
  %v442 = vsub.f32 %v217, %v253
  %v443 = vsub.f32 %v218, %v254
  %v444 = vsub.f32 %v219, %v255
  %v445 = vsub.f32 %v220, %v256
  %v446 = vsub.f32 %v221, %v257
  %v447 = vsub.f32 %v222, %v258
  %v448 = vsub.f32 %v223, %v259
  %v449 = vsub.f32 %v224, %v260
  %v450 = vsub.f32 %v225, %v261
  %v451 = vsub.f32 %v226, %v262
  %v452 = vsub.f32 %v227, %v263
  %v453 = vsub.f32 %v228, %v264
  %v454 = vsub.f32 %v229, %v265
  %v455 = vsub.f32 %v230, %v266
  %v456 = vsub.f32 %v231, %v267
  %v457 = vsub.f32 %v232, %v268
  %v458 = vand.u32 2147483647, %v422
  %v459 = vand.u32 2147483647, %v423
  %v460 = vand.u32 2147483647, %v424
  %v461 = vand.u32 2147483647, %v425
  %v462 = vand.u32 2147483647, %v426
  %v463 = vand.u32 2147483647, %v427
  %v464 = vand.u32 2147483647, %v428
  %v465 = vand.u32 2147483647, %v429
  %v466 = vand.u32 2147483647, %v430
  %v467 = vand.u32 2147483647, %v431
  %v468 = vand.u32 2147483647, %v432
  %v469 = vand.u32 2147483647, %v433
  %v470 = vand.u32 2147483647, %v434
  %v471 = vand.u32 2147483647, %v435
  %v472 = vand.u32 2147483647, %v436
  %v473 = vand.u32 2147483647, %v437
  %v474 = vand.u32 2147483647, %v438
  %v475 = vand.u32 2147483647, %v439
  %v476 = vand.u32 2147483647, %v440
  %v477 = vand.u32 2147483647, %v441
  %v478 = vand.u32 2147483647, %v442
  %v479 = vand.u32 2147483647, %v443
  %v480 = vand.u32 2147483647, %v444
  %v481 = vand.u32 2147483647, %v445
  %v482 = vand.u32 2147483647, %v446
  %v483 = vand.u32 2147483647, %v447
  %v484 = vand.u32 2147483647, %v448
  %v485 = vand.u32 2147483647, %v449
  %v486 = vand.u32 2147483647, %v450
  %v487 = vand.u32 2147483647, %v451
  %v488 = vand.u32 2147483647, %v452
  %v489 = vand.u32 2147483647, %v453
  %v490 = vand.u32 2147483647, %v454
  %v491 = vand.u32 2147483647, %v455
  %v492 = vand.u32 2147483647, %v456
  %v493 = vand.u32 2147483647, %v457
  %v494 = vsel %vm341, %v458, 0.0
  %v495 = vsel %vm341, %v459, 0.0
  %v496 = vadd.f32 %v494, %v495
  %v497 = vsel %vm341, %v460, 0.0
  %v498 = vadd.f32 %v496, %v497
  %v499 = vsel %vm341, %v461, 0.0
  %v500 = vadd.f32 %v498, %v499
  %v501 = vsel %vm341, %v462, 0.0
  %v502 = vadd.f32 %v500, %v501
  %v503 = vsel %vm341, %v463, 0.0
  %v504 = vadd.f32 %v502, %v503
  %v505 = vsel %vm341, %v464, 0.0
  %v506 = vadd.f32 %v504, %v505
  %v507 = vsel %vm341, %v465, 0.0
  %v508 = vadd.f32 %v506, %v507
  %v509 = vsel %vm341, %v466, 0.0
  %v510 = vadd.f32 %v508, %v509
  %v511 = vsel %vm341, %v467, 0.0
  %v512 = vadd.f32 %v510, %v511
  %v513 = vsel %vm341, %v468, 0.0
  %v514 = vadd.f32 %v512, %v513
  %v515 = vsel %vm341, %v469, 0.0
  %v516 = vadd.f32 %v514, %v515
  %v517 = vsel %vm341, %v470, 0.0
  %v518 = vadd.f32 %v516, %v517
  %v519 = vsel %vm341, %v471, 0.0
  %v520 = vadd.f32 %v518, %v519
  %v521 = vsel %vm341, %v472, 0.0
  %v522 = vadd.f32 %v520, %v521
  %v523 = vsel %vm341, %v473, 0.0
  %v524 = vadd.f32 %v522, %v523
  %v525 = vsel %vm341, %v474, 0.0
  %v526 = vadd.f32 %v524, %v525
  %v527 = vsel %vm341, %v475, 0.0
  %v528 = vadd.f32 %v526, %v527
  %v529 = vsel %vm341, %v476, 0.0
  %v530 = vadd.f32 %v528, %v529
  %v531 = vsel %vm341, %v477, 0.0
  %v532 = vadd.f32 %v530, %v531
  %v533 = vsel %vm341, %v478, 0.0
  %v534 = vadd.f32 %v532, %v533
  %v535 = vsel %vm341, %v479, 0.0
  %v536 = vadd.f32 %v534, %v535
  %v537 = vsel %vm341, %v480, 0.0
  %v538 = vadd.f32 %v536, %v537
  %v539 = vsel %vm341, %v481, 0.0
  %v540 = vadd.f32 %v538, %v539
  %v541 = vsel %vm341, %v482, 0.0
  %v542 = vadd.f32 %v540, %v541
  %v543 = vsel %vm341, %v483, 0.0
  %v544 = vadd.f32 %v542, %v543
  %v545 = vsel %vm341, %v484, 0.0
  %v546 = vadd.f32 %v544, %v545
  %v547 = vsel %vm341, %v485, 0.0
  %v548 = vadd.f32 %v546, %v547
  %v549 = vsel %vm341, %v486, 0.0
  %v550 = vadd.f32 %v548, %v549
  %v551 = vsel %vm341, %v487, 0.0
  %v552 = vadd.f32 %v550, %v551
  %v553 = vsel %vm341, %v488, 0.0
  %v554 = vadd.f32 %v552, %v553
  %v555 = vsel %vm341, %v489, 0.0
  %v556 = vadd.f32 %v554, %v555
  %v557 = vsel %vm341, %v490, 0.0
  %v558 = vadd.f32 %v556, %v557
  %v559 = vsel %vm341, %v491, 0.0
  %v560 = vadd.f32 %v558, %v559
  %v561 = vsel %vm341, %v492, 0.0
  %v562 = vadd.f32 %v560, %v561
  %v563 = vsel %vm341, %v493, 0.0
  %v564 = vadd.f32 %v562, %v563
  %565 = vadd.xlane.f32.xlu0 %v564
  %v566 = vpop.xlane.xlu0 %565
  %v567 = vrot.slane %v566, 4
  %v568 = vadd.f32 %v566, %v567
  %v569 = vrot.slane %v568, 2
  %v570 = vadd.f32 %v568, %v569
  %v571 = vrot.slane %v570, 1
  %v572 = vadd.f32 %v570, %v571
  %s573 = vtos %v572
  %v574 = vld [vmem:[%s4] sm:$0xff]
  %v575 = vstv %s421
  %v576 = vadd.f32 %v574, %v575
  %577 = vst [vmem:[%s4] sm:$0xff] %v576
  %v578 = vld [vmem:[%s5] sm:$0xff]
  %v579 = vstv %s573
  %v580 = vadd.f32 %v578, %v579
  %581 = vst [vmem:[%s5] sm:$0xff] %v580
  // Predicated region
  $region22: #{_lambda_.7} parent=0 // pred_check
    _
  $region23: #{_lambda_.7} parent=0 // pred_check_branch
    %583 = sbr.rel (0) target = $region25
  $region24: #{_lambda_.7} parent=0 // pred_region
    _
  $region25: #{_lambda_.7} parent=0 // pred_fallthru
    _
  // Predicated region
  $region26: #{_lambda_.7} parent=0 // pred_check
    _
  $region27: #{_lambda_.7} parent=0 // pred_check_branch
    %585 = sbr.rel (0) target = $region29
  $region28: #{_lambda_.7} parent=0 // pred_region
    _
  $region29: #{_lambda_.7} parent=0 // pred_fallthru
    _
  // Predicated region
  $region30: #{_lambda_.7} parent=0 // pred_check
    _
  $region31: #{_lambda_.7} parent=0 // pred_check_branch
    %587 = sbr.rel (0) target = $region33
  $region32: #{_lambda_.7} parent=0 // pred_region
    _
  $region33: #{_lambda_.7} parent=0 // pred_fallthru
    _
  // Predicated region
  $region34: #{_lambda_.7} parent=0 // pred_check
    _
  $region35: #{_lambda_.7} parent=0 // pred_check_branch
    %589 = sbr.rel (0) target = $region37
  $region36: #{_lambda_.7} parent=0 // pred_region
    _
  $region37: #{_lambda_.7} parent=0 // pred_fallthru
    _

// kernel: _lambda_.5
$region0: #{_lambda_.5}
  #allocation0 [shape = 'u32[]', space=smem, size = 0x4, offset = 0x4, fixed_abs, tag = 'smem constant byte address 0x4 - core index']
  #allocation1 [shape = 'u32[72,128]{1,0:T(1,128)}', space=vmem, size = 0x9000, scoped, tag = 'internal scratch']
  %s0 = inlined_call_operand.vmem [shape: f32[16,32], index: 0, kind: input, shape index: {}]
  %s1 = inlined_call_operand.vmem [shape: f32[32,16], index: 1, kind: input, shape index: {}]
  %s2 = inlined_call_operand.vmem [shape: f32[18,32,32], index: 2, kind: input, shape index: {}]
  %s3 = inlined_call_operand.vmem [shape: f32[18,16,16], index: 3, kind: output, shape index: {}]
  %s4 = sld [smem:[#allocation0]]
  $region22: #{_lambda_.5} parent=0
    _
  %s6 = ssub.s32 1, %s4
  %s7 = scalar_select 0, %s6, %s4
  // Predicated region
  $region2: #{_lambda_.5} parent=0 // pred_check
    _
  $region3: #{_lambda_.5} parent=0 // pred_check_branch
    %9 = sbr.rel (0) target = $region5
  $region4: #{_lambda_.5} parent=0 // pred_region
    _
  $region5: #{_lambda_.5} parent=0 // pred_fallthru
    _
  // Predicated region
  $region6: #{_lambda_.5} parent=0 // pred_check
    _
  $region7: #{_lambda_.5} parent=0 // pred_check_branch
    %11 = sbr.rel (0) target = $region9
  $region8: #{_lambda_.5} parent=0 // pred_region
    _
  $region9: #{_lambda_.5} parent=0 // pred_fallthru
    _
  // Predicated region
  $region10: #{_lambda_.5} parent=0 // pred_check
    _
  $region11: #{_lambda_.5} parent=0 // pred_check_branch
    %13 = sbr.rel (0) target = $region13
  $region12: #{_lambda_.5} parent=0 // pred_region
    _
  $region13: #{_lambda_.5} parent=0 // pred_fallthru
    _
  %v14 = vld [vmem:[%s0] sm:$0xff]
  %v15 = vld [vmem:[%s0 + $0x8] sm:$0xff]
  %v16 = vld [vmem:[%s1] sm:$0xff]
  %v17 = vld [vmem:[%s1 + $0x8] sm:$0xff]
  %v18 = vld [vmem:[%s1 + $0x10] sm:$0xff]
  %v19 = vld [vmem:[%s1 + $0x18] sm:$0xff]
  %v20 = vld [vmem:[%s2] sm:$0xff]
  %v21 = vld [vmem:[%s2 + $0x8] sm:$0xff]
  %v22 = vld [vmem:[%s2 + $0x10] sm:$0xff]
  %v23 = vld [vmem:[%s2 + $0x18] sm:$0xff]
  %v24 = vld [vmem:[%s2 + $0x20] sm:$0xff]
  %v25 = vld [vmem:[%s2 + $0x28] sm:$0xff]
  %v26 = vld [vmem:[%s2 + $0x30] sm:$0xff]
  %v27 = vld [vmem:[%s2 + $0x38] sm:$0xff]
  %v28 = vld [vmem:[%s2 + $0x40] sm:$0xff]
  %v29 = vld [vmem:[%s2 + $0x48] sm:$0xff]
  %v30 = vld [vmem:[%s2 + $0x50] sm:$0xff]
  %v31 = vld [vmem:[%s2 + $0x58] sm:$0xff]
  %v32 = vld [vmem:[%s2 + $0x60] sm:$0xff]
  %v33 = vld [vmem:[%s2 + $0x68] sm:$0xff]
  %v34 = vld [vmem:[%s2 + $0x70] sm:$0xff]
  %v35 = vld [vmem:[%s2 + $0x78] sm:$0xff]
  %v36 = vld [vmem:[%s2 + $0x80] sm:$0xff]
  %v37 = vld [vmem:[%s2 + $0x88] sm:$0xff]
  %v38 = vld [vmem:[%s2 + $0x90] sm:$0xff]
  %v39 = vld [vmem:[%s2 + $0x98] sm:$0xff]
  %v40 = vld [vmem:[%s2 + $0xa0] sm:$0xff]
  %v41 = vld [vmem:[%s2 + $0xa8] sm:$0xff]
  %v42 = vld [vmem:[%s2 + $0xb0] sm:$0xff]
  %v43 = vld [vmem:[%s2 + $0xb8] sm:$0xff]
  %v44 = vld [vmem:[%s2 + $0xc0] sm:$0xff]
  %v45 = vld [vmem:[%s2 + $0xc8] sm:$0xff]
  %v46 = vld [vmem:[%s2 + $0xd0] sm:$0xff]
  %v47 = vld [vmem:[%s2 + $0xd8] sm:$0xff]
  %v48 = vld [vmem:[%s2 + $0xe0] sm:$0xff]
  %v49 = vld [vmem:[%s2 + $0xe8] sm:$0xff]
  %v50 = vld [vmem:[%s2 + $0xf0] sm:$0xff]
  %v51 = vld [vmem:[%s2 + $0xf8] sm:$0xff]
  %v52 = vld [vmem:[%s2 + $0x100] sm:$0xff]
  %v53 = vld [vmem:[%s2 + $0x108] sm:$0xff]
  %v54 = vld [vmem:[%s2 + $0x110] sm:$0xff]
  %v55 = vld [vmem:[%s2 + $0x118] sm:$0xff]
  %v56 = vld [vmem:[%s2 + $0x120] sm:$0xff]
  %v57 = vld [vmem:[%s2 + $0x128] sm:$0xff]
  %v58 = vld [vmem:[%s2 + $0x130] sm:$0xff]
  %v59 = vld [vmem:[%s2 + $0x138] sm:$0xff]
  %v60 = vld [vmem:[%s2 + $0x140] sm:$0xff]
  %v61 = vld [vmem:[%s2 + $0x148] sm:$0xff]
  %v62 = vld [vmem:[%s2 + $0x150] sm:$0xff]
  %v63 = vld [vmem:[%s2 + $0x158] sm:$0xff]
  %v64 = vld [vmem:[%s2 + $0x160] sm:$0xff]
  %v65 = vld [vmem:[%s2 + $0x168] sm:$0xff]
  %v66 = vld [vmem:[%s2 + $0x170] sm:$0xff]
  %v67 = vld [vmem:[%s2 + $0x178] sm:$0xff]
  %v68 = vld [vmem:[%s2 + $0x180] sm:$0xff]
  %v69 = vld [vmem:[%s2 + $0x188] sm:$0xff]
  %v70 = vld [vmem:[%s2 + $0x190] sm:$0xff]
  %v71 = vld [vmem:[%s2 + $0x198] sm:$0xff]
  %v72 = vld [vmem:[%s2 + $0x1a0] sm:$0xff]
  %v73 = vld [vmem:[%s2 + $0x1a8] sm:$0xff]
  %v74 = vld [vmem:[%s2 + $0x1b0] sm:$0xff]
  %v75 = vld [vmem:[%s2 + $0x1b8] sm:$0xff]
  %v76 = vld [vmem:[%s2 + $0x1c0] sm:$0xff]
  %v77 = vld [vmem:[%s2 + $0x1c8] sm:$0xff]
  %v78 = vld [vmem:[%s2 + $0x1d0] sm:$0xff]
  %v79 = vld [vmem:[%s2 + $0x1d8] sm:$0xff]
  %v80 = vld [vmem:[%s2 + $0x1e0] sm:$0xff]
  %v81 = vld [vmem:[%s2 + $0x1e8] sm:$0xff]
  %v82 = vld [vmem:[%s2 + $0x1f0] sm:$0xff]
  %v83 = vld [vmem:[%s2 + $0x1f8] sm:$0xff]
  %v84 = vld [vmem:[%s2 + $0x200] sm:$0xff]
  %v85 = vld [vmem:[%s2 + $0x208] sm:$0xff]
  %v86 = vld [vmem:[%s2 + $0x210] sm:$0xff]
  %v87 = vld [vmem:[%s2 + $0x218] sm:$0xff]
  %v88 = vld [vmem:[%s2 + $0x220] sm:$0xff]
  %v89 = vld [vmem:[%s2 + $0x228] sm:$0xff]
  %v90 = vld [vmem:[%s2 + $0x230] sm:$0xff]
  %v91 = vld [vmem:[%s2 + $0x238] sm:$0xff]
  %vm92 = vcmask 261120
  %v94 = vsel %vm92, %v20, 0
  %v97 = vsel %vm92, %v21, 0
  %v100 = vsel %vm92, %v22, 0
  %v103 = vsel %vm92, %v23, 0
  %v106 = vsel %vm92, %v24, 0
  %v109 = vsel %vm92, %v25, 0
  %v112 = vsel %vm92, %v26, 0
  %v115 = vsel %vm92, %v27, 0
  %v118 = vsel %vm92, %v28, 0
  %v121 = vsel %vm92, %v29, 0
  %v124 = vsel %vm92, %v30, 0
  %v127 = vsel %vm92, %v31, 0
  %v130 = vsel %vm92, %v32, 0
  %v133 = vsel %vm92, %v33, 0
  %v136 = vsel %vm92, %v34, 0
  %v139 = vsel %vm92, %v35, 0
  %v142 = vsel %vm92, %v36, 0
  %v145 = vsel %vm92, %v37, 0
  %v148 = vsel %vm92, %v38, 0
  %v151 = vsel %vm92, %v39, 0
  %v154 = vsel %vm92, %v40, 0
  %v157 = vsel %vm92, %v41, 0
  %v160 = vsel %vm92, %v42, 0
  %v163 = vsel %vm92, %v43, 0
  %v166 = vsel %vm92, %v44, 0
  %v169 = vsel %vm92, %v45, 0
  %v172 = vsel %vm92, %v46, 0
  %v175 = vsel %vm92, %v47, 0
  %v178 = vsel %vm92, %v48, 0
  %v181 = vsel %vm92, %v49, 0
  %v184 = vsel %vm92, %v50, 0
  %v187 = vsel %vm92, %v51, 0
  %v190 = vsel %vm92, %v52, 0
  %v193 = vsel %vm92, %v53, 0
  %v196 = vsel %vm92, %v54, 0
  %v199 = vsel %vm92, %v55, 0
  %v202 = vsel %vm92, %v56, 0
  %v205 = vsel %vm92, %v57, 0
  %v208 = vsel %vm92, %v58, 0
  %v211 = vsel %vm92, %v59, 0
  %v214 = vsel %vm92, %v60, 0
  %v217 = vsel %vm92, %v61, 0
  %v220 = vsel %vm92, %v62, 0
  %v223 = vsel %vm92, %v63, 0
  %v226 = vsel %vm92, %v64, 0
  %v229 = vsel %vm92, %v65, 0
  %v232 = vsel %vm92, %v66, 0
  %v235 = vsel %vm92, %v67, 0
  %v238 = vsel %vm92, %v68, 0
  %v241 = vsel %vm92, %v69, 0
  %v244 = vsel %vm92, %v70, 0
  %v247 = vsel %vm92, %v71, 0
  %v250 = vsel %vm92, %v72, 0
  %v253 = vsel %vm92, %v73, 0
  %v256 = vsel %vm92, %v74, 0
  %v259 = vsel %vm92, %v75, 0
  %v262 = vsel %vm92, %v76, 0
  %v265 = vsel %vm92, %v77, 0
  %v268 = vsel %vm92, %v78, 0
  %v271 = vsel %vm92, %v79, 0
  %v274 = vsel %vm92, %v80, 0
  %v277 = vsel %vm92, %v81, 0
  %v280 = vsel %vm92, %v82, 0
  %v283 = vsel %vm92, %v83, 0
  %v286 = vsel %vm92, %v84, 0
  %v289 = vsel %vm92, %v85, 0
  %v292 = vsel %vm92, %v86, 0
  %v295 = vsel %vm92, %v87, 0
  %v298 = vsel %vm92, %v88, 0
  %v301 = vsel %vm92, %v89, 0
  %v304 = vsel %vm92, %v90, 0
  %v307 = vsel %vm92, %v91, 0
  %309 = vmatpush.msra.mxu0 0.0
  %310 = vmatpush.msra.mxu0 0.0
  %311 = vmatpush.msra.mxu0 0.0
  %312 = vmatpush.msra.mxu0 0.0
  %313 = vmatpush.msra.mxu0 0.0
  %314 = vmatpush.msra.mxu0 0.0
  %315 = vmatpush.msra.mxu0 0.0
  %316 = vmatpush.msra.mxu0 0.0
  %317 = vmatpush.msra.mxu0 0.0
  %318 = vmatpush.msra.mxu0 0.0
  %319 = vmatpush.msra.mxu0 0.0
  %320 = vmatpush.msra.mxu0 0.0
  %321 = vmatpush.msra.mxu0 %v19
  %322 = vmatpush.msra.mxu0 %v18
  %323 = vmatpush.msra.mxu0 %v17
  %324 = vmatpush.msra.mxu0 %v16
  %325 = vmatmul.f32.gmra.mxu0 %v94
  %v326 = vpop.f32.mrf.mxu0
  %v327 = vadd.f32 0.0, %v326
  %328 = vmatmul.f32.gmra.mxu0 %v97
  %v329 = vpop.f32.mrf.mxu0
  %v330 = vadd.f32 0.0, %v329
  %331 = vmatmul.f32.gmra.mxu0 %v100
  %v332 = vpop.f32.mrf.mxu0
  %v333 = vadd.f32 0.0, %v332
  %334 = vmatmul.f32.gmra.mxu0 %v103
  %v335 = vpop.f32.mrf.mxu0
  %v336 = vadd.f32 0.0, %v335
  %337 = vmatmul.f32.gmra.mxu0 %v106
  %v338 = vpop.f32.mrf.mxu0
  %v339 = vadd.f32 0.0, %v338
  %340 = vmatmul.f32.gmra.mxu0 %v109
  %v341 = vpop.f32.mrf.mxu0
  %v342 = vadd.f32 0.0, %v341
  %343 = vmatmul.f32.gmra.mxu0 %v112
  %v344 = vpop.f32.mrf.mxu0
  %v345 = vadd.f32 0.0, %v344
  %346 = vmatmul.f32.gmra.mxu0 %v115
  %v347 = vpop.f32.mrf.mxu0
  %v348 = vadd.f32 0.0, %v347
  %349 = vmatmul.f32.gmra.mxu0 %v118
  %v350 = vpop.f32.mrf.mxu0
  %v351 = vadd.f32 0.0, %v350
  %352 = vmatmul.f32.gmra.mxu0 %v121
  %v353 = vpop.f32.mrf.mxu0
  %v354 = vadd.f32 0.0, %v353
  %355 = vmatmul.f32.gmra.mxu0 %v124
  %v356 = vpop.f32.mrf.mxu0
  %v357 = vadd.f32 0.0, %v356
  %358 = vmatmul.f32.gmra.mxu0 %v127
  %v359 = vpop.f32.mrf.mxu0
  %v360 = vadd.f32 0.0, %v359
  %361 = vmatmul.f32.gmra.mxu0 %v130
  %v362 = vpop.f32.mrf.mxu0
  %v363 = vadd.f32 0.0, %v362
  %364 = vmatmul.f32.gmra.mxu0 %v133
  %v365 = vpop.f32.mrf.mxu0
  %v366 = vadd.f32 0.0, %v365
  %367 = vmatmul.f32.gmra.mxu0 %v136
  %v368 = vpop.f32.mrf.mxu0
  %v369 = vadd.f32 0.0, %v368
  %370 = vmatmul.f32.gmra.mxu0 %v139
  %v371 = vpop.f32.mrf.mxu0
  %v372 = vadd.f32 0.0, %v371
  %373 = vmatmul.f32.gmra.mxu0 %v142
  %v374 = vpop.f32.mrf.mxu0
  %v375 = vadd.f32 0.0, %v374
  %376 = vmatmul.f32.gmra.mxu0 %v145
  %v377 = vpop.f32.mrf.mxu0
  %v378 = vadd.f32 0.0, %v377
  %379 = vmatmul.f32.gmra.mxu0 %v148
  %v380 = vpop.f32.mrf.mxu0
  %v381 = vadd.f32 0.0, %v380
  %382 = vmatmul.f32.gmra.mxu0 %v151
  %v383 = vpop.f32.mrf.mxu0
  %v384 = vadd.f32 0.0, %v383
  %385 = vmatmul.f32.gmra.mxu0 %v154
  %v386 = vpop.f32.mrf.mxu0
  %v387 = vadd.f32 0.0, %v386
  %388 = vmatmul.f32.gmra.mxu0 %v157
  %v389 = vpop.f32.mrf.mxu0
  %v390 = vadd.f32 0.0, %v389
  %391 = vmatmul.f32.gmra.mxu0 %v160
  %v392 = vpop.f32.mrf.mxu0
  %v393 = vadd.f32 0.0, %v392
  %394 = vmatmul.f32.gmra.mxu0 %v163
  %v395 = vpop.f32.mrf.mxu0
  %v396 = vadd.f32 0.0, %v395
  %397 = vmatmul.f32.gmra.mxu0 %v166
  %v398 = vpop.f32.mrf.mxu0
  %v399 = vadd.f32 0.0, %v398
  %400 = vmatmul.f32.gmra.mxu0 %v169
  %v401 = vpop.f32.mrf.mxu0
  %v402 = vadd.f32 0.0, %v401
  %403 = vmatmul.f32.gmra.mxu0 %v172
  %v404 = vpop.f32.mrf.mxu0
  %v405 = vadd.f32 0.0, %v404
  %406 = vmatmul.f32.gmra.mxu0 %v175
  %v407 = vpop.f32.mrf.mxu0
  %v408 = vadd.f32 0.0, %v407
  %409 = vmatmul.f32.gmra.mxu0 %v178
  %v410 = vpop.f32.mrf.mxu0
  %v411 = vadd.f32 0.0, %v410
  %412 = vmatmul.f32.gmra.mxu0 %v181
  %v413 = vpop.f32.mrf.mxu0
  %v414 = vadd.f32 0.0, %v413
  %415 = vmatmul.f32.gmra.mxu0 %v184
  %v416 = vpop.f32.mrf.mxu0
  %v417 = vadd.f32 0.0, %v416
  %418 = vmatmul.f32.gmra.mxu0 %v187
  %v419 = vpop.f32.mrf.mxu0
  %v420 = vadd.f32 0.0, %v419
  %421 = vmatmul.f32.gmra.mxu0 %v190
  %v422 = vpop.f32.mrf.mxu0
  %v423 = vadd.f32 0.0, %v422
  %424 = vmatmul.f32.gmra.mxu0 %v193
  %v425 = vpop.f32.mrf.mxu0
  %v426 = vadd.f32 0.0, %v425
  %427 = vmatmul.f32.gmra.mxu0 %v196
  %v428 = vpop.f32.mrf.mxu0
  %v429 = vadd.f32 0.0, %v428
  %430 = vmatmul.f32.gmra.mxu0 %v199
  %v431 = vpop.f32.mrf.mxu0
  %v432 = vadd.f32 0.0, %v431
  %433 = vmatmul.f32.gmra.mxu0 %v202
  %v434 = vpop.f32.mrf.mxu0
  %v435 = vadd.f32 0.0, %v434
  %436 = vmatmul.f32.gmra.mxu0 %v205
  %v437 = vpop.f32.mrf.mxu0
  %v438 = vadd.f32 0.0, %v437
  %439 = vmatmul.f32.gmra.mxu0 %v208
  %v440 = vpop.f32.mrf.mxu0
  %v441 = vadd.f32 0.0, %v440
  %442 = vmatmul.f32.gmra.mxu0 %v211
  %v443 = vpop.f32.mrf.mxu0
  %v444 = vadd.f32 0.0, %v443
  %445 = vmatmul.f32.gmra.mxu0 %v214
  %v446 = vpop.f32.mrf.mxu0
  %v447 = vadd.f32 0.0, %v446
  %448 = vmatmul.f32.gmra.mxu0 %v217
  %v449 = vpop.f32.mrf.mxu0
  %v450 = vadd.f32 0.0, %v449
  %451 = vmatmul.f32.gmra.mxu0 %v220
  %v452 = vpop.f32.mrf.mxu0
  %v453 = vadd.f32 0.0, %v452
  %454 = vmatmul.f32.gmra.mxu0 %v223
  %v455 = vpop.f32.mrf.mxu0
  %v456 = vadd.f32 0.0, %v455
  %457 = vmatmul.f32.gmra.mxu0 %v226
  %v458 = vpop.f32.mrf.mxu0
  %v459 = vadd.f32 0.0, %v458
  %460 = vmatmul.f32.gmra.mxu0 %v229
  %v461 = vpop.f32.mrf.mxu0
  %v462 = vadd.f32 0.0, %v461
  %463 = vmatmul.f32.gmra.mxu0 %v232
  %v464 = vpop.f32.mrf.mxu0
  %v465 = vadd.f32 0.0, %v464
  %466 = vmatmul.f32.gmra.mxu0 %v235
  %v467 = vpop.f32.mrf.mxu0
  %v468 = vadd.f32 0.0, %v467
  %469 = vmatmul.f32.gmra.mxu0 %v238
  %v470 = vpop.f32.mrf.mxu0
  %v471 = vadd.f32 0.0, %v470
  %472 = vmatmul.f32.gmra.mxu0 %v241
  %v473 = vpop.f32.mrf.mxu0
  %v474 = vadd.f32 0.0, %v473
  %475 = vmatmul.f32.gmra.mxu0 %v244
  %v476 = vpop.f32.mrf.mxu0
  %v477 = vadd.f32 0.0, %v476
  %478 = vmatmul.f32.gmra.mxu0 %v247
  %v479 = vpop.f32.mrf.mxu0
  %v480 = vadd.f32 0.0, %v479
  %481 = vmatmul.f32.gmra.mxu0 %v250
  %v482 = vpop.f32.mrf.mxu0
  %v483 = vadd.f32 0.0, %v482
  %484 = vmatmul.f32.gmra.mxu0 %v253
  %v485 = vpop.f32.mrf.mxu0
  %v486 = vadd.f32 0.0, %v485
  %487 = vmatmul.f32.gmra.mxu0 %v256
  %v488 = vpop.f32.mrf.mxu0
  %v489 = vadd.f32 0.0, %v488
  %490 = vmatmul.f32.gmra.mxu0 %v259
  %v491 = vpop.f32.mrf.mxu0
  %v492 = vadd.f32 0.0, %v491
  %493 = vmatmul.f32.gmra.mxu0 %v262
  %v494 = vpop.f32.mrf.mxu0
  %v495 = vadd.f32 0.0, %v494
  %496 = vmatmul.f32.gmra.mxu0 %v265
  %v497 = vpop.f32.mrf.mxu0
  %v498 = vadd.f32 0.0, %v497
  %499 = vmatmul.f32.gmra.mxu0 %v268
  %v500 = vpop.f32.mrf.mxu0
  %v501 = vadd.f32 0.0, %v500
  %502 = vmatmul.f32.gmra.mxu0 %v271
  %v503 = vpop.f32.mrf.mxu0
  %v504 = vadd.f32 0.0, %v503
  %505 = vmatmul.f32.gmra.mxu0 %v274
  %v506 = vpop.f32.mrf.mxu0
  %v507 = vadd.f32 0.0, %v506
  %508 = vmatmul.f32.gmra.mxu0 %v277
  %v509 = vpop.f32.mrf.mxu0
  %v510 = vadd.f32 0.0, %v509
  %511 = vmatmul.f32.gmra.mxu0 %v280
  %v512 = vpop.f32.mrf.mxu0
  %v513 = vadd.f32 0.0, %v512
  %514 = vmatmul.f32.gmra.mxu0 %v283
  %v515 = vpop.f32.mrf.mxu0
  %v516 = vadd.f32 0.0, %v515
  %517 = vmatmul.f32.gmra.mxu0 %v286
  %v518 = vpop.f32.mrf.mxu0
  %v519 = vadd.f32 0.0, %v518
  %520 = vmatmul.f32.gmra.mxu0 %v289
  %v521 = vpop.f32.mrf.mxu0
  %v522 = vadd.f32 0.0, %v521
  %523 = vmatmul.f32.gmra.mxu0 %v292
  %v524 = vpop.f32.mrf.mxu0
  %v525 = vadd.f32 0.0, %v524
  %526 = vmatmul.f32.gmra.mxu0 %v295
  %v527 = vpop.f32.mrf.mxu0
  %v528 = vadd.f32 0.0, %v527
  %529 = vmatmul.f32.gmra.mxu0 %v298
  %v530 = vpop.f32.mrf.mxu0
  %v531 = vadd.f32 0.0, %v530
  %532 = vmatmul.f32.gmra.mxu0 %v301
  %v533 = vpop.f32.mrf.mxu0
  %v534 = vadd.f32 0.0, %v533
  %535 = vmatmul.f32.gmra.mxu0 %v304
  %v536 = vpop.f32.mrf.mxu0
  %v537 = vadd.f32 0.0, %v536
  %538 = vmatmul.f32.gmra.mxu0 %v307
  %v539 = vpop.f32.mrf.mxu0
  %v540 = vadd.f32 0.0, %v539
  %541 = vdwg.mxu0
  %v543 = vsel %vm92, %v14, 0
  %v546 = vsel %vm92, %v15, 0
  %548 = vmatpush.msra.mxu0 0.0
  %549 = vmatpush.msra.mxu0 0.0
  %550 = vmatpush.msra.mxu0 0.0
  %551 = vmatpush.msra.mxu0 0.0
  %552 = vmatpush.msra.mxu0 0.0
  %553 = vmatpush.msra.mxu0 0.0
  %554 = vmatpush.msra.mxu0 0.0
  %555 = vmatpush.msra.mxu0 0.0
  %556 = vmatpush.msra.mxu0 0.0
  %557 = vmatpush.msra.mxu0 0.0
  %558 = vmatpush.msra.mxu0 0.0
  %559 = vmatpush.msra.mxu0 0.0
  %560 = vmatpush.msra.mxu0 %v336
  %561 = vmatpush.msra.mxu0 %v333
  %562 = vmatpush.msra.mxu0 %v330
  %563 = vmatpush.msra.mxu0 %v327
  %564 = vmatmul.f32.gmra.mxu0 %v543
  %v565 = vpop.f32.mrf.mxu0
  %v566 = vadd.f32 0.0, %v565
  %567 = vmatmul.f32.gmra.mxu0 %v546
  %v568 = vpop.f32.mrf.mxu0
  %v569 = vadd.f32 0.0, %v568
  %570 = vdwg.mxu0
  %vm571 = vcmask 130048
  %572 = vst.msk [vmem:[%s3] sm:$0xff] %vm571, %v566
  %573 = vst.msk [vmem:[%s3 + $0x8] sm:$0xff] %vm571, %v569
  %574 = vmatpush.msra.mxu0 0.0
  %575 = vmatpush.msra.mxu0 0.0
  %576 = vmatpush.msra.mxu0 0.0
  %577 = vmatpush.msra.mxu0 0.0
  %578 = vmatpush.msra.mxu0 0.0
  %579 = vmatpush.msra.mxu0 0.0
  %580 = vmatpush.msra.mxu0 0.0
  %581 = vmatpush.msra.mxu0 0.0
  %582 = vmatpush.msra.mxu0 0.0
  %583 = vmatpush.msra.mxu0 0.0
  %584 = vmatpush.msra.mxu0 0.0
  %585 = vmatpush.msra.mxu0 0.0
  %586 = vmatpush.msra.mxu0 %v348
  %587 = vmatpush.msra.mxu0 %v345
  %588 = vmatpush.msra.mxu0 %v342
  %589 = vmatpush.msra.mxu0 %v339
  %590 = vmatmul.f32.gmra.mxu0 %v543
  %v591 = vpop.f32.mrf.mxu0
  %v592 = vadd.f32 0.0, %v591
  %593 = vmatmul.f32.gmra.mxu0 %v546
  %v594 = vpop.f32.mrf.mxu0
  %v595 = vadd.f32 0.0, %v594
  %596 = vdwg.mxu0
  %s597 = scalar_lea.vmem %s3, 16
  %598 = vst.msk [vmem:[%s597] sm:$0xff] %vm571, %v592
  %599 = vst.msk [vmem:[%s597 + $0x8] sm:$0xff] %vm571, %v595
  %600 = vmatpush.msra.mxu0 0.0
  %601 = vmatpush.msra.mxu0 0.0
  %602 = vmatpush.msra.mxu0 0.0
  %603 = vmatpush.msra.mxu0 0.0
  %604 = vmatpush.msra.mxu0 0.0
  %605 = vmatpush.msra.mxu0 0.0
  %606 = vmatpush.msra.mxu0 0.0
  %607 = vmatpush.msra.mxu0 0.0
  %608 = vmatpush.msra.mxu0 0.0
  %609 = vmatpush.msra.mxu0 0.0
  %610 = vmatpush.msra.mxu0 0.0
  %611 = vmatpush.msra.mxu0 0.0
  %612 = vmatpush.msra.mxu0 %v360
  %613 = vmatpush.msra.mxu0 %v357
  %614 = vmatpush.msra.mxu0 %v354
  %615 = vmatpush.msra.mxu0 %v351
  %616 = vmatmul.f32.gmra.mxu0 %v543
  %v617 = vpop.f32.mrf.mxu0
  %v618 = vadd.f32 0.0, %v617
  %619 = vmatmul.f32.gmra.mxu0 %v546
  %v620 = vpop.f32.mrf.mxu0
  %v621 = vadd.f32 0.0, %v620
  %622 = vdwg.mxu0
  %s623 = scalar_lea.vmem %s3, 32
  %624 = vst.msk [vmem:[%s623] sm:$0xff] %vm571, %v618
  %625 = vst.msk [vmem:[%s623 + $0x8] sm:$0xff] %vm571, %v621
  %626 = vmatpush.msra.mxu0 0.0
  %627 = vmatpush.msra.mxu0 0.0
  %628 = vmatpush.msra.mxu0 0.0
  %629 = vmatpush.msra.mxu0 0.0
  %630 = vmatpush.msra.mxu0 0.0
  %631 = vmatpush.msra.mxu0 0.0
  %632 = vmatpush.msra.mxu0 0.0
  %633 = vmatpush.msra.mxu0 0.0
  %634 = vmatpush.msra.mxu0 0.0
  %635 = vmatpush.msra.mxu0 0.0
  %636 = vmatpush.msra.mxu0 0.0
  %637 = vmatpush.msra.mxu0 0.0
  %638 = vmatpush.msra.mxu0 %v372
  %639 = vmatpush.msra.mxu0 %v369
  %640 = vmatpush.msra.mxu0 %v366
  %641 = vmatpush.msra.mxu0 %v363
  %642 = vmatmul.f32.gmra.mxu0 %v543
  %v643 = vpop.f32.mrf.mxu0
  %v644 = vadd.f32 0.0, %v643
  %645 = vmatmul.f32.gmra.mxu0 %v546
  %v646 = vpop.f32.mrf.mxu0
  %v647 = vadd.f32 0.0, %v646
  %648 = vdwg.mxu0
  %s649 = scalar_lea.vmem %s3, 48
  %650 = vst.msk [vmem:[%s649] sm:$0xff] %vm571, %v644
  %651 = vst.msk [vmem:[%s649 + $0x8] sm:$0xff] %vm571, %v647
  %652 = vmatpush.msra.mxu0 0.0
  %653 = vmatpush.msra.mxu0 0.0
  %654 = vmatpush.msra.mxu0 0.0
  %655 = vmatpush.msra.mxu0 0.0
  %656 = vmatpush.msra.mxu0 0.0
  %657 = vmatpush.msra.mxu0 0.0
  %658 = vmatpush.msra.mxu0 0.0
  %659 = vmatpush.msra.mxu0 0.0
  %660 = vmatpush.msra.mxu0 0.0
  %661 = vmatpush.msra.mxu0 0.0
  %662 = vmatpush.msra.mxu0 0.0
  %663 = vmatpush.msra.mxu0 0.0
  %664 = vmatpush.msra.mxu0 %v384
  %665 = vmatpush.msra.mxu0 %v381
  %666 = vmatpush.msra.mxu0 %v378
  %667 = vmatpush.msra.mxu0 %v375
  %668 = vmatmul.f32.gmra.mxu0 %v543
  %v669 = vpop.f32.mrf.mxu0
  %v670 = vadd.f32 0.0, %v669
  %671 = vmatmul.f32.gmra.mxu0 %v546
  %v672 = vpop.f32.mrf.mxu0
  %v673 = vadd.f32 0.0, %v672
  %674 = vdwg.mxu0
  %s675 = scalar_lea.vmem %s3, 64
  %676 = vst.msk [vmem:[%s675] sm:$0xff] %vm571, %v670
  %677 = vst.msk [vmem:[%s675 + $0x8] sm:$0xff] %vm571, %v673
  %678 = vmatpush.msra.mxu0 0.0
  %679 = vmatpush.msra.mxu0 0.0
  %680 = vmatpush.msra.mxu0 0.0
  %681 = vmatpush.msra.mxu0 0.0
  %682 = vmatpush.msra.mxu0 0.0
  %683 = vmatpush.msra.mxu0 0.0
  %684 = vmatpush.msra.mxu0 0.0
  %685 = vmatpush.msra.mxu0 0.0
  %686 = vmatpush.msra.mxu0 0.0
  %687 = vmatpush.msra.mxu0 0.0
  %688 = vmatpush.msra.mxu0 0.0
  %689 = vmatpush.msra.mxu0 0.0
  %690 = vmatpush.msra.mxu0 %v396
  %691 = vmatpush.msra.mxu0 %v393
  %692 = vmatpush.msra.mxu0 %v390
  %693 = vmatpush.msra.mxu0 %v387
  %694 = vmatmul.f32.gmra.mxu0 %v543
  %v695 = vpop.f32.mrf.mxu0
  %v696 = vadd.f32 0.0, %v695
  %697 = vmatmul.f32.gmra.mxu0 %v546
  %v698 = vpop.f32.mrf.mxu0
  %v699 = vadd.f32 0.0, %v698
  %700 = vdwg.mxu0
  %s701 = scalar_lea.vmem %s3, 80
  %702 = vst.msk [vmem:[%s701] sm:$0xff] %vm571, %v696
  %703 = vst.msk [vmem:[%s701 + $0x8] sm:$0xff] %vm571, %v699
  %704 = vmatpush.msra.mxu0 0.0
  %705 = vmatpush.msra.mxu0 0.0
  %706 = vmatpush.msra.mxu0 0.0
  %707 = vmatpush.msra.mxu0 0.0
  %708 = vmatpush.msra.mxu0 0.0
  %709 = vmatpush.msra.mxu0 0.0
  %710 = vmatpush.msra.mxu0 0.0
  %711 = vmatpush.msra.mxu0 0.0
  %712 = vmatpush.msra.mxu0 0.0
  %713 = vmatpush.msra.mxu0 0.0
  %714 = vmatpush.msra.mxu0 0.0
  %715 = vmatpush.msra.mxu0 0.0
  %716 = vmatpush.msra.mxu0 %v408
  %717 = vmatpush.msra.mxu0 %v405
  %718 = vmatpush.msra.mxu0 %v402
  %719 = vmatpush.msra.mxu0 %v399
  %720 = vmatmul.f32.gmra.mxu0 %v543
  %v721 = vpop.f32.mrf.mxu0
  %v722 = vadd.f32 0.0, %v721
  %723 = vmatmul.f32.gmra.mxu0 %v546
  %v724 = vpop.f32.mrf.mxu0
  %v725 = vadd.f32 0.0, %v724
  %726 = vdwg.mxu0
  %s727 = scalar_lea.vmem %s3, 96
  %728 = vst.msk [vmem:[%s727] sm:$0xff] %vm571, %v722
  %729 = vst.msk [vmem:[%s727 + $0x8] sm:$0xff] %vm571, %v725
  %730 = vmatpush.msra.mxu0 0.0
  %731 = vmatpush.msra.mxu0 0.0
  %732 = vmatpush.msra.mxu0 0.0
  %733 = vmatpush.msra.mxu0 0.0
  %734 = vmatpush.msra.mxu0 0.0
  %735 = vmatpush.msra.mxu0 0.0
  %736 = vmatpush.msra.mxu0 0.0
  %737 = vmatpush.msra.mxu0 0.0
  %738 = vmatpush.msra.mxu0 0.0
  %739 = vmatpush.msra.mxu0 0.0
  %740 = vmatpush.msra.mxu0 0.0
  %741 = vmatpush.msra.mxu0 0.0
  %742 = vmatpush.msra.mxu0 %v420
  %743 = vmatpush.msra.mxu0 %v417
  %744 = vmatpush.msra.mxu0 %v414
  %745 = vmatpush.msra.mxu0 %v411
  %746 = vmatmul.f32.gmra.mxu0 %v543
  %v747 = vpop.f32.mrf.mxu0
  %v748 = vadd.f32 0.0, %v747
  %749 = vmatmul.f32.gmra.mxu0 %v546
  %v750 = vpop.f32.mrf.mxu0
  %v751 = vadd.f32 0.0, %v750
  %752 = vdwg.mxu0
  %s753 = scalar_lea.vmem %s3, 112
  %754 = vst.msk [vmem:[%s753] sm:$0xff] %vm571, %v748
  %755 = vst.msk [vmem:[%s753 + $0x8] sm:$0xff] %vm571, %v751
  %756 = vmatpush.msra.mxu0 0.0
  %757 = vmatpush.msra.mxu0 0.0
  %758 = vmatpush.msra.mxu0 0.0
  %759 = vmatpush.msra.mxu0 0.0
  %760 = vmatpush.msra.mxu0 0.0
  %761 = vmatpush.msra.mxu0 0.0
  %762 = vmatpush.msra.mxu0 0.0
  %763 = vmatpush.msra.mxu0 0.0
  %764 = vmatpush.msra.mxu0 0.0
  %765 = vmatpush.msra.mxu0 0.0
  %766 = vmatpush.msra.mxu0 0.0
  %767 = vmatpush.msra.mxu0 0.0
  %768 = vmatpush.msra.mxu0 %v432
  %769 = vmatpush.msra.mxu0 %v429
  %770 = vmatpush.msra.mxu0 %v426
  %771 = vmatpush.msra.mxu0 %v423
  %772 = vmatmul.f32.gmra.mxu0 %v543
  %v773 = vpop.f32.mrf.mxu0
  %v774 = vadd.f32 0.0, %v773
  %775 = vmatmul.f32.gmra.mxu0 %v546
  %v776 = vpop.f32.mrf.mxu0
  %v777 = vadd.f32 0.0, %v776
  %778 = vdwg.mxu0
  %s779 = scalar_lea.vmem %s3, 128
  %780 = vst.msk [vmem:[%s779] sm:$0xff] %vm571, %v774
  %781 = vst.msk [vmem:[%s779 + $0x8] sm:$0xff] %vm571, %v777
  %782 = vmatpush.msra.mxu0 0.0
  %783 = vmatpush.msra.mxu0 0.0
  %784 = vmatpush.msra.mxu0 0.0
  %785 = vmatpush.msra.mxu0 0.0
  %786 = vmatpush.msra.mxu0 0.0
  %787 = vmatpush.msra.mxu0 0.0
  %788 = vmatpush.msra.mxu0 0.0
  %789 = vmatpush.msra.mxu0 0.0
  %790 = vmatpush.msra.mxu0 0.0
  %791 = vmatpush.msra.mxu0 0.0
  %792 = vmatpush.msra.mxu0 0.0
  %793 = vmatpush.msra.mxu0 0.0
  %794 = vmatpush.msra.mxu0 %v444
  %795 = vmatpush.msra.mxu0 %v441
  %796 = vmatpush.msra.mxu0 %v438
  %797 = vmatpush.msra.mxu0 %v435
  %798 = vmatmul.f32.gmra.mxu0 %v543
  %v799 = vpop.f32.mrf.mxu0
  %v800 = vadd.f32 0.0, %v799
  %801 = vmatmul.f32.gmra.mxu0 %v546
  %v802 = vpop.f32.mrf.mxu0
  %v803 = vadd.f32 0.0, %v802
  %804 = vdwg.mxu0
  %s805 = scalar_lea.vmem %s3, 144
  %806 = vst.msk [vmem:[%s805] sm:$0xff] %vm571, %v800
  %807 = vst.msk [vmem:[%s805 + $0x8] sm:$0xff] %vm571, %v803
  %808 = vmatpush.msra.mxu0 0.0
  %809 = vmatpush.msra.mxu0 0.0
  %810 = vmatpush.msra.mxu0 0.0
  %811 = vmatpush.msra.mxu0 0.0
  %812 = vmatpush.msra.mxu0 0.0
  %813 = vmatpush.msra.mxu0 0.0
  %814 = vmatpush.msra.mxu0 0.0
  %815 = vmatpush.msra.mxu0 0.0
  %816 = vmatpush.msra.mxu0 0.0
  %817 = vmatpush.msra.mxu0 0.0
  %818 = vmatpush.msra.mxu0 0.0
  %819 = vmatpush.msra.mxu0 0.0
  %820 = vmatpush.msra.mxu0 %v456
  %821 = vmatpush.msra.mxu0 %v453
  %822 = vmatpush.msra.mxu0 %v450
  %823 = vmatpush.msra.mxu0 %v447
  %824 = vmatmul.f32.gmra.mxu0 %v543
  %v825 = vpop.f32.mrf.mxu0
  %v826 = vadd.f32 0.0, %v825
  %827 = vmatmul.f32.gmra.mxu0 %v546
  %v828 = vpop.f32.mrf.mxu0
  %v829 = vadd.f32 0.0, %v828
  %830 = vdwg.mxu0
  %s831 = scalar_lea.vmem %s3, 160
  %832 = vst.msk [vmem:[%s831] sm:$0xff] %vm571, %v826
  %833 = vst.msk [vmem:[%s831 + $0x8] sm:$0xff] %vm571, %v829
  %834 = vmatpush.msra.mxu0 0.0
  %835 = vmatpush.msra.mxu0 0.0
  %836 = vmatpush.msra.mxu0 0.0
  %837 = vmatpush.msra.mxu0 0.0
  %838 = vmatpush.msra.mxu0 0.0
  %839 = vmatpush.msra.mxu0 0.0
  %840 = vmatpush.msra.mxu0 0.0
  %841 = vmatpush.msra.mxu0 0.0
  %842 = vmatpush.msra.mxu0 0.0
  %843 = vmatpush.msra.mxu0 0.0
  %844 = vmatpush.msra.mxu0 0.0
  %845 = vmatpush.msra.mxu0 0.0
  %846 = vmatpush.msra.mxu0 %v468
  %847 = vmatpush.msra.mxu0 %v465
  %848 = vmatpush.msra.mxu0 %v462
  %849 = vmatpush.msra.mxu0 %v459
  %850 = vmatmul.f32.gmra.mxu0 %v543
  %v851 = vpop.f32.mrf.mxu0
  %v852 = vadd.f32 0.0, %v851
  %853 = vmatmul.f32.gmra.mxu0 %v546
  %v854 = vpop.f32.mrf.mxu0
  %v855 = vadd.f32 0.0, %v854
  %856 = vdwg.mxu0
  %s857 = scalar_lea.vmem %s3, 176
  %858 = vst.msk [vmem:[%s857] sm:$0xff] %vm571, %v852
  %859 = vst.msk [vmem:[%s857 + $0x8] sm:$0xff] %vm571, %v855
  %860 = vmatpush.msra.mxu0 0.0
  %861 = vmatpush.msra.mxu0 0.0
  %862 = vmatpush.msra.mxu0 0.0
  %863 = vmatpush.msra.mxu0 0.0
  %864 = vmatpush.msra.mxu0 0.0
  %865 = vmatpush.msra.mxu0 0.0
  %866 = vmatpush.msra.mxu0 0.0
  %867 = vmatpush.msra.mxu0 0.0
  %868 = vmatpush.msra.mxu0 0.0
  %869 = vmatpush.msra.mxu0 0.0
  %870 = vmatpush.msra.mxu0 0.0
  %871 = vmatpush.msra.mxu0 0.0
  %872 = vmatpush.msra.mxu0 %v480
  %873 = vmatpush.msra.mxu0 %v477
  %874 = vmatpush.msra.mxu0 %v474
  %875 = vmatpush.msra.mxu0 %v471
  %876 = vmatmul.f32.gmra.mxu0 %v543
  %v877 = vpop.f32.mrf.mxu0
  %v878 = vadd.f32 0.0, %v877
  %879 = vmatmul.f32.gmra.mxu0 %v546
  %v880 = vpop.f32.mrf.mxu0
  %v881 = vadd.f32 0.0, %v880
  %882 = vdwg.mxu0
  %s883 = scalar_lea.vmem %s3, 192
  %884 = vst.msk [vmem:[%s883] sm:$0xff] %vm571, %v878
  %885 = vst.msk [vmem:[%s883 + $0x8] sm:$0xff] %vm571, %v881
  %886 = vmatpush.msra.mxu0 0.0
  %887 = vmatpush.msra.mxu0 0.0
  %888 = vmatpush.msra.mxu0 0.0
  %889 = vmatpush.msra.mxu0 0.0
  %890 = vmatpush.msra.mxu0 0.0
  %891 = vmatpush.msra.mxu0 0.0
  %892 = vmatpush.msra.mxu0 0.0
  %893 = vmatpush.msra.mxu0 0.0
  %894 = vmatpush.msra.mxu0 0.0
  %895 = vmatpush.msra.mxu0 0.0
  %896 = vmatpush.msra.mxu0 0.0
  %897 = vmatpush.msra.mxu0 0.0
  %898 = vmatpush.msra.mxu0 %v492
  %899 = vmatpush.msra.mxu0 %v489
  %900 = vmatpush.msra.mxu0 %v486
  %901 = vmatpush.msra.mxu0 %v483
  %902 = vmatmul.f32.gmra.mxu0 %v543
  %v903 = vpop.f32.mrf.mxu0
  %v904 = vadd.f32 0.0, %v903
  %905 = vmatmul.f32.gmra.mxu0 %v546
  %v906 = vpop.f32.mrf.mxu0
  %v907 = vadd.f32 0.0, %v906
  %908 = vdwg.mxu0
  %s909 = scalar_lea.vmem %s3, 208
  %910 = vst.msk [vmem:[%s909] sm:$0xff] %vm571, %v904
  %911 = vst.msk [vmem:[%s909 + $0x8] sm:$0xff] %vm571, %v907
  %912 = vmatpush.msra.mxu0 0.0
  %913 = vmatpush.msra.mxu0 0.0
  %914 = vmatpush.msra.mxu0 0.0
  %915 = vmatpush.msra.mxu0 0.0
  %916 = vmatpush.msra.mxu0 0.0
  %917 = vmatpush.msra.mxu0 0.0
  %918 = vmatpush.msra.mxu0 0.0
  %919 = vmatpush.msra.mxu0 0.0
  %920 = vmatpush.msra.mxu0 0.0
  %921 = vmatpush.msra.mxu0 0.0
  %922 = vmatpush.msra.mxu0 0.0
  %923 = vmatpush.msra.mxu0 0.0
  %924 = vmatpush.msra.mxu0 %v504
  %925 = vmatpush.msra.mxu0 %v501
  %926 = vmatpush.msra.mxu0 %v498
  %927 = vmatpush.msra.mxu0 %v495
  %928 = vmatmul.f32.gmra.mxu0 %v543
  %v929 = vpop.f32.mrf.mxu0
  %v930 = vadd.f32 0.0, %v929
  %931 = vmatmul.f32.gmra.mxu0 %v546
  %v932 = vpop.f32.mrf.mxu0
  %v933 = vadd.f32 0.0, %v932
  %934 = vdwg.mxu0
  %s935 = scalar_lea.vmem %s3, 224
  %936 = vst.msk [vmem:[%s935] sm:$0xff] %vm571, %v930
  %937 = vst.msk [vmem:[%s935 + $0x8] sm:$0xff] %vm571, %v933
  %938 = vmatpush.msra.mxu0 0.0
  %939 = vmatpush.msra.mxu0 0.0
  %940 = vmatpush.msra.mxu0 0.0
  %941 = vmatpush.msra.mxu0 0.0
  %942 = vmatpush.msra.mxu0 0.0
  %943 = vmatpush.msra.mxu0 0.0
  %944 = vmatpush.msra.mxu0 0.0
  %945 = vmatpush.msra.mxu0 0.0
  %946 = vmatpush.msra.mxu0 0.0
  %947 = vmatpush.msra.mxu0 0.0
  %948 = vmatpush.msra.mxu0 0.0
  %949 = vmatpush.msra.mxu0 0.0
  %950 = vmatpush.msra.mxu0 %v516
  %951 = vmatpush.msra.mxu0 %v513
  %952 = vmatpush.msra.mxu0 %v510
  %953 = vmatpush.msra.mxu0 %v507
  %954 = vmatmul.f32.gmra.mxu0 %v543
  %v955 = vpop.f32.mrf.mxu0
  %v956 = vadd.f32 0.0, %v955
  %957 = vmatmul.f32.gmra.mxu0 %v546
  %v958 = vpop.f32.mrf.mxu0
  %v959 = vadd.f32 0.0, %v958
  %960 = vdwg.mxu0
  %s961 = scalar_lea.vmem %s3, 240
  %962 = vst.msk [vmem:[%s961] sm:$0xff] %vm571, %v956
  %963 = vst.msk [vmem:[%s961 + $0x8] sm:$0xff] %vm571, %v959
  %964 = vmatpush.msra.mxu0 0.0
  %965 = vmatpush.msra.mxu0 0.0
  %966 = vmatpush.msra.mxu0 0.0
  %967 = vmatpush.msra.mxu0 0.0
  %968 = vmatpush.msra.mxu0 0.0
  %969 = vmatpush.msra.mxu0 0.0
  %970 = vmatpush.msra.mxu0 0.0
  %971 = vmatpush.msra.mxu0 0.0
  %972 = vmatpush.msra.mxu0 0.0
  %973 = vmatpush.msra.mxu0 0.0
  %974 = vmatpush.msra.mxu0 0.0
  %975 = vmatpush.msra.mxu0 0.0
  %976 = vmatpush.msra.mxu0 %v528
  %977 = vmatpush.msra.mxu0 %v525
  %978 = vmatpush.msra.mxu0 %v522
  %979 = vmatpush.msra.mxu0 %v519
  %980 = vmatmul.f32.gmra.mxu0 %v543
  %v981 = vpop.f32.mrf.mxu0
  %v982 = vadd.f32 0.0, %v981
  %983 = vmatmul.f32.gmra.mxu0 %v546
  %v984 = vpop.f32.mrf.mxu0
  %v985 = vadd.f32 0.0, %v984
  %986 = vdwg.mxu0
  %s987 = scalar_lea.vmem %s3, 256
  %988 = vst.msk [vmem:[%s987] sm:$0xff] %vm571, %v982
  %989 = vst.msk [vmem:[%s987 + $0x8] sm:$0xff] %vm571, %v985
  %990 = vmatpush.msra.mxu0 0.0
  %991 = vmatpush.msra.mxu0 0.0
  %992 = vmatpush.msra.mxu0 0.0
  %993 = vmatpush.msra.mxu0 0.0
  %994 = vmatpush.msra.mxu0 0.0
  %995 = vmatpush.msra.mxu0 0.0
  %996 = vmatpush.msra.mxu0 0.0
  %997 = vmatpush.msra.mxu0 0.0
  %998 = vmatpush.msra.mxu0 0.0
  %999 = vmatpush.msra.mxu0 0.0
  %1000 = vmatpush.msra.mxu0 0.0
  %1001 = vmatpush.msra.mxu0 0.0
  %1002 = vmatpush.msra.mxu0 %v540
  %1003 = vmatpush.msra.mxu0 %v537
  %1004 = vmatpush.msra.mxu0 %v534
  %1005 = vmatpush.msra.mxu0 %v531
  %1006 = vmatmul.f32.gmra.mxu0 %v543
  %v1007 = vpop.f32.mrf.mxu0
  %v1008 = vadd.f32 0.0, %v1007
  %1009 = vmatmul.f32.gmra.mxu0 %v546
  %v1010 = vpop.f32.mrf.mxu0
  %v1011 = vadd.f32 0.0, %v1010
  %1012 = vdwg.mxu0
  %s1013 = scalar_lea.vmem %s3, 272
  %1014 = vst.msk [vmem:[%s1013] sm:$0xff] %vm571, %v1008
  %1015 = vst.msk [vmem:[%s1013 + $0x8] sm:$0xff] %vm571, %v1011
  // Predicated region
  $region14: #{_lambda_.5} parent=0 // pred_check
    _
  $region15: #{_lambda_.5} parent=0 // pred_check_branch
    %1017 = sbr.rel (0) target = $region17
  $region16: #{_lambda_.5} parent=0 // pred_region
    _
  $region17: #{_lambda_.5} parent=0 // pred_fallthru
    _
  // Predicated region
  $region18: #{_lambda_.5} parent=0 // pred_check
    _
  $region19: #{_lambda_.5} parent=0 // pred_check_branch
    %1019 = sbr.rel (0) target = $region21
  $region20: #{_lambda_.5} parent=0 // pred_region
    _
  $region21: #{_lambda_.5} parent=0 // pred_fallthru
    _

// kernel: _lambda_.6
$region0: #{_lambda_.6}
  #allocation0 [shape = 'u32[]', space=smem, size = 0x4, offset = 0x4, fixed_abs, tag = 'smem constant byte address 0x4 - core index']
  #allocation1 [shape = 'u32[72,128]{1,0:T(1,128)}', space=vmem, size = 0x9000, scoped, tag = 'internal scratch']
  %s0 = inlined_call_operand.vmem [shape: f32[18,16,16], index: 0, kind: input, shape index: {}]
  %s1 = inlined_call_operand.vmem [shape: f32[18,16,16], index: 1, kind: input, shape index: {}]
  %s2 = inlined_call_operand.vmem [shape: f32[18,16,16], index: 2, kind: input, shape index: {}]
  %s3 = inlined_call_operand.vmem [shape: f32[18,16,16], index: 3, kind: input, shape index: {}]
  %s4 = inlined_call_operand.vmem [shape: f32[1,8,128], index: 4, kind: output, shape index: {0}]
  %s5 = inlined_call_operand.vmem [shape: f32[1,8,128], index: 5, kind: output, shape index: {1}]
  %s6 = inlined_call_operand.vmem [shape: f32[1,8,128], index: 6, kind: output, shape index: {2}]
  %s7 = inlined_call_operand.vmem [shape: f32[1,8,128], index: 7, kind: output, shape index: {3}]
  %8 = xla_tuple %s4, %s5, %s6, %s7
  %s9 = sld [smem:[#allocation0]]
  $region54: #{_lambda_.6} parent=0
    _
  %s11 = ssub.s32 1, %s9
  %s12 = scalar_select 0, %s11, %s9
  // Predicated region
  $region2: #{_lambda_.6} parent=0 // pred_check
    _
  $region3: #{_lambda_.6} parent=0 // pred_check_branch
    %14 = sbr.rel (0) target = $region5
  $region4: #{_lambda_.6} parent=0 // pred_region
    %s15 = sadd.s32 0, 0
    %s16 = smul.u32 18, %s15
    %p17 = scmp.lt.s32.totalorder %s16, 17
    %s18 = scalar_select %p17, %s16, 17
    %s19 = smul.addr %s18, 2
    %s20 = smul.addr %s19, 8
    %s21 = scalar_lea.vmem %s0, %s20
    %s22 = sadd.s32 0, 0
    %s23 = smul.u32 18, %s22
  $region5: #{_lambda_.6} parent=0 // pred_fallthru
    _
  // Predicated region
  $region6: #{_lambda_.6} parent=0 // pred_check
    _
  $region7: #{_lambda_.6} parent=0 // pred_check_branch
    %25 = sbr.rel (0) target = $region9
  $region8: #{_lambda_.6} parent=0 // pred_region
    %s26 = sadd.s32 0, 0
    %s27 = smul.u32 18, %s26
    %p28 = scmp.lt.s32.totalorder %s27, 17
    %s29 = scalar_select %p28, %s27, 17
    %s30 = smul.addr %s29, 2
    %s31 = smul.addr %s30, 8
    %s32 = scalar_lea.vmem %s1, %s31
    %s33 = sadd.s32 0, 0
    %s34 = smul.u32 18, %s33
  $region9: #{_lambda_.6} parent=0 // pred_fallthru
    _
  // Predicated region
  $region10: #{_lambda_.6} parent=0 // pred_check
    _
  $region11: #{_lambda_.6} parent=0 // pred_check_branch
    %36 = sbr.rel (0) target = $region13
  $region12: #{_lambda_.6} parent=0 // pred_region
    %s37 = sadd.s32 0, 0
    %s38 = smul.u32 18, %s37
    %p39 = scmp.lt.s32.totalorder %s38, 17
    %s40 = scalar_select %p39, %s38, 17
    %s41 = smul.addr %s40, 2
    %s42 = smul.addr %s41, 8
    %s43 = scalar_lea.vmem %s2, %s42
    %s44 = sadd.s32 0, 0
    %s45 = smul.u32 18, %s44
  $region13: #{_lambda_.6} parent=0 // pred_fallthru
    _
  // Predicated region
  $region14: #{_lambda_.6} parent=0 // pred_check
    _
  $region15: #{_lambda_.6} parent=0 // pred_check_branch
    %47 = sbr.rel (0) target = $region17
  $region16: #{_lambda_.6} parent=0 // pred_region
    %s48 = sadd.s32 0, 0
    %s49 = smul.u32 18, %s48
    %p50 = scmp.lt.s32.totalorder %s49, 17
    %s51 = scalar_select %p50, %s49, 17
    %s52 = smul.addr %s51, 2
    %s53 = smul.addr %s52, 8
    %s54 = scalar_lea.vmem %s3, %s53
    %s55 = sadd.s32 0, 0
    %s56 = smul.u32 18, %s55
  $region17: #{_lambda_.6} parent=0 // pred_fallthru
    _
  %s57 = sadd.s32 0, 0
  %s58 = smul.u32 18, %s57
  %p59 = scmp.lt.s32.totalorder %s58, 17
  %s60 = scalar_select %p59, %s58, 17
  %s61 = smul.addr %s60, 2
  %s62 = smul.addr %s61, 8
  %s63 = scalar_lea.vmem %s0, %s62
  %s64 = sadd.s32 0, 0
  %s65 = smul.u32 18, %s64
  %p66 = scmp.lt.s32.totalorder %s65, 17
  %s67 = scalar_select %p66, %s65, 17
  %s68 = smul.addr %s67, 2
  %s69 = smul.addr %s68, 8
  %s70 = scalar_lea.vmem %s1, %s69
  %s71 = sadd.s32 0, 0
  %s72 = smul.u32 18, %s71
  %p73 = scmp.lt.s32.totalorder %s72, 17
  %s74 = scalar_select %p73, %s72, 17
  %s75 = smul.addr %s74, 2
  %s76 = smul.addr %s75, 8
  %s77 = scalar_lea.vmem %s2, %s76
  %s78 = sadd.s32 0, 0
  %s79 = smul.u32 18, %s78
  %p80 = scmp.lt.s32.totalorder %s79, 17
  %s81 = scalar_select %p80, %s79, 17
  %s82 = smul.addr %s81, 2
  %s83 = smul.addr %s82, 8
  %s84 = scalar_lea.vmem %s3, %s83
  %s85 = sadd.s32 0, 0
  %s86 = smul.u32 18, %s85
  %p87 = scmp.lt.s32.totalorder %s86, 17
  %s88 = scalar_select %p87, %s86, 17
  %s89 = smul.addr %s88, 2
  %s90 = smul.addr %s89, 8
  %s91 = scalar_lea.vmem %s0, %s90
  %s92 = sadd.s32 0, 0
  %s93 = smul.u32 18, %s92
  %s94 = sadd.s32 0, 0
  %s95 = smul.u32 18, %s94
  %p96 = scmp.lt.s32.totalorder %s95, 17
  %s97 = scalar_select %p96, %s95, 17
  %s98 = smul.addr %s97, 2
  %s99 = smul.addr %s98, 8
  %s100 = scalar_lea.vmem %s1, %s99
  %s101 = sadd.s32 0, 0
  %s102 = smul.u32 18, %s101
  %s103 = sadd.s32 0, 0
  %s104 = smul.u32 18, %s103
  %p105 = scmp.lt.s32.totalorder %s104, 17
  %s106 = scalar_select %p105, %s104, 17
  %s107 = smul.addr %s106, 2
  %s108 = smul.addr %s107, 8
  %s109 = scalar_lea.vmem %s2, %s108
  %s110 = sadd.s32 0, 0
  %s111 = smul.u32 18, %s110
  %s112 = sadd.s32 0, 0
  %s113 = smul.u32 18, %s112
  %p114 = scmp.lt.s32.totalorder %s113, 17
  %s115 = scalar_select %p114, %s113, 17
  %s116 = smul.addr %s115, 2
  %s117 = smul.addr %s116, 8
  %s118 = scalar_lea.vmem %s3, %s117
  %s119 = sadd.s32 0, 0
  %s120 = smul.u32 18, %s119
  %p121 = scmp.eq.s32.totalorder 0, 0
  // Predicated region
  $region18: #{_lambda_.6} parent=0 // pred_check
    %p122 = pneg %p121
  $region19: #{_lambda_.6} parent=0 // pred_check_branch
    %124 = sbr.rel (%p122) target = $region21
  $region20: #{_lambda_.6} parent=0 // pred_region
    %125 = vst [vmem:[%s4] sm:$0xff] 0.0
    %126 = vst [vmem:[%s5] sm:$0xff] 0.0
    %127 = vst [vmem:[%s6] sm:$0xff] 0.0
    %128 = vst [vmem:[%s7] sm:$0xff] 0.0
  $region21: #{_lambda_.6} parent=0 // pred_fallthru
    _
  %v129 = vld [vmem:[%s91] sm:$0xff]
  %v130 = vld [vmem:[%s91 + $0x8] sm:$0xff]
  %v131 = vld [vmem:[%s91 + $0x10] sm:$0xff]
  %v132 = vld [vmem:[%s91 + $0x18] sm:$0xff]
  %v133 = vld [vmem:[%s91 + $0x20] sm:$0xff]
  %v134 = vld [vmem:[%s91 + $0x28] sm:$0xff]
  %v135 = vld [vmem:[%s91 + $0x30] sm:$0xff]
  %v136 = vld [vmem:[%s91 + $0x38] sm:$0xff]
  %v137 = vld [vmem:[%s91 + $0x40] sm:$0xff]
  %v138 = vld [vmem:[%s91 + $0x48] sm:$0xff]
  %v139 = vld [vmem:[%s91 + $0x50] sm:$0xff]
  %v140 = vld [vmem:[%s91 + $0x58] sm:$0xff]
  %v141 = vld [vmem:[%s91 + $0x60] sm:$0xff]
  %v142 = vld [vmem:[%s91 + $0x68] sm:$0xff]
  %v143 = vld [vmem:[%s91 + $0x70] sm:$0xff]
  %v144 = vld [vmem:[%s91 + $0x78] sm:$0xff]
  %v145 = vld [vmem:[%s91 + $0x80] sm:$0xff]
  %v146 = vld [vmem:[%s91 + $0x88] sm:$0xff]
  %v147 = vld [vmem:[%s91 + $0x90] sm:$0xff]
  %v148 = vld [vmem:[%s91 + $0x98] sm:$0xff]
  %v149 = vld [vmem:[%s91 + $0xa0] sm:$0xff]
  %v150 = vld [vmem:[%s91 + $0xa8] sm:$0xff]
  %v151 = vld [vmem:[%s91 + $0xb0] sm:$0xff]
  %v152 = vld [vmem:[%s91 + $0xb8] sm:$0xff]
  %v153 = vld [vmem:[%s91 + $0xc0] sm:$0xff]
  %v154 = vld [vmem:[%s91 + $0xc8] sm:$0xff]
  %v155 = vld [vmem:[%s91 + $0xd0] sm:$0xff]
  %v156 = vld [vmem:[%s91 + $0xd8] sm:$0xff]
  %v157 = vld [vmem:[%s91 + $0xe0] sm:$0xff]
  %v158 = vld [vmem:[%s91 + $0xe8] sm:$0xff]
  %v159 = vld [vmem:[%s91 + $0xf0] sm:$0xff]
  %v160 = vld [vmem:[%s91 + $0xf8] sm:$0xff]
  %v161 = vld [vmem:[%s91 + $0x100] sm:$0xff]
  %v162 = vld [vmem:[%s91 + $0x108] sm:$0xff]
  %v163 = vld [vmem:[%s91 + $0x110] sm:$0xff]
  %v164 = vld [vmem:[%s91 + $0x118] sm:$0xff]
  %v165 = vld [vmem:[%s100] sm:$0xff]
  %v166 = vld [vmem:[%s100 + $0x8] sm:$0xff]
  %v167 = vld [vmem:[%s100 + $0x10] sm:$0xff]
  %v168 = vld [vmem:[%s100 + $0x18] sm:$0xff]
  %v169 = vld [vmem:[%s100 + $0x20] sm:$0xff]
  %v170 = vld [vmem:[%s100 + $0x28] sm:$0xff]
  %v171 = vld [vmem:[%s100 + $0x30] sm:$0xff]
  %v172 = vld [vmem:[%s100 + $0x38] sm:$0xff]
  %v173 = vld [vmem:[%s100 + $0x40] sm:$0xff]
  %v174 = vld [vmem:[%s100 + $0x48] sm:$0xff]
  %v175 = vld [vmem:[%s100 + $0x50] sm:$0xff]
  %v176 = vld [vmem:[%s100 + $0x58] sm:$0xff]
  %v177 = vld [vmem:[%s100 + $0x60] sm:$0xff]
  %v178 = vld [vmem:[%s100 + $0x68] sm:$0xff]
  %v179 = vld [vmem:[%s100 + $0x70] sm:$0xff]
  %v180 = vld [vmem:[%s100 + $0x78] sm:$0xff]
  %v181 = vld [vmem:[%s100 + $0x80] sm:$0xff]
  %v182 = vld [vmem:[%s100 + $0x88] sm:$0xff]
  %v183 = vld [vmem:[%s100 + $0x90] sm:$0xff]
  %v184 = vld [vmem:[%s100 + $0x98] sm:$0xff]
  %v185 = vld [vmem:[%s100 + $0xa0] sm:$0xff]
  %v186 = vld [vmem:[%s100 + $0xa8] sm:$0xff]
  %v187 = vld [vmem:[%s100 + $0xb0] sm:$0xff]
  %v188 = vld [vmem:[%s100 + $0xb8] sm:$0xff]
  %v189 = vld [vmem:[%s100 + $0xc0] sm:$0xff]
  %v190 = vld [vmem:[%s100 + $0xc8] sm:$0xff]
  %v191 = vld [vmem:[%s100 + $0xd0] sm:$0xff]
  %v192 = vld [vmem:[%s100 + $0xd8] sm:$0xff]
  %v193 = vld [vmem:[%s100 + $0xe0] sm:$0xff]
  %v194 = vld [vmem:[%s100 + $0xe8] sm:$0xff]
  %v195 = vld [vmem:[%s100 + $0xf0] sm:$0xff]
  %v196 = vld [vmem:[%s100 + $0xf8] sm:$0xff]
  %v197 = vld [vmem:[%s100 + $0x100] sm:$0xff]
  %v198 = vld [vmem:[%s100 + $0x108] sm:$0xff]
  %v199 = vld [vmem:[%s100 + $0x110] sm:$0xff]
  %v200 = vld [vmem:[%s100 + $0x118] sm:$0xff]
  %v201 = vld [vmem:[%s109] sm:$0xff]
  %v202 = vld [vmem:[%s109 + $0x8] sm:$0xff]
  %v203 = vld [vmem:[%s109 + $0x10] sm:$0xff]
  %v204 = vld [vmem:[%s109 + $0x18] sm:$0xff]
  %v205 = vld [vmem:[%s109 + $0x20] sm:$0xff]
  %v206 = vld [vmem:[%s109 + $0x28] sm:$0xff]
  %v207 = vld [vmem:[%s109 + $0x30] sm:$0xff]
  %v208 = vld [vmem:[%s109 + $0x38] sm:$0xff]
  %v209 = vld [vmem:[%s109 + $0x40] sm:$0xff]
  %v210 = vld [vmem:[%s109 + $0x48] sm:$0xff]
  %v211 = vld [vmem:[%s109 + $0x50] sm:$0xff]
  %v212 = vld [vmem:[%s109 + $0x58] sm:$0xff]
  %v213 = vld [vmem:[%s109 + $0x60] sm:$0xff]
  %v214 = vld [vmem:[%s109 + $0x68] sm:$0xff]
  %v215 = vld [vmem:[%s109 + $0x70] sm:$0xff]
  %v216 = vld [vmem:[%s109 + $0x78] sm:$0xff]
  %v217 = vld [vmem:[%s109 + $0x80] sm:$0xff]
  %v218 = vld [vmem:[%s109 + $0x88] sm:$0xff]
  %v219 = vld [vmem:[%s109 + $0x90] sm:$0xff]
  %v220 = vld [vmem:[%s109 + $0x98] sm:$0xff]
  %v221 = vld [vmem:[%s109 + $0xa0] sm:$0xff]
  %v222 = vld [vmem:[%s109 + $0xa8] sm:$0xff]
  %v223 = vld [vmem:[%s109 + $0xb0] sm:$0xff]
  %v224 = vld [vmem:[%s109 + $0xb8] sm:$0xff]
  %v225 = vld [vmem:[%s109 + $0xc0] sm:$0xff]
  %v226 = vld [vmem:[%s109 + $0xc8] sm:$0xff]
  %v227 = vld [vmem:[%s109 + $0xd0] sm:$0xff]
  %v228 = vld [vmem:[%s109 + $0xd8] sm:$0xff]
  %v229 = vld [vmem:[%s109 + $0xe0] sm:$0xff]
  %v230 = vld [vmem:[%s109 + $0xe8] sm:$0xff]
  %v231 = vld [vmem:[%s109 + $0xf0] sm:$0xff]
  %v232 = vld [vmem:[%s109 + $0xf8] sm:$0xff]
  %v233 = vld [vmem:[%s109 + $0x100] sm:$0xff]
  %v234 = vld [vmem:[%s109 + $0x108] sm:$0xff]
  %v235 = vld [vmem:[%s109 + $0x110] sm:$0xff]
  %v236 = vld [vmem:[%s109 + $0x118] sm:$0xff]
  %v237 = vld [vmem:[%s118] sm:$0xff]
  %v238 = vld [vmem:[%s118 + $0x8] sm:$0xff]
  %v239 = vld [vmem:[%s118 + $0x10] sm:$0xff]
  %v240 = vld [vmem:[%s118 + $0x18] sm:$0xff]
  %v241 = vld [vmem:[%s118 + $0x20] sm:$0xff]
  %v242 = vld [vmem:[%s118 + $0x28] sm:$0xff]
  %v243 = vld [vmem:[%s118 + $0x30] sm:$0xff]
  %v244 = vld [vmem:[%s118 + $0x38] sm:$0xff]
  %v245 = vld [vmem:[%s118 + $0x40] sm:$0xff]
  %v246 = vld [vmem:[%s118 + $0x48] sm:$0xff]
  %v247 = vld [vmem:[%s118 + $0x50] sm:$0xff]
  %v248 = vld [vmem:[%s118 + $0x58] sm:$0xff]
  %v249 = vld [vmem:[%s118 + $0x60] sm:$0xff]
  %v250 = vld [vmem:[%s118 + $0x68] sm:$0xff]
  %v251 = vld [vmem:[%s118 + $0x70] sm:$0xff]
  %v252 = vld [vmem:[%s118 + $0x78] sm:$0xff]
  %v253 = vld [vmem:[%s118 + $0x80] sm:$0xff]
  %v254 = vld [vmem:[%s118 + $0x88] sm:$0xff]
  %v255 = vld [vmem:[%s118 + $0x90] sm:$0xff]
  %v256 = vld [vmem:[%s118 + $0x98] sm:$0xff]
  %v257 = vld [vmem:[%s118 + $0xa0] sm:$0xff]
  %v258 = vld [vmem:[%s118 + $0xa8] sm:$0xff]
  %v259 = vld [vmem:[%s118 + $0xb0] sm:$0xff]
  %v260 = vld [vmem:[%s118 + $0xb8] sm:$0xff]
  %v261 = vld [vmem:[%s118 + $0xc0] sm:$0xff]
  %v262 = vld [vmem:[%s118 + $0xc8] sm:$0xff]
  %v263 = vld [vmem:[%s118 + $0xd0] sm:$0xff]
  %v264 = vld [vmem:[%s118 + $0xd8] sm:$0xff]
  %v265 = vld [vmem:[%s118 + $0xe0] sm:$0xff]
  %v266 = vld [vmem:[%s118 + $0xe8] sm:$0xff]
  %v267 = vld [vmem:[%s118 + $0xf0] sm:$0xff]
  %v268 = vld [vmem:[%s118 + $0xf8] sm:$0xff]
  %v269 = vld [vmem:[%s118 + $0x100] sm:$0xff]
  %v270 = vld [vmem:[%s118 + $0x108] sm:$0xff]
  %v271 = vld [vmem:[%s118 + $0x110] sm:$0xff]
  %v272 = vld [vmem:[%s118 + $0x118] sm:$0xff]
  %v273 = vsub.f32 %v165, %v129
  %v274 = vsub.f32 %v166, %v130
  %v275 = vsub.f32 %v167, %v131
  %v276 = vsub.f32 %v168, %v132
  %v277 = vsub.f32 %v169, %v133
  %v278 = vsub.f32 %v170, %v134
  %v279 = vsub.f32 %v171, %v135
  %v280 = vsub.f32 %v172, %v136
  %v281 = vsub.f32 %v173, %v137
  %v282 = vsub.f32 %v174, %v138
  %v283 = vsub.f32 %v175, %v139
  %v284 = vsub.f32 %v176, %v140
  %v285 = vsub.f32 %v177, %v141
  %v286 = vsub.f32 %v178, %v142
  %v287 = vsub.f32 %v179, %v143
  %v288 = vsub.f32 %v180, %v144
  %v289 = vsub.f32 %v181, %v145
  %v290 = vsub.f32 %v182, %v146
  %v291 = vsub.f32 %v183, %v147
  %v292 = vsub.f32 %v184, %v148
  %v293 = vsub.f32 %v185, %v149
  %v294 = vsub.f32 %v186, %v150
  %v295 = vsub.f32 %v187, %v151
  %v296 = vsub.f32 %v188, %v152
  %v297 = vsub.f32 %v189, %v153
  %v298 = vsub.f32 %v190, %v154
  %v299 = vsub.f32 %v191, %v155
  %v300 = vsub.f32 %v192, %v156
  %v301 = vsub.f32 %v193, %v157
  %v302 = vsub.f32 %v194, %v158
  %v303 = vsub.f32 %v195, %v159
  %v304 = vsub.f32 %v196, %v160
  %v305 = vsub.f32 %v197, %v161
  %v306 = vsub.f32 %v198, %v162
  %v307 = vsub.f32 %v199, %v163
  %v308 = vsub.f32 %v200, %v164
  %v309 = vand.u32 2147483647, %v273
  %v310 = vand.u32 2147483647, %v274
  %v311 = vand.u32 2147483647, %v275
  %v312 = vand.u32 2147483647, %v276
  %v313 = vand.u32 2147483647, %v277
  %v314 = vand.u32 2147483647, %v278
  %v315 = vand.u32 2147483647, %v279
  %v316 = vand.u32 2147483647, %v280
  %v317 = vand.u32 2147483647, %v281
  %v318 = vand.u32 2147483647, %v282
  %v319 = vand.u32 2147483647, %v283
  %v320 = vand.u32 2147483647, %v284
  %v321 = vand.u32 2147483647, %v285
  %v322 = vand.u32 2147483647, %v286
  %v323 = vand.u32 2147483647, %v287
  %v324 = vand.u32 2147483647, %v288
  %v325 = vand.u32 2147483647, %v289
  %v326 = vand.u32 2147483647, %v290
  %v327 = vand.u32 2147483647, %v291
  %v328 = vand.u32 2147483647, %v292
  %v329 = vand.u32 2147483647, %v293
  %v330 = vand.u32 2147483647, %v294
  %v331 = vand.u32 2147483647, %v295
  %v332 = vand.u32 2147483647, %v296
  %v333 = vand.u32 2147483647, %v297
  %v334 = vand.u32 2147483647, %v298
  %v335 = vand.u32 2147483647, %v299
  %v336 = vand.u32 2147483647, %v300
  %v337 = vand.u32 2147483647, %v301
  %v338 = vand.u32 2147483647, %v302
  %v339 = vand.u32 2147483647, %v303
  %v340 = vand.u32 2147483647, %v304
  %v341 = vand.u32 2147483647, %v305
  %v342 = vand.u32 2147483647, %v306
  %v343 = vand.u32 2147483647, %v307
  %v344 = vand.u32 2147483647, %v308
  %vm345 = vcmask 130048
  %v346 = vsel %vm345, %v309, 0.0
  %v347 = vsel %vm345, %v310, 0.0
  %v348 = vadd.f32 %v346, %v347
  %v349 = vsel %vm345, %v311, 0.0
  %v350 = vadd.f32 %v348, %v349
  %v351 = vsel %vm345, %v312, 0.0
  %v352 = vadd.f32 %v350, %v351
  %v353 = vsel %vm345, %v313, 0.0
  %v354 = vadd.f32 %v352, %v353
  %v355 = vsel %vm345, %v314, 0.0
  %v356 = vadd.f32 %v354, %v355
  %v357 = vsel %vm345, %v315, 0.0
  %v358 = vadd.f32 %v356, %v357
  %v359 = vsel %vm345, %v316, 0.0
  %v360 = vadd.f32 %v358, %v359
  %v361 = vsel %vm345, %v317, 0.0
  %v362 = vadd.f32 %v360, %v361
  %v363 = vsel %vm345, %v318, 0.0
  %v364 = vadd.f32 %v362, %v363
  %v365 = vsel %vm345, %v319, 0.0
  %v366 = vadd.f32 %v364, %v365
  %v367 = vsel %vm345, %v320, 0.0
  %v368 = vadd.f32 %v366, %v367
  %v369 = vsel %vm345, %v321, 0.0
  %v370 = vadd.f32 %v368, %v369
  %v371 = vsel %vm345, %v322, 0.0
  %v372 = vadd.f32 %v370, %v371
  %v373 = vsel %vm345, %v323, 0.0
  %v374 = vadd.f32 %v372, %v373
  %v375 = vsel %vm345, %v324, 0.0
  %v376 = vadd.f32 %v374, %v375
  %v377 = vsel %vm345, %v325, 0.0
  %v378 = vadd.f32 %v376, %v377
  %v379 = vsel %vm345, %v326, 0.0
  %v380 = vadd.f32 %v378, %v379
  %v381 = vsel %vm345, %v327, 0.0
  %v382 = vadd.f32 %v380, %v381
  %v383 = vsel %vm345, %v328, 0.0
  %v384 = vadd.f32 %v382, %v383
  %v385 = vsel %vm345, %v329, 0.0
  %v386 = vadd.f32 %v384, %v385
  %v387 = vsel %vm345, %v330, 0.0
  %v388 = vadd.f32 %v386, %v387
  %v389 = vsel %vm345, %v331, 0.0
  %v390 = vadd.f32 %v388, %v389
  %v391 = vsel %vm345, %v332, 0.0
  %v392 = vadd.f32 %v390, %v391
  %v393 = vsel %vm345, %v333, 0.0
  %v394 = vadd.f32 %v392, %v393
  %v395 = vsel %vm345, %v334, 0.0
  %v396 = vadd.f32 %v394, %v395
  %v397 = vsel %vm345, %v335, 0.0
  %v398 = vadd.f32 %v396, %v397
  %v399 = vsel %vm345, %v336, 0.0
  %v400 = vadd.f32 %v398, %v399
  %v401 = vsel %vm345, %v337, 0.0
  %v402 = vadd.f32 %v400, %v401
  %v403 = vsel %vm345, %v338, 0.0
  %v404 = vadd.f32 %v402, %v403
  %v405 = vsel %vm345, %v339, 0.0
  %v406 = vadd.f32 %v404, %v405
  %v407 = vsel %vm345, %v340, 0.0
  %v408 = vadd.f32 %v406, %v407
  %v409 = vsel %vm345, %v341, 0.0
  %v410 = vadd.f32 %v408, %v409
  %v411 = vsel %vm345, %v342, 0.0
  %v412 = vadd.f32 %v410, %v411
  %v413 = vsel %vm345, %v343, 0.0
  %v414 = vadd.f32 %v412, %v413
  %v415 = vsel %vm345, %v344, 0.0
  %v416 = vadd.f32 %v414, %v415
  %417 = vadd.xlane.f32.xlu0 %v416
  %v418 = vpop.xlane.xlu0 %417
  %v419 = vrot.slane %v418, 4
  %v420 = vadd.f32 %v418, %v419
  %v421 = vrot.slane %v420, 2
  %v422 = vadd.f32 %v420, %v421
  %v423 = vrot.slane %v422, 1
  %v424 = vadd.f32 %v422, %v423
  %s425 = vtos %v424
  %v426 = vmul.f32 %v273, %v273
  %v427 = vmul.f32 %v274, %v274
  %v428 = vmul.f32 %v275, %v275
  %v429 = vmul.f32 %v276, %v276
  %v430 = vmul.f32 %v277, %v277
  %v431 = vmul.f32 %v278, %v278
  %v432 = vmul.f32 %v279, %v279
  %v433 = vmul.f32 %v280, %v280
  %v434 = vmul.f32 %v281, %v281
  %v435 = vmul.f32 %v282, %v282
  %v436 = vmul.f32 %v283, %v283
  %v437 = vmul.f32 %v284, %v284
  %v438 = vmul.f32 %v285, %v285
  %v439 = vmul.f32 %v286, %v286
  %v440 = vmul.f32 %v287, %v287
  %v441 = vmul.f32 %v288, %v288
  %v442 = vmul.f32 %v289, %v289
  %v443 = vmul.f32 %v290, %v290
  %v444 = vmul.f32 %v291, %v291
  %v445 = vmul.f32 %v292, %v292
  %v446 = vmul.f32 %v293, %v293
  %v447 = vmul.f32 %v294, %v294
  %v448 = vmul.f32 %v295, %v295
  %v449 = vmul.f32 %v296, %v296
  %v450 = vmul.f32 %v297, %v297
  %v451 = vmul.f32 %v298, %v298
  %v452 = vmul.f32 %v299, %v299
  %v453 = vmul.f32 %v300, %v300
  %v454 = vmul.f32 %v301, %v301
  %v455 = vmul.f32 %v302, %v302
  %v456 = vmul.f32 %v303, %v303
  %v457 = vmul.f32 %v304, %v304
  %v458 = vmul.f32 %v305, %v305
  %v459 = vmul.f32 %v306, %v306
  %v460 = vmul.f32 %v307, %v307
  %v461 = vmul.f32 %v308, %v308
  %v462 = vsel %vm345, %v426, 0.0
  %v463 = vsel %vm345, %v427, 0.0
  %v464 = vadd.f32 %v462, %v463
  %v465 = vsel %vm345, %v428, 0.0
  %v466 = vadd.f32 %v464, %v465
  %v467 = vsel %vm345, %v429, 0.0
  %v468 = vadd.f32 %v466, %v467
  %v469 = vsel %vm345, %v430, 0.0
  %v470 = vadd.f32 %v468, %v469
  %v471 = vsel %vm345, %v431, 0.0
  %v472 = vadd.f32 %v470, %v471
  %v473 = vsel %vm345, %v432, 0.0
  %v474 = vadd.f32 %v472, %v473
  %v475 = vsel %vm345, %v433, 0.0
  %v476 = vadd.f32 %v474, %v475
  %v477 = vsel %vm345, %v434, 0.0
  %v478 = vadd.f32 %v476, %v477
  %v479 = vsel %vm345, %v435, 0.0
  %v480 = vadd.f32 %v478, %v479
  %v481 = vsel %vm345, %v436, 0.0
  %v482 = vadd.f32 %v480, %v481
  %v483 = vsel %vm345, %v437, 0.0
  %v484 = vadd.f32 %v482, %v483
  %v485 = vsel %vm345, %v438, 0.0
  %v486 = vadd.f32 %v484, %v485
  %v487 = vsel %vm345, %v439, 0.0
  %v488 = vadd.f32 %v486, %v487
  %v489 = vsel %vm345, %v440, 0.0
  %v490 = vadd.f32 %v488, %v489
  %v491 = vsel %vm345, %v441, 0.0
  %v492 = vadd.f32 %v490, %v491
  %v493 = vsel %vm345, %v442, 0.0
  %v494 = vadd.f32 %v492, %v493
  %v495 = vsel %vm345, %v443, 0.0
  %v496 = vadd.f32 %v494, %v495
  %v497 = vsel %vm345, %v444, 0.0
  %v498 = vadd.f32 %v496, %v497
  %v499 = vsel %vm345, %v445, 0.0
  %v500 = vadd.f32 %v498, %v499
  %v501 = vsel %vm345, %v446, 0.0
  %v502 = vadd.f32 %v500, %v501
  %v503 = vsel %vm345, %v447, 0.0
  %v504 = vadd.f32 %v502, %v503
  %v505 = vsel %vm345, %v448, 0.0
  %v506 = vadd.f32 %v504, %v505
  %v507 = vsel %vm345, %v449, 0.0
  %v508 = vadd.f32 %v506, %v507
  %v509 = vsel %vm345, %v450, 0.0
  %v510 = vadd.f32 %v508, %v509
  %v511 = vsel %vm345, %v451, 0.0
  %v512 = vadd.f32 %v510, %v511
  %v513 = vsel %vm345, %v452, 0.0
  %v514 = vadd.f32 %v512, %v513
  %v515 = vsel %vm345, %v453, 0.0
  %v516 = vadd.f32 %v514, %v515
  %v517 = vsel %vm345, %v454, 0.0
  %v518 = vadd.f32 %v516, %v517
  %v519 = vsel %vm345, %v455, 0.0
  %v520 = vadd.f32 %v518, %v519
  %v521 = vsel %vm345, %v456, 0.0
  %v522 = vadd.f32 %v520, %v521
  %v523 = vsel %vm345, %v457, 0.0
  %v524 = vadd.f32 %v522, %v523
  %v525 = vsel %vm345, %v458, 0.0
  %v526 = vadd.f32 %v524, %v525
  %v527 = vsel %vm345, %v459, 0.0
  %v528 = vadd.f32 %v526, %v527
  %v529 = vsel %vm345, %v460, 0.0
  %v530 = vadd.f32 %v528, %v529
  %v531 = vsel %vm345, %v461, 0.0
  %v532 = vadd.f32 %v530, %v531
  %533 = vadd.xlane.f32.xlu0 %v532
  %v534 = vpop.xlane.xlu0 %533
  %v535 = vrot.slane %v534, 4
  %v536 = vadd.f32 %v534, %v535
  %v537 = vrot.slane %v536, 2
  %v538 = vadd.f32 %v536, %v537
  %v539 = vrot.slane %v538, 1
  %v540 = vadd.f32 %v538, %v539
  %s541 = vtos %v540
  %v542 = vsub.f32 %v201, %v129
  %v543 = vsub.f32 %v202, %v130
  %v544 = vsub.f32 %v203, %v131
  %v545 = vsub.f32 %v204, %v132
  %v546 = vsub.f32 %v205, %v133
  %v547 = vsub.f32 %v206, %v134
  %v548 = vsub.f32 %v207, %v135
  %v549 = vsub.f32 %v208, %v136
  %v550 = vsub.f32 %v209, %v137
  %v551 = vsub.f32 %v210, %v138
  %v552 = vsub.f32 %v211, %v139
  %v553 = vsub.f32 %v212, %v140
  %v554 = vsub.f32 %v213, %v141
  %v555 = vsub.f32 %v214, %v142
  %v556 = vsub.f32 %v215, %v143
  %v557 = vsub.f32 %v216, %v144
  %v558 = vsub.f32 %v217, %v145
  %v559 = vsub.f32 %v218, %v146
  %v560 = vsub.f32 %v219, %v147
  %v561 = vsub.f32 %v220, %v148
  %v562 = vsub.f32 %v221, %v149
  %v563 = vsub.f32 %v222, %v150
  %v564 = vsub.f32 %v223, %v151
  %v565 = vsub.f32 %v224, %v152
  %v566 = vsub.f32 %v225, %v153
  %v567 = vsub.f32 %v226, %v154
  %v568 = vsub.f32 %v227, %v155
  %v569 = vsub.f32 %v228, %v156
  %v570 = vsub.f32 %v229, %v157
  %v571 = vsub.f32 %v230, %v158
  %v572 = vsub.f32 %v231, %v159
  %v573 = vsub.f32 %v232, %v160
  %v574 = vsub.f32 %v233, %v161
  %v575 = vsub.f32 %v234, %v162
  %v576 = vsub.f32 %v235, %v163
  %v577 = vsub.f32 %v236, %v164
  %v578 = vand.u32 2147483647, %v542
  %v579 = vand.u32 2147483647, %v543
  %v580 = vand.u32 2147483647, %v544
  %v581 = vand.u32 2147483647, %v545
  %v582 = vand.u32 2147483647, %v546
  %v583 = vand.u32 2147483647, %v547
  %v584 = vand.u32 2147483647, %v548
  %v585 = vand.u32 2147483647, %v549
  %v586 = vand.u32 2147483647, %v550
  %v587 = vand.u32 2147483647, %v551
  %v588 = vand.u32 2147483647, %v552
  %v589 = vand.u32 2147483647, %v553
  %v590 = vand.u32 2147483647, %v554
  %v591 = vand.u32 2147483647, %v555
  %v592 = vand.u32 2147483647, %v556
  %v593 = vand.u32 2147483647, %v557
  %v594 = vand.u32 2147483647, %v558
  %v595 = vand.u32 2147483647, %v559
  %v596 = vand.u32 2147483647, %v560
  %v597 = vand.u32 2147483647, %v561
  %v598 = vand.u32 2147483647, %v562
  %v599 = vand.u32 2147483647, %v563
  %v600 = vand.u32 2147483647, %v564
  %v601 = vand.u32 2147483647, %v565
  %v602 = vand.u32 2147483647, %v566
  %v603 = vand.u32 2147483647, %v567
  %v604 = vand.u32 2147483647, %v568
  %v605 = vand.u32 2147483647, %v569
  %v606 = vand.u32 2147483647, %v570
  %v607 = vand.u32 2147483647, %v571
  %v608 = vand.u32 2147483647, %v572
  %v609 = vand.u32 2147483647, %v573
  %v610 = vand.u32 2147483647, %v574
  %v611 = vand.u32 2147483647, %v575
  %v612 = vand.u32 2147483647, %v576
  %v613 = vand.u32 2147483647, %v577
  %v614 = vsel %vm345, %v578, 0.0
  %v615 = vsel %vm345, %v579, 0.0
  %v616 = vadd.f32 %v614, %v615
  %v617 = vsel %vm345, %v580, 0.0
  %v618 = vadd.f32 %v616, %v617
  %v619 = vsel %vm345, %v581, 0.0
  %v620 = vadd.f32 %v618, %v619
  %v621 = vsel %vm345, %v582, 0.0
  %v622 = vadd.f32 %v620, %v621
  %v623 = vsel %vm345, %v583, 0.0
  %v624 = vadd.f32 %v622, %v623
  %v625 = vsel %vm345, %v584, 0.0
  %v626 = vadd.f32 %v624, %v625
  %v627 = vsel %vm345, %v585, 0.0
  %v628 = vadd.f32 %v626, %v627
  %v629 = vsel %vm345, %v586, 0.0
  %v630 = vadd.f32 %v628, %v629
  %v631 = vsel %vm345, %v587, 0.0
  %v632 = vadd.f32 %v630, %v631
  %v633 = vsel %vm345, %v588, 0.0
  %v634 = vadd.f32 %v632, %v633
  %v635 = vsel %vm345, %v589, 0.0
  %v636 = vadd.f32 %v634, %v635
  %v637 = vsel %vm345, %v590, 0.0
  %v638 = vadd.f32 %v636, %v637
  %v639 = vsel %vm345, %v591, 0.0
  %v640 = vadd.f32 %v638, %v639
  %v641 = vsel %vm345, %v592, 0.0
  %v642 = vadd.f32 %v640, %v641
  %v643 = vsel %vm345, %v593, 0.0
  %v644 = vadd.f32 %v642, %v643
  %v645 = vsel %vm345, %v594, 0.0
  %v646 = vadd.f32 %v644, %v645
  %v647 = vsel %vm345, %v595, 0.0
  %v648 = vadd.f32 %v646, %v647
  %v649 = vsel %vm345, %v596, 0.0
  %v650 = vadd.f32 %v648, %v649
  %v651 = vsel %vm345, %v597, 0.0
  %v652 = vadd.f32 %v650, %v651
  %v653 = vsel %vm345, %v598, 0.0
  %v654 = vadd.f32 %v652, %v653
  %v655 = vsel %vm345, %v599, 0.0
  %v656 = vadd.f32 %v654, %v655
  %v657 = vsel %vm345, %v600, 0.0
  %v658 = vadd.f32 %v656, %v657
  %v659 = vsel %vm345, %v601, 0.0
  %v660 = vadd.f32 %v658, %v659
  %v661 = vsel %vm345, %v602, 0.0
  %v662 = vadd.f32 %v660, %v661
  %v663 = vsel %vm345, %v603, 0.0
  %v664 = vadd.f32 %v662, %v663
  %v665 = vsel %vm345, %v604, 0.0
  %v666 = vadd.f32 %v664, %v665
  %v667 = vsel %vm345, %v605, 0.0
  %v668 = vadd.f32 %v666, %v667
  %v669 = vsel %vm345, %v606, 0.0
  %v670 = vadd.f32 %v668, %v669
  %v671 = vsel %vm345, %v607, 0.0
  %v672 = vadd.f32 %v670, %v671
  %v673 = vsel %vm345, %v608, 0.0
  %v674 = vadd.f32 %v672, %v673
  %v675 = vsel %vm345, %v609, 0.0
  %v676 = vadd.f32 %v674, %v675
  %v677 = vsel %vm345, %v610, 0.0
  %v678 = vadd.f32 %v676, %v677
  %v679 = vsel %vm345, %v611, 0.0
  %v680 = vadd.f32 %v678, %v679
  %v681 = vsel %vm345, %v612, 0.0
  %v682 = vadd.f32 %v680, %v681
  %v683 = vsel %vm345, %v613, 0.0
  %v684 = vadd.f32 %v682, %v683
  %685 = vadd.xlane.f32.xlu0 %v684
  %v686 = vpop.xlane.xlu0 %685
  %v687 = vrot.slane %v686, 4
  %v688 = vadd.f32 %v686, %v687
  %v689 = vrot.slane %v688, 2
  %v690 = vadd.f32 %v688, %v689
  %v691 = vrot.slane %v690, 1
  %v692 = vadd.f32 %v690, %v691
  %s693 = vtos %v692
  %v694 = vsub.f32 %v237, %v129
  %v695 = vsub.f32 %v238, %v130
  %v696 = vsub.f32 %v239, %v131
  %v697 = vsub.f32 %v240, %v132
  %v698 = vsub.f32 %v241, %v133
  %v699 = vsub.f32 %v242, %v134
  %v700 = vsub.f32 %v243, %v135
  %v701 = vsub.f32 %v244, %v136
  %v702 = vsub.f32 %v245, %v137
  %v703 = vsub.f32 %v246, %v138
  %v704 = vsub.f32 %v247, %v139
  %v705 = vsub.f32 %v248, %v140
  %v706 = vsub.f32 %v249, %v141
  %v707 = vsub.f32 %v250, %v142
  %v708 = vsub.f32 %v251, %v143
  %v709 = vsub.f32 %v252, %v144
  %v710 = vsub.f32 %v253, %v145
  %v711 = vsub.f32 %v254, %v146
  %v712 = vsub.f32 %v255, %v147
  %v713 = vsub.f32 %v256, %v148
  %v714 = vsub.f32 %v257, %v149
  %v715 = vsub.f32 %v258, %v150
  %v716 = vsub.f32 %v259, %v151
  %v717 = vsub.f32 %v260, %v152
  %v718 = vsub.f32 %v261, %v153
  %v719 = vsub.f32 %v262, %v154
  %v720 = vsub.f32 %v263, %v155
  %v721 = vsub.f32 %v264, %v156
  %v722 = vsub.f32 %v265, %v157
  %v723 = vsub.f32 %v266, %v158
  %v724 = vsub.f32 %v267, %v159
  %v725 = vsub.f32 %v268, %v160
  %v726 = vsub.f32 %v269, %v161
  %v727 = vsub.f32 %v270, %v162
  %v728 = vsub.f32 %v271, %v163
  %v729 = vsub.f32 %v272, %v164
  %v730 = vand.u32 2147483647, %v694
  %v731 = vand.u32 2147483647, %v695
  %v732 = vand.u32 2147483647, %v696
  %v733 = vand.u32 2147483647, %v697
  %v734 = vand.u32 2147483647, %v698
  %v735 = vand.u32 2147483647, %v699
  %v736 = vand.u32 2147483647, %v700
  %v737 = vand.u32 2147483647, %v701
  %v738 = vand.u32 2147483647, %v702
  %v739 = vand.u32 2147483647, %v703
  %v740 = vand.u32 2147483647, %v704
  %v741 = vand.u32 2147483647, %v705
  %v742 = vand.u32 2147483647, %v706
  %v743 = vand.u32 2147483647, %v707
  %v744 = vand.u32 2147483647, %v708
  %v745 = vand.u32 2147483647, %v709
  %v746 = vand.u32 2147483647, %v710
  %v747 = vand.u32 2147483647, %v711
  %v748 = vand.u32 2147483647, %v712
  %v749 = vand.u32 2147483647, %v713
  %v750 = vand.u32 2147483647, %v714
  %v751 = vand.u32 2147483647, %v715
  %v752 = vand.u32 2147483647, %v716
  %v753 = vand.u32 2147483647, %v717
  %v754 = vand.u32 2147483647, %v718
  %v755 = vand.u32 2147483647, %v719
  %v756 = vand.u32 2147483647, %v720
  %v757 = vand.u32 2147483647, %v721
  %v758 = vand.u32 2147483647, %v722
  %v759 = vand.u32 2147483647, %v723
  %v760 = vand.u32 2147483647, %v724
  %v761 = vand.u32 2147483647, %v725
  %v762 = vand.u32 2147483647, %v726
  %v763 = vand.u32 2147483647, %v727
  %v764 = vand.u32 2147483647, %v728
  %v765 = vand.u32 2147483647, %v729
  %v766 = vsel %vm345, %v730, 0.0
  %v767 = vsel %vm345, %v731, 0.0
  %v768 = vadd.f32 %v766, %v767
  %v769 = vsel %vm345, %v732, 0.0
  %v770 = vadd.f32 %v768, %v769
  %v771 = vsel %vm345, %v733, 0.0
  %v772 = vadd.f32 %v770, %v771
  %v773 = vsel %vm345, %v734, 0.0
  %v774 = vadd.f32 %v772, %v773
  %v775 = vsel %vm345, %v735, 0.0
  %v776 = vadd.f32 %v774, %v775
  %v777 = vsel %vm345, %v736, 0.0
  %v778 = vadd.f32 %v776, %v777
  %v779 = vsel %vm345, %v737, 0.0
  %v780 = vadd.f32 %v778, %v779
  %v781 = vsel %vm345, %v738, 0.0
  %v782 = vadd.f32 %v780, %v781
  %v783 = vsel %vm345, %v739, 0.0
  %v784 = vadd.f32 %v782, %v783
  %v785 = vsel %vm345, %v740, 0.0
  %v786 = vadd.f32 %v784, %v785
  %v787 = vsel %vm345, %v741, 0.0
  %v788 = vadd.f32 %v786, %v787
  %v789 = vsel %vm345, %v742, 0.0
  %v790 = vadd.f32 %v788, %v789
  %v791 = vsel %vm345, %v743, 0.0
  %v792 = vadd.f32 %v790, %v791
  %v793 = vsel %vm345, %v744, 0.0
  %v794 = vadd.f32 %v792, %v793
  %v795 = vsel %vm345, %v745, 0.0
  %v796 = vadd.f32 %v794, %v795
  %v797 = vsel %vm345, %v746, 0.0
  %v798 = vadd.f32 %v796, %v797
  %v799 = vsel %vm345, %v747, 0.0
  %v800 = vadd.f32 %v798, %v799
  %v801 = vsel %vm345, %v748, 0.0
  %v802 = vadd.f32 %v800, %v801
  %v803 = vsel %vm345, %v749, 0.0
  %v804 = vadd.f32 %v802, %v803
  %v805 = vsel %vm345, %v750, 0.0
  %v806 = vadd.f32 %v804, %v805
  %v807 = vsel %vm345, %v751, 0.0
  %v808 = vadd.f32 %v806, %v807
  %v809 = vsel %vm345, %v752, 0.0
  %v810 = vadd.f32 %v808, %v809
  %v811 = vsel %vm345, %v753, 0.0
  %v812 = vadd.f32 %v810, %v811
  %v813 = vsel %vm345, %v754, 0.0
  %v814 = vadd.f32 %v812, %v813
  %v815 = vsel %vm345, %v755, 0.0
  %v816 = vadd.f32 %v814, %v815
  %v817 = vsel %vm345, %v756, 0.0
  %v818 = vadd.f32 %v816, %v817
  %v819 = vsel %vm345, %v757, 0.0
  %v820 = vadd.f32 %v818, %v819
  %v821 = vsel %vm345, %v758, 0.0
  %v822 = vadd.f32 %v820, %v821
  %v823 = vsel %vm345, %v759, 0.0
  %v824 = vadd.f32 %v822, %v823
  %v825 = vsel %vm345, %v760, 0.0
  %v826 = vadd.f32 %v824, %v825
  %v827 = vsel %vm345, %v761, 0.0
  %v828 = vadd.f32 %v826, %v827
  %v829 = vsel %vm345, %v762, 0.0
  %v830 = vadd.f32 %v828, %v829
  %v831 = vsel %vm345, %v763, 0.0
  %v832 = vadd.f32 %v830, %v831
  %v833 = vsel %vm345, %v764, 0.0
  %v834 = vadd.f32 %v832, %v833
  %v835 = vsel %vm345, %v765, 0.0
  %v836 = vadd.f32 %v834, %v835
  %837 = vadd.xlane.f32.xlu0 %v836
  %v838 = vpop.xlane.xlu0 %837
  %v839 = vrot.slane %v838, 4
  %v840 = vadd.f32 %v838, %v839
  %v841 = vrot.slane %v840, 2
  %v842 = vadd.f32 %v840, %v841
  %v843 = vrot.slane %v842, 1
  %v844 = vadd.f32 %v842, %v843
  %s845 = vtos %v844
  %v846 = vld [vmem:[%s4] sm:$0xff]
  %v847 = vstv %s425
  %v848 = vadd.f32 %v846, %v847
  %849 = vst [vmem:[%s4] sm:$0xff] %v848
  %v850 = vld [vmem:[%s5] sm:$0xff]
  %v851 = vstv %s541
  %v852 = vadd.f32 %v850, %v851
  %853 = vst [vmem:[%s5] sm:$0xff] %v852
  %v854 = vld [vmem:[%s6] sm:$0xff]
  %v855 = vstv %s693
  %v856 = vadd.f32 %v854, %v855
  %857 = vst [vmem:[%s6] sm:$0xff] %v856
  %v858 = vld [vmem:[%s7] sm:$0xff]
  %v859 = vstv %s845
  %v860 = vadd.f32 %v858, %v859
  %861 = vst [vmem:[%s7] sm:$0xff] %v860
  // Predicated region
  $region22: #{_lambda_.6} parent=0 // pred_check
    _
  $region23: #{_lambda_.6} parent=0 // pred_check_branch
    %863 = sbr.rel (0) target = $region25
  $region24: #{_lambda_.6} parent=0 // pred_region
    _
  $region25: #{_lambda_.6} parent=0 // pred_fallthru
    _
  // Predicated region
  $region26: #{_lambda_.6} parent=0 // pred_check
    _
  $region27: #{_lambda_.6} parent=0 // pred_check_branch
    %865 = sbr.rel (0) target = $region29
  $region28: #{_lambda_.6} parent=0 // pred_region
    _
  $region29: #{_lambda_.6} parent=0 // pred_fallthru
    _
  // Predicated region
  $region30: #{_lambda_.6} parent=0 // pred_check
    _
  $region31: #{_lambda_.6} parent=0 // pred_check_branch
    %867 = sbr.rel (0) target = $region33
  $region32: #{_lambda_.6} parent=0 // pred_region
    _
  $region33: #{_lambda_.6} parent=0 // pred_fallthru
    _
  // Predicated region
  $region34: #{_lambda_.6} parent=0 // pred_check
    _
  $region35: #{_lambda_.6} parent=0 // pred_check_branch
    %869 = sbr.rel (0) target = $region37
  $region36: #{_lambda_.6} parent=0 // pred_region
    _
  $region37: #{_lambda_.6} parent=0 // pred_fallthru
    _
  // Predicated region
  $region38: #{_lambda_.6} parent=0 // pred_check
    _
  $region39: #{_lambda_.6} parent=0 // pred_check_branch
    %871 = sbr.rel (0) target = $region41
  $region40: #{_lambda_.6} parent=0 // pred_region
    _
  $region41: #{_lambda_.6} parent=0 // pred_fallthru
    _
  // Predicated region
  $region42: #{_lambda_.6} parent=0 // pred_check
    _
  $region43: #{_lambda_.6} parent=0 // pred_check_branch
    %873 = sbr.rel (0) target = $region45
  $region44: #{_lambda_.6} parent=0 // pred_region
    _
  $region45: #{_lambda_.6} parent=0 // pred_fallthru
    _
  // Predicated region
  $region46: #{_lambda_.6} parent=0 // pred_check
    _
  $region47: #{_lambda_.6} parent=0 // pred_check_branch
    %875 = sbr.rel (0) target = $region49
  $region48: #{_lambda_.6} parent=0 // pred_region
    _
  $region49: #{_lambda_.6} parent=0 // pred_fallthru
    _
  // Predicated region
  $region50: #{_lambda_.6} parent=0 // pred_check
    _
  $region51: #{_lambda_.6} parent=0 // pred_check_branch
    %877 = sbr.rel (0) target = $region53
  $region52: #{_lambda_.6} parent=0 // pred_region
    _
  $region53: #{_lambda_.6} parent=0 // pred_fallthru
    _

// kernel: _lambda_.8
$region0: #{_lambda_.8}
  #allocation0 [shape = 'u32[]', space=smem, size = 0x4, offset = 0x4, fixed_abs, tag = 'smem constant byte address 0x4 - core index']
  #allocation1 [shape = 'u32[72,128]{1,0:T(1,128)}', space=vmem, size = 0x9000, scoped, tag = 'internal scratch']
  %s0 = inlined_call_operand.vmem [shape: f32[12,16,16], index: 0, kind: input, shape index: {}]
  %s1 = inlined_call_operand.vmem [shape: f32[12,16,16], index: 1, kind: input, shape index: {}]
  %s2 = inlined_call_operand.vmem [shape: f32[1,8,128], index: 2, kind: output, shape index: {0}]
  %s3 = inlined_call_operand.vmem [shape: f32[1,8,128], index: 3, kind: output, shape index: {1}]
  %s4 = inlined_call_operand.vmem [shape: f32[1,8,128], index: 4, kind: output, shape index: {2}]
  %s5 = inlined_call_operand.vmem [shape: f32[1,8,128], index: 5, kind: output, shape index: {3}]
  %6 = xla_tuple %s2, %s3, %s4, %s5
  %s7 = sld [smem:[#allocation0]]
  $region46: #{_lambda_.8} parent=0
    _
  %s9 = ssub.s32 1, %s7
  %s10 = scalar_select 0, %s9, %s7
  // Predicated region
  $region2: #{_lambda_.8} parent=0 // pred_check
    _
  $region3: #{_lambda_.8} parent=0 // pred_check_branch
    %12 = sbr.rel (0) target = $region5
  $region4: #{_lambda_.8} parent=0 // pred_region
    %s13 = sadd.s32 0, 0
    %s14 = smul.u32 12, %s13
    %p15 = scmp.lt.s32.totalorder %s14, 11
    %s16 = scalar_select %p15, %s14, 11
    %s17 = smul.addr %s16, 2
    %s18 = smul.addr %s17, 8
    %s19 = scalar_lea.vmem %s0, %s18
    %s20 = sadd.s32 0, 0
    %s21 = smul.u32 12, %s20
  $region5: #{_lambda_.8} parent=0 // pred_fallthru
    _
  // Predicated region
  $region6: #{_lambda_.8} parent=0 // pred_check
    _
  $region7: #{_lambda_.8} parent=0 // pred_check_branch
    %23 = sbr.rel (0) target = $region9
  $region8: #{_lambda_.8} parent=0 // pred_region
    %s24 = sadd.s32 0, 0
    %s25 = smul.u32 12, %s24
    %p26 = scmp.lt.s32.totalorder %s25, 11
    %s27 = scalar_select %p26, %s25, 11
    %s28 = smul.addr %s27, 2
    %s29 = smul.addr %s28, 8
    %s30 = scalar_lea.vmem %s1, %s29
    %s31 = sadd.s32 0, 0
    %s32 = smul.u32 12, %s31
  $region9: #{_lambda_.8} parent=0 // pred_fallthru
    _
  %s33 = sadd.s32 0, 0
  %s34 = smul.u32 12, %s33
  %p35 = scmp.lt.s32.totalorder %s34, 11
  %s36 = scalar_select %p35, %s34, 11
  %s37 = smul.addr %s36, 2
  %s38 = smul.addr %s37, 8
  %s39 = scalar_lea.vmem %s0, %s38
  %s40 = sadd.s32 0, 0
  %s41 = smul.u32 12, %s40
  %p42 = scmp.lt.s32.totalorder %s41, 11
  %s43 = scalar_select %p42, %s41, 11
  %s44 = smul.addr %s43, 2
  %s45 = smul.addr %s44, 8
  %s46 = scalar_lea.vmem %s1, %s45
  %s47 = sadd.s32 0, 0
  %s48 = smul.u32 12, %s47
  %p49 = scmp.lt.s32.totalorder %s48, 11
  %s50 = scalar_select %p49, %s48, 11
  %s51 = smul.addr %s50, 2
  %s52 = smul.addr %s51, 8
  %s53 = scalar_lea.vmem %s0, %s52
  %s54 = sadd.s32 0, 0
  %s55 = smul.u32 12, %s54
  %s56 = sadd.s32 0, 0
  %s57 = smul.u32 12, %s56
  %p58 = scmp.lt.s32.totalorder %s57, 11
  %s59 = scalar_select %p58, %s57, 11
  %s60 = smul.addr %s59, 2
  %s61 = smul.addr %s60, 8
  %s62 = scalar_lea.vmem %s1, %s61
  %s63 = sadd.s32 0, 0
  %s64 = smul.u32 12, %s63
  %p65 = scmp.eq.s32.totalorder 0, 0
  // Predicated region
  $region10: #{_lambda_.8} parent=0 // pred_check
    %p66 = pneg %p65
  $region11: #{_lambda_.8} parent=0 // pred_check_branch
    %68 = sbr.rel (%p66) target = $region13
  $region12: #{_lambda_.8} parent=0 // pred_region
    %69 = vst [vmem:[%s2] sm:$0xff] 0.0
    %70 = vst [vmem:[%s3] sm:$0xff] 0.0
    %71 = vst [vmem:[%s4] sm:$0xff] 0.0
    %72 = vst [vmem:[%s5] sm:$0xff] 0.0
  $region13: #{_lambda_.8} parent=0 // pred_fallthru
    _
  %v73 = vld [vmem:[%s53] sm:$0xff]
  %v74 = vld [vmem:[%s53 + $0x8] sm:$0xff]
  %v75 = vld [vmem:[%s53 + $0x10] sm:$0xff]
  %v76 = vld [vmem:[%s53 + $0x18] sm:$0xff]
  %v77 = vld [vmem:[%s53 + $0x20] sm:$0xff]
  %v78 = vld [vmem:[%s53 + $0x28] sm:$0xff]
  %v79 = vld [vmem:[%s53 + $0x30] sm:$0xff]
  %v80 = vld [vmem:[%s53 + $0x38] sm:$0xff]
  %v81 = vld [vmem:[%s53 + $0x40] sm:$0xff]
  %v82 = vld [vmem:[%s53 + $0x48] sm:$0xff]
  %v83 = vld [vmem:[%s53 + $0x50] sm:$0xff]
  %v84 = vld [vmem:[%s53 + $0x58] sm:$0xff]
  %v85 = vld [vmem:[%s53 + $0x60] sm:$0xff]
  %v86 = vld [vmem:[%s53 + $0x68] sm:$0xff]
  %v87 = vld [vmem:[%s53 + $0x70] sm:$0xff]
  %v88 = vld [vmem:[%s53 + $0x78] sm:$0xff]
  %v89 = vld [vmem:[%s53 + $0x80] sm:$0xff]
  %v90 = vld [vmem:[%s53 + $0x88] sm:$0xff]
  %v91 = vld [vmem:[%s53 + $0x90] sm:$0xff]
  %v92 = vld [vmem:[%s53 + $0x98] sm:$0xff]
  %v93 = vld [vmem:[%s53 + $0xa0] sm:$0xff]
  %v94 = vld [vmem:[%s53 + $0xa8] sm:$0xff]
  %v95 = vld [vmem:[%s53 + $0xb0] sm:$0xff]
  %v96 = vld [vmem:[%s53 + $0xb8] sm:$0xff]
  %v97 = vld [vmem:[%s62] sm:$0xff]
  %v98 = vld [vmem:[%s62 + $0x8] sm:$0xff]
  %v99 = vld [vmem:[%s62 + $0x10] sm:$0xff]
  %v100 = vld [vmem:[%s62 + $0x18] sm:$0xff]
  %v101 = vld [vmem:[%s62 + $0x20] sm:$0xff]
  %v102 = vld [vmem:[%s62 + $0x28] sm:$0xff]
  %v103 = vld [vmem:[%s62 + $0x30] sm:$0xff]
  %v104 = vld [vmem:[%s62 + $0x38] sm:$0xff]
  %v105 = vld [vmem:[%s62 + $0x40] sm:$0xff]
  %v106 = vld [vmem:[%s62 + $0x48] sm:$0xff]
  %v107 = vld [vmem:[%s62 + $0x50] sm:$0xff]
  %v108 = vld [vmem:[%s62 + $0x58] sm:$0xff]
  %v109 = vld [vmem:[%s62 + $0x60] sm:$0xff]
  %v110 = vld [vmem:[%s62 + $0x68] sm:$0xff]
  %v111 = vld [vmem:[%s62 + $0x70] sm:$0xff]
  %v112 = vld [vmem:[%s62 + $0x78] sm:$0xff]
  %v113 = vld [vmem:[%s62 + $0x80] sm:$0xff]
  %v114 = vld [vmem:[%s62 + $0x88] sm:$0xff]
  %v115 = vld [vmem:[%s62 + $0x90] sm:$0xff]
  %v116 = vld [vmem:[%s62 + $0x98] sm:$0xff]
  %v117 = vld [vmem:[%s62 + $0xa0] sm:$0xff]
  %v118 = vld [vmem:[%s62 + $0xa8] sm:$0xff]
  %v119 = vld [vmem:[%s62 + $0xb0] sm:$0xff]
  %v120 = vld [vmem:[%s62 + $0xb8] sm:$0xff]
  %145 = vrot.lane.b32.xlu0 %v73, 1
  %v146 = vpop.permute.xlu0 %145
  %147 = vrot.lane.b32.xlu0 %v74, 1
  %v148 = vpop.permute.xlu0 %147
  %149 = vrot.lane.b32.xlu0 %v75, 1
  %v150 = vpop.permute.xlu0 %149
  %151 = vrot.lane.b32.xlu0 %v76, 1
  %v152 = vpop.permute.xlu0 %151
  %153 = vrot.lane.b32.xlu0 %v77, 1
  %v154 = vpop.permute.xlu0 %153
  %155 = vrot.lane.b32.xlu0 %v78, 1
  %v156 = vpop.permute.xlu0 %155
  %157 = vrot.lane.b32.xlu0 %v79, 1
  %v158 = vpop.permute.xlu0 %157
  %159 = vrot.lane.b32.xlu0 %v80, 1
  %v160 = vpop.permute.xlu0 %159
  %161 = vrot.lane.b32.xlu0 %v81, 1
  %v162 = vpop.permute.xlu0 %161
  %163 = vrot.lane.b32.xlu0 %v82, 1
  %v164 = vpop.permute.xlu0 %163
  %165 = vrot.lane.b32.xlu0 %v83, 1
  %v166 = vpop.permute.xlu0 %165
  %167 = vrot.lane.b32.xlu0 %v84, 1
  %v168 = vpop.permute.xlu0 %167
  %169 = vrot.lane.b32.xlu0 %v85, 1
  %v170 = vpop.permute.xlu0 %169
  %171 = vrot.lane.b32.xlu0 %v86, 1
  %v172 = vpop.permute.xlu0 %171
  %173 = vrot.lane.b32.xlu0 %v87, 1
  %v174 = vpop.permute.xlu0 %173
  %175 = vrot.lane.b32.xlu0 %v88, 1
  %v176 = vpop.permute.xlu0 %175
  %177 = vrot.lane.b32.xlu0 %v89, 1
  %v178 = vpop.permute.xlu0 %177
  %179 = vrot.lane.b32.xlu0 %v90, 1
  %v180 = vpop.permute.xlu0 %179
  %181 = vrot.lane.b32.xlu0 %v91, 1
  %v182 = vpop.permute.xlu0 %181
  %183 = vrot.lane.b32.xlu0 %v92, 1
  %v184 = vpop.permute.xlu0 %183
  %185 = vrot.lane.b32.xlu0 %v93, 1
  %v186 = vpop.permute.xlu0 %185
  %187 = vrot.lane.b32.xlu0 %v94, 1
  %v188 = vpop.permute.xlu0 %187
  %189 = vrot.lane.b32.xlu0 %v95, 1
  %v190 = vpop.permute.xlu0 %189
  %191 = vrot.lane.b32.xlu0 %v96, 1
  %v192 = vpop.permute.xlu0 %191
  %v217 = vsub.f32 %v73, %v146
  %v218 = vsub.f32 %v74, %v148
  %v219 = vsub.f32 %v75, %v150
  %v220 = vsub.f32 %v76, %v152
  %v221 = vsub.f32 %v77, %v154
  %v222 = vsub.f32 %v78, %v156
  %v223 = vsub.f32 %v79, %v158
  %v224 = vsub.f32 %v80, %v160
  %v225 = vsub.f32 %v81, %v162
  %v226 = vsub.f32 %v82, %v164
  %v227 = vsub.f32 %v83, %v166
  %v228 = vsub.f32 %v84, %v168
  %v229 = vsub.f32 %v85, %v170
  %v230 = vsub.f32 %v86, %v172
  %v231 = vsub.f32 %v87, %v174
  %v232 = vsub.f32 %v88, %v176
  %v233 = vsub.f32 %v89, %v178
  %v234 = vsub.f32 %v90, %v180
  %v235 = vsub.f32 %v91, %v182
  %v236 = vsub.f32 %v92, %v184
  %v237 = vsub.f32 %v93, %v186
  %v238 = vsub.f32 %v94, %v188
  %v239 = vsub.f32 %v95, %v190
  %v240 = vsub.f32 %v96, %v192
  %vm241 = vcmask 1040384
  %v242 = vrot.slane %v73, 7
  %v243 = vrot.slane %v74, 7
  %v244 = vsel %vm241, %v242, %v243
  %v245 = vrot.slane %v75, 7
  %v246 = vrot.slane %v76, 7
  %v247 = vsel %vm241, %v245, %v246
  %v248 = vrot.slane %v77, 7
  %v249 = vrot.slane %v78, 7
  %v250 = vsel %vm241, %v248, %v249
  %v251 = vrot.slane %v79, 7
  %v252 = vrot.slane %v80, 7
  %v253 = vsel %vm241, %v251, %v252
  %v254 = vrot.slane %v81, 7
  %v255 = vrot.slane %v82, 7
  %v256 = vsel %vm241, %v254, %v255
  %v257 = vrot.slane %v83, 7
  %v258 = vrot.slane %v84, 7
  %v259 = vsel %vm241, %v257, %v258
  %v260 = vrot.slane %v85, 7
  %v261 = vrot.slane %v86, 7
  %v262 = vsel %vm241, %v260, %v261
  %v263 = vrot.slane %v87, 7
  %v264 = vrot.slane %v88, 7
  %v265 = vsel %vm241, %v263, %v264
  %v266 = vrot.slane %v89, 7
  %v267 = vrot.slane %v90, 7
  %v268 = vsel %vm241, %v266, %v267
  %v269 = vrot.slane %v91, 7
  %v270 = vrot.slane %v92, 7
  %v271 = vsel %vm241, %v269, %v270
  %v272 = vrot.slane %v93, 7
  %v273 = vrot.slane %v94, 7
  %v274 = vsel %vm241, %v272, %v273
  %v275 = vrot.slane %v95, 7
  %v276 = vrot.slane %v96, 7
  %v277 = vsel %vm241, %v275, %v276
  %v302 = vsub.f32 %v73, %v242
  %v303 = vsub.f32 %v74, %v244
  %v304 = vsub.f32 %v75, %v245
  %v305 = vsub.f32 %v76, %v247
  %v306 = vsub.f32 %v77, %v248
  %v307 = vsub.f32 %v78, %v250
  %v308 = vsub.f32 %v79, %v251
  %v309 = vsub.f32 %v80, %v253
  %v310 = vsub.f32 %v81, %v254
  %v311 = vsub.f32 %v82, %v256
  %v312 = vsub.f32 %v83, %v257
  %v313 = vsub.f32 %v84, %v259
  %v314 = vsub.f32 %v85, %v260
  %v315 = vsub.f32 %v86, %v262
  %v316 = vsub.f32 %v87, %v263
  %v317 = vsub.f32 %v88, %v265
  %v318 = vsub.f32 %v89, %v266
  %v319 = vsub.f32 %v90, %v268
  %v320 = vsub.f32 %v91, %v269
  %v321 = vsub.f32 %v92, %v271
  %v322 = vsub.f32 %v93, %v272
  %v323 = vsub.f32 %v94, %v274
  %v324 = vsub.f32 %v95, %v275
  %v325 = vsub.f32 %v96, %v277
  %v326 = vand.u32 2147483647, %v217
  %v327 = vand.u32 2147483647, %v218
  %v328 = vand.u32 2147483647, %v219
  %v329 = vand.u32 2147483647, %v220
  %v330 = vand.u32 2147483647, %v221
  %v331 = vand.u32 2147483647, %v222
  %v332 = vand.u32 2147483647, %v223
  %v333 = vand.u32 2147483647, %v224
  %v334 = vand.u32 2147483647, %v225
  %v335 = vand.u32 2147483647, %v226
  %v336 = vand.u32 2147483647, %v227
  %v337 = vand.u32 2147483647, %v228
  %v338 = vand.u32 2147483647, %v229
  %v339 = vand.u32 2147483647, %v230
  %v340 = vand.u32 2147483647, %v231
  %v341 = vand.u32 2147483647, %v232
  %v342 = vand.u32 2147483647, %v233
  %v343 = vand.u32 2147483647, %v234
  %v344 = vand.u32 2147483647, %v235
  %v345 = vand.u32 2147483647, %v236
  %v346 = vand.u32 2147483647, %v237
  %v347 = vand.u32 2147483647, %v238
  %v348 = vand.u32 2147483647, %v239
  %v349 = vand.u32 2147483647, %v240
  %374 = vrot.lane.b32.xlu0 %v326, 127
  %v375 = vpop.permute.xlu0 %374
  %376 = vrot.lane.b32.xlu0 %v327, 127
  %v377 = vpop.permute.xlu0 %376
  %378 = vrot.lane.b32.xlu0 %v328, 127
  %v379 = vpop.permute.xlu0 %378
  %380 = vrot.lane.b32.xlu0 %v329, 127
  %v381 = vpop.permute.xlu0 %380
  %382 = vrot.lane.b32.xlu0 %v330, 127
  %v383 = vpop.permute.xlu0 %382
  %384 = vrot.lane.b32.xlu0 %v331, 127
  %v385 = vpop.permute.xlu0 %384
  %386 = vrot.lane.b32.xlu0 %v332, 127
  %v387 = vpop.permute.xlu0 %386
  %388 = vrot.lane.b32.xlu0 %v333, 127
  %v389 = vpop.permute.xlu0 %388
  %390 = vrot.lane.b32.xlu0 %v334, 127
  %v391 = vpop.permute.xlu0 %390
  %392 = vrot.lane.b32.xlu0 %v335, 127
  %v393 = vpop.permute.xlu0 %392
  %394 = vrot.lane.b32.xlu0 %v336, 127
  %v395 = vpop.permute.xlu0 %394
  %396 = vrot.lane.b32.xlu0 %v337, 127
  %v397 = vpop.permute.xlu0 %396
  %398 = vrot.lane.b32.xlu0 %v338, 127
  %v399 = vpop.permute.xlu0 %398
  %400 = vrot.lane.b32.xlu0 %v339, 127
  %v401 = vpop.permute.xlu0 %400
  %402 = vrot.lane.b32.xlu0 %v340, 127
  %v403 = vpop.permute.xlu0 %402
  %404 = vrot.lane.b32.xlu0 %v341, 127
  %v405 = vpop.permute.xlu0 %404
  %406 = vrot.lane.b32.xlu0 %v342, 127
  %v407 = vpop.permute.xlu0 %406
  %408 = vrot.lane.b32.xlu0 %v343, 127
  %v409 = vpop.permute.xlu0 %408
  %410 = vrot.lane.b32.xlu0 %v344, 127
  %v411 = vpop.permute.xlu0 %410
  %412 = vrot.lane.b32.xlu0 %v345, 127
  %v413 = vpop.permute.xlu0 %412
  %414 = vrot.lane.b32.xlu0 %v346, 127
  %v415 = vpop.permute.xlu0 %414
  %416 = vrot.lane.b32.xlu0 %v347, 127
  %v417 = vpop.permute.xlu0 %416
  %418 = vrot.lane.b32.xlu0 %v348, 127
  %v419 = vpop.permute.xlu0 %418
  %420 = vrot.lane.b32.xlu0 %v349, 127
  %v421 = vpop.permute.xlu0 %420
  %vm446 = vcmask 121856
  %v447 = vsel %vm446, %v375, 0.0
  %v448 = vsel %vm446, %v377, 0.0
  %v449 = vadd.f32 %v447, %v448
  %v450 = vsel %vm446, %v379, 0.0
  %v451 = vadd.f32 %v449, %v450
  %v452 = vsel %vm446, %v381, 0.0
  %v453 = vadd.f32 %v451, %v452
  %v454 = vsel %vm446, %v383, 0.0
  %v455 = vadd.f32 %v453, %v454
  %v456 = vsel %vm446, %v385, 0.0
  %v457 = vadd.f32 %v455, %v456
  %v458 = vsel %vm446, %v387, 0.0
  %v459 = vadd.f32 %v457, %v458
  %v460 = vsel %vm446, %v389, 0.0
  %v461 = vadd.f32 %v459, %v460
  %v462 = vsel %vm446, %v391, 0.0
  %v463 = vadd.f32 %v461, %v462
  %v464 = vsel %vm446, %v393, 0.0
  %v465 = vadd.f32 %v463, %v464
  %v466 = vsel %vm446, %v395, 0.0
  %v467 = vadd.f32 %v465, %v466
  %v468 = vsel %vm446, %v397, 0.0
  %v469 = vadd.f32 %v467, %v468
  %v470 = vsel %vm446, %v399, 0.0
  %v471 = vadd.f32 %v469, %v470
  %v472 = vsel %vm446, %v401, 0.0
  %v473 = vadd.f32 %v471, %v472
  %v474 = vsel %vm446, %v403, 0.0
  %v475 = vadd.f32 %v473, %v474
  %v476 = vsel %vm446, %v405, 0.0
  %v477 = vadd.f32 %v475, %v476
  %v478 = vsel %vm446, %v407, 0.0
  %v479 = vadd.f32 %v477, %v478
  %v480 = vsel %vm446, %v409, 0.0
  %v481 = vadd.f32 %v479, %v480
  %v482 = vsel %vm446, %v411, 0.0
  %v483 = vadd.f32 %v481, %v482
  %v484 = vsel %vm446, %v413, 0.0
  %v485 = vadd.f32 %v483, %v484
  %v486 = vsel %vm446, %v415, 0.0
  %v487 = vadd.f32 %v485, %v486
  %v488 = vsel %vm446, %v417, 0.0
  %v489 = vadd.f32 %v487, %v488
  %v490 = vsel %vm446, %v419, 0.0
  %v491 = vadd.f32 %v489, %v490
  %v492 = vsel %vm446, %v421, 0.0
  %v493 = vadd.f32 %v491, %v492
  %494 = vadd.xlane.f32.xlu0 %v493
  %v495 = vpop.xlane.xlu0 %494
  %v496 = vrot.slane %v495, 4
  %v497 = vadd.f32 %v495, %v496
  %v498 = vrot.slane %v497, 2
  %v499 = vadd.f32 %v497, %v498
  %v500 = vrot.slane %v499, 1
  %v501 = vadd.f32 %v499, %v500
  %s502 = vtos %v501
  %v503 = vand.u32 2147483647, %v302
  %v504 = vand.u32 2147483647, %v303
  %v505 = vand.u32 2147483647, %v304
  %v506 = vand.u32 2147483647, %v305
  %v507 = vand.u32 2147483647, %v306
  %v508 = vand.u32 2147483647, %v307
  %v509 = vand.u32 2147483647, %v308
  %v510 = vand.u32 2147483647, %v309
  %v511 = vand.u32 2147483647, %v310
  %v512 = vand.u32 2147483647, %v311
  %v513 = vand.u32 2147483647, %v312
  %v514 = vand.u32 2147483647, %v313
  %v515 = vand.u32 2147483647, %v314
  %v516 = vand.u32 2147483647, %v315
  %v517 = vand.u32 2147483647, %v316
  %v518 = vand.u32 2147483647, %v317
  %v519 = vand.u32 2147483647, %v318
  %v520 = vand.u32 2147483647, %v319
  %v521 = vand.u32 2147483647, %v320
  %v522 = vand.u32 2147483647, %v321
  %v523 = vand.u32 2147483647, %v322
  %v524 = vand.u32 2147483647, %v323
  %v525 = vand.u32 2147483647, %v324
  %v526 = vand.u32 2147483647, %v325
  %vm551 = vcmask 1046528
  %v552 = vrot.slane %v503, 1
  %v553 = vrot.slane %v504, 1
  %v554 = vsel %vm551, %v552, %v553
  %v555 = vrot.slane %v505, 1
  %v556 = vrot.slane %v506, 1
  %v557 = vsel %vm551, %v555, %v556
  %v558 = vrot.slane %v507, 1
  %v559 = vrot.slane %v508, 1
  %v560 = vsel %vm551, %v558, %v559
  %v561 = vrot.slane %v509, 1
  %v562 = vrot.slane %v510, 1
  %v563 = vsel %vm551, %v561, %v562
  %v564 = vrot.slane %v511, 1
  %v565 = vrot.slane %v512, 1
  %v566 = vsel %vm551, %v564, %v565
  %v567 = vrot.slane %v513, 1
  %v568 = vrot.slane %v514, 1
  %v569 = vsel %vm551, %v567, %v568
  %v570 = vrot.slane %v515, 1
  %v571 = vrot.slane %v516, 1
  %v572 = vsel %vm551, %v570, %v571
  %v573 = vrot.slane %v517, 1
  %v574 = vrot.slane %v518, 1
  %v575 = vsel %vm551, %v573, %v574
  %v576 = vrot.slane %v519, 1
  %v577 = vrot.slane %v520, 1
  %v578 = vsel %vm551, %v576, %v577
  %v579 = vrot.slane %v521, 1
  %v580 = vrot.slane %v522, 1
  %v581 = vsel %vm551, %v579, %v580
  %v582 = vrot.slane %v523, 1
  %v583 = vrot.slane %v524, 1
  %v584 = vsel %vm551, %v582, %v583
  %v585 = vrot.slane %v525, 1
  %v586 = vrot.slane %v526, 1
  %v587 = vsel %vm551, %v585, %v586
  %vm612 = vcmask 130048
  %v613 = vsel %vm612, %v554, 0.0
  %vm614 = vcmask 129024
  %v615 = vsel %vm614, %v553, 0.0
  %v616 = vadd.f32 %v613, %v615
  %v617 = vsel %vm612, %v557, 0.0
  %v618 = vadd.f32 %v616, %v617
  %v619 = vsel %vm614, %v556, 0.0
  %v620 = vadd.f32 %v618, %v619
  %v621 = vsel %vm612, %v560, 0.0
  %v622 = vadd.f32 %v620, %v621
  %v623 = vsel %vm614, %v559, 0.0
  %v624 = vadd.f32 %v622, %v623
  %v625 = vsel %vm612, %v563, 0.0
  %v626 = vadd.f32 %v624, %v625
  %v627 = vsel %vm614, %v562, 0.0
  %v628 = vadd.f32 %v626, %v627
  %v629 = vsel %vm612, %v566, 0.0
  %v630 = vadd.f32 %v628, %v629
  %v631 = vsel %vm614, %v565, 0.0
  %v632 = vadd.f32 %v630, %v631
  %v633 = vsel %vm612, %v569, 0.0
  %v634 = vadd.f32 %v632, %v633
  %v635 = vsel %vm614, %v568, 0.0
  %v636 = vadd.f32 %v634, %v635
  %v637 = vsel %vm612, %v572, 0.0
  %v638 = vadd.f32 %v636, %v637
  %v639 = vsel %vm614, %v571, 0.0
  %v640 = vadd.f32 %v638, %v639
  %v641 = vsel %vm612, %v575, 0.0
  %v642 = vadd.f32 %v640, %v641
  %v643 = vsel %vm614, %v574, 0.0
  %v644 = vadd.f32 %v642, %v643
  %v645 = vsel %vm612, %v578, 0.0
  %v646 = vadd.f32 %v644, %v645
  %v647 = vsel %vm614, %v577, 0.0
  %v648 = vadd.f32 %v646, %v647
  %v649 = vsel %vm612, %v581, 0.0
  %v650 = vadd.f32 %v648, %v649
  %v651 = vsel %vm614, %v580, 0.0
  %v652 = vadd.f32 %v650, %v651
  %v653 = vsel %vm612, %v584, 0.0
  %v654 = vadd.f32 %v652, %v653
  %v655 = vsel %vm614, %v583, 0.0
  %v656 = vadd.f32 %v654, %v655
  %v657 = vsel %vm612, %v587, 0.0
  %v658 = vadd.f32 %v656, %v657
  %v659 = vsel %vm614, %v586, 0.0
  %v660 = vadd.f32 %v658, %v659
  %661 = vadd.xlane.f32.xlu0 %v660
  %v662 = vpop.xlane.xlu0 %661
  %v663 = vrot.slane %v662, 4
  %v664 = vadd.f32 %v662, %v663
  %v665 = vrot.slane %v664, 2
  %v666 = vadd.f32 %v664, %v665
  %v667 = vrot.slane %v666, 1
  %v668 = vadd.f32 %v666, %v667
  %s669 = vtos %v668
  %694 = vrot.lane.b32.xlu0 %v97, 1
  %v695 = vpop.permute.xlu0 %694
  %696 = vrot.lane.b32.xlu0 %v98, 1
  %v697 = vpop.permute.xlu0 %696
  %698 = vrot.lane.b32.xlu0 %v99, 1
  %v699 = vpop.permute.xlu0 %698
  %700 = vrot.lane.b32.xlu0 %v100, 1
  %v701 = vpop.permute.xlu0 %700
  %702 = vrot.lane.b32.xlu0 %v101, 1
  %v703 = vpop.permute.xlu0 %702
  %704 = vrot.lane.b32.xlu0 %v102, 1
  %v705 = vpop.permute.xlu0 %704
  %706 = vrot.lane.b32.xlu0 %v103, 1
  %v707 = vpop.permute.xlu0 %706
  %708 = vrot.lane.b32.xlu0 %v104, 1
  %v709 = vpop.permute.xlu0 %708
  %710 = vrot.lane.b32.xlu0 %v105, 1
  %v711 = vpop.permute.xlu0 %710
  %712 = vrot.lane.b32.xlu0 %v106, 1
  %v713 = vpop.permute.xlu0 %712
  %714 = vrot.lane.b32.xlu0 %v107, 1
  %v715 = vpop.permute.xlu0 %714
  %716 = vrot.lane.b32.xlu0 %v108, 1
  %v717 = vpop.permute.xlu0 %716
  %718 = vrot.lane.b32.xlu0 %v109, 1
  %v719 = vpop.permute.xlu0 %718
  %720 = vrot.lane.b32.xlu0 %v110, 1
  %v721 = vpop.permute.xlu0 %720
  %722 = vrot.lane.b32.xlu0 %v111, 1
  %v723 = vpop.permute.xlu0 %722
  %724 = vrot.lane.b32.xlu0 %v112, 1
  %v725 = vpop.permute.xlu0 %724
  %726 = vrot.lane.b32.xlu0 %v113, 1
  %v727 = vpop.permute.xlu0 %726
  %728 = vrot.lane.b32.xlu0 %v114, 1
  %v729 = vpop.permute.xlu0 %728
  %730 = vrot.lane.b32.xlu0 %v115, 1
  %v731 = vpop.permute.xlu0 %730
  %732 = vrot.lane.b32.xlu0 %v116, 1
  %v733 = vpop.permute.xlu0 %732
  %734 = vrot.lane.b32.xlu0 %v117, 1
  %v735 = vpop.permute.xlu0 %734
  %736 = vrot.lane.b32.xlu0 %v118, 1
  %v737 = vpop.permute.xlu0 %736
  %738 = vrot.lane.b32.xlu0 %v119, 1
  %v739 = vpop.permute.xlu0 %738
  %740 = vrot.lane.b32.xlu0 %v120, 1
  %v741 = vpop.permute.xlu0 %740
  %v766 = vsub.f32 %v97, %v695
  %v767 = vsub.f32 %v98, %v697
  %v768 = vsub.f32 %v99, %v699
  %v769 = vsub.f32 %v100, %v701
  %v770 = vsub.f32 %v101, %v703
  %v771 = vsub.f32 %v102, %v705
  %v772 = vsub.f32 %v103, %v707
  %v773 = vsub.f32 %v104, %v709
  %v774 = vsub.f32 %v105, %v711
  %v775 = vsub.f32 %v106, %v713
  %v776 = vsub.f32 %v107, %v715
  %v777 = vsub.f32 %v108, %v717
  %v778 = vsub.f32 %v109, %v719
  %v779 = vsub.f32 %v110, %v721
  %v780 = vsub.f32 %v111, %v723
  %v781 = vsub.f32 %v112, %v725
  %v782 = vsub.f32 %v113, %v727
  %v783 = vsub.f32 %v114, %v729
  %v784 = vsub.f32 %v115, %v731
  %v785 = vsub.f32 %v116, %v733
  %v786 = vsub.f32 %v117, %v735
  %v787 = vsub.f32 %v118, %v737
  %v788 = vsub.f32 %v119, %v739
  %v789 = vsub.f32 %v120, %v741
  %v790 = vrot.slane %v97, 7
  %v791 = vrot.slane %v98, 7
  %v792 = vsel %vm241, %v790, %v791
  %v793 = vrot.slane %v99, 7
  %v794 = vrot.slane %v100, 7
  %v795 = vsel %vm241, %v793, %v794
  %v796 = vrot.slane %v101, 7
  %v797 = vrot.slane %v102, 7
  %v798 = vsel %vm241, %v796, %v797
  %v799 = vrot.slane %v103, 7
  %v800 = vrot.slane %v104, 7
  %v801 = vsel %vm241, %v799, %v800
  %v802 = vrot.slane %v105, 7
  %v803 = vrot.slane %v106, 7
  %v804 = vsel %vm241, %v802, %v803
  %v805 = vrot.slane %v107, 7
  %v806 = vrot.slane %v108, 7
  %v807 = vsel %vm241, %v805, %v806
  %v808 = vrot.slane %v109, 7
  %v809 = vrot.slane %v110, 7
  %v810 = vsel %vm241, %v808, %v809
  %v811 = vrot.slane %v111, 7
  %v812 = vrot.slane %v112, 7
  %v813 = vsel %vm241, %v811, %v812
  %v814 = vrot.slane %v113, 7
  %v815 = vrot.slane %v114, 7
  %v816 = vsel %vm241, %v814, %v815
  %v817 = vrot.slane %v115, 7
  %v818 = vrot.slane %v116, 7
  %v819 = vsel %vm241, %v817, %v818
  %v820 = vrot.slane %v117, 7
  %v821 = vrot.slane %v118, 7
  %v822 = vsel %vm241, %v820, %v821
  %v823 = vrot.slane %v119, 7
  %v824 = vrot.slane %v120, 7
  %v825 = vsel %vm241, %v823, %v824
  %v850 = vsub.f32 %v97, %v790
  %v851 = vsub.f32 %v98, %v792
  %v852 = vsub.f32 %v99, %v793
  %v853 = vsub.f32 %v100, %v795
  %v854 = vsub.f32 %v101, %v796
  %v855 = vsub.f32 %v102, %v798
  %v856 = vsub.f32 %v103, %v799
  %v857 = vsub.f32 %v104, %v801
  %v858 = vsub.f32 %v105, %v802
  %v859 = vsub.f32 %v106, %v804
  %v860 = vsub.f32 %v107, %v805
  %v861 = vsub.f32 %v108, %v807
  %v862 = vsub.f32 %v109, %v808
  %v863 = vsub.f32 %v110, %v810
  %v864 = vsub.f32 %v111, %v811
  %v865 = vsub.f32 %v112, %v813
  %v866 = vsub.f32 %v113, %v814
  %v867 = vsub.f32 %v114, %v816
  %v868 = vsub.f32 %v115, %v817
  %v869 = vsub.f32 %v116, %v819
  %v870 = vsub.f32 %v117, %v820
  %v871 = vsub.f32 %v118, %v822
  %v872 = vsub.f32 %v119, %v823
  %v873 = vsub.f32 %v120, %v825
  %v874 = vand.u32 2147483647, %v766
  %v875 = vand.u32 2147483647, %v767
  %v876 = vand.u32 2147483647, %v768
  %v877 = vand.u32 2147483647, %v769
  %v878 = vand.u32 2147483647, %v770
  %v879 = vand.u32 2147483647, %v771
  %v880 = vand.u32 2147483647, %v772
  %v881 = vand.u32 2147483647, %v773
  %v882 = vand.u32 2147483647, %v774
  %v883 = vand.u32 2147483647, %v775
  %v884 = vand.u32 2147483647, %v776
  %v885 = vand.u32 2147483647, %v777
  %v886 = vand.u32 2147483647, %v778
  %v887 = vand.u32 2147483647, %v779
  %v888 = vand.u32 2147483647, %v780
  %v889 = vand.u32 2147483647, %v781
  %v890 = vand.u32 2147483647, %v782
  %v891 = vand.u32 2147483647, %v783
  %v892 = vand.u32 2147483647, %v784
  %v893 = vand.u32 2147483647, %v785
  %v894 = vand.u32 2147483647, %v786
  %v895 = vand.u32 2147483647, %v787
  %v896 = vand.u32 2147483647, %v788
  %v897 = vand.u32 2147483647, %v789
  %922 = vrot.lane.b32.xlu0 %v874, 127
  %v923 = vpop.permute.xlu0 %922
  %924 = vrot.lane.b32.xlu0 %v875, 127
  %v925 = vpop.permute.xlu0 %924
  %926 = vrot.lane.b32.xlu0 %v876, 127
  %v927 = vpop.permute.xlu0 %926
  %928 = vrot.lane.b32.xlu0 %v877, 127
  %v929 = vpop.permute.xlu0 %928
  %930 = vrot.lane.b32.xlu0 %v878, 127
  %v931 = vpop.permute.xlu0 %930
  %932 = vrot.lane.b32.xlu0 %v879, 127
  %v933 = vpop.permute.xlu0 %932
  %934 = vrot.lane.b32.xlu0 %v880, 127
  %v935 = vpop.permute.xlu0 %934
  %936 = vrot.lane.b32.xlu0 %v881, 127
  %v937 = vpop.permute.xlu0 %936
  %938 = vrot.lane.b32.xlu0 %v882, 127
  %v939 = vpop.permute.xlu0 %938
  %940 = vrot.lane.b32.xlu0 %v883, 127
  %v941 = vpop.permute.xlu0 %940
  %942 = vrot.lane.b32.xlu0 %v884, 127
  %v943 = vpop.permute.xlu0 %942
  %944 = vrot.lane.b32.xlu0 %v885, 127
  %v945 = vpop.permute.xlu0 %944
  %946 = vrot.lane.b32.xlu0 %v886, 127
  %v947 = vpop.permute.xlu0 %946
  %948 = vrot.lane.b32.xlu0 %v887, 127
  %v949 = vpop.permute.xlu0 %948
  %950 = vrot.lane.b32.xlu0 %v888, 127
  %v951 = vpop.permute.xlu0 %950
  %952 = vrot.lane.b32.xlu0 %v889, 127
  %v953 = vpop.permute.xlu0 %952
  %954 = vrot.lane.b32.xlu0 %v890, 127
  %v955 = vpop.permute.xlu0 %954
  %956 = vrot.lane.b32.xlu0 %v891, 127
  %v957 = vpop.permute.xlu0 %956
  %958 = vrot.lane.b32.xlu0 %v892, 127
  %v959 = vpop.permute.xlu0 %958
  %960 = vrot.lane.b32.xlu0 %v893, 127
  %v961 = vpop.permute.xlu0 %960
  %962 = vrot.lane.b32.xlu0 %v894, 127
  %v963 = vpop.permute.xlu0 %962
  %964 = vrot.lane.b32.xlu0 %v895, 127
  %v965 = vpop.permute.xlu0 %964
  %966 = vrot.lane.b32.xlu0 %v896, 127
  %v967 = vpop.permute.xlu0 %966
  %968 = vrot.lane.b32.xlu0 %v897, 127
  %v969 = vpop.permute.xlu0 %968
  %v994 = vsel %vm446, %v923, 0.0
  %v995 = vsel %vm446, %v925, 0.0
  %v996 = vadd.f32 %v994, %v995
  %v997 = vsel %vm446, %v927, 0.0
  %v998 = vadd.f32 %v996, %v997
  %v999 = vsel %vm446, %v929, 0.0
  %v1000 = vadd.f32 %v998, %v999
  %v1001 = vsel %vm446, %v931, 0.0
  %v1002 = vadd.f32 %v1000, %v1001
  %v1003 = vsel %vm446, %v933, 0.0
  %v1004 = vadd.f32 %v1002, %v1003
  %v1005 = vsel %vm446, %v935, 0.0
  %v1006 = vadd.f32 %v1004, %v1005
  %v1007 = vsel %vm446, %v937, 0.0
  %v1008 = vadd.f32 %v1006, %v1007
  %v1009 = vsel %vm446, %v939, 0.0
  %v1010 = vadd.f32 %v1008, %v1009
  %v1011 = vsel %vm446, %v941, 0.0
  %v1012 = vadd.f32 %v1010, %v1011
  %v1013 = vsel %vm446, %v943, 0.0
  %v1014 = vadd.f32 %v1012, %v1013
  %v1015 = vsel %vm446, %v945, 0.0
  %v1016 = vadd.f32 %v1014, %v1015
  %v1017 = vsel %vm446, %v947, 0.0
  %v1018 = vadd.f32 %v1016, %v1017
  %v1019 = vsel %vm446, %v949, 0.0
  %v1020 = vadd.f32 %v1018, %v1019
  %v1021 = vsel %vm446, %v951, 0.0
  %v1022 = vadd.f32 %v1020, %v1021
  %v1023 = vsel %vm446, %v953, 0.0
  %v1024 = vadd.f32 %v1022, %v1023
  %v1025 = vsel %vm446, %v955, 0.0
  %v1026 = vadd.f32 %v1024, %v1025
  %v1027 = vsel %vm446, %v957, 0.0
  %v1028 = vadd.f32 %v1026, %v1027
  %v1029 = vsel %vm446, %v959, 0.0
  %v1030 = vadd.f32 %v1028, %v1029
  %v1031 = vsel %vm446, %v961, 0.0
  %v1032 = vadd.f32 %v1030, %v1031
  %v1033 = vsel %vm446, %v963, 0.0
  %v1034 = vadd.f32 %v1032, %v1033
  %v1035 = vsel %vm446, %v965, 0.0
  %v1036 = vadd.f32 %v1034, %v1035
  %v1037 = vsel %vm446, %v967, 0.0
  %v1038 = vadd.f32 %v1036, %v1037
  %v1039 = vsel %vm446, %v969, 0.0
  %v1040 = vadd.f32 %v1038, %v1039
  %1041 = vadd.xlane.f32.xlu0 %v1040
  %v1042 = vpop.xlane.xlu0 %1041
  %v1043 = vrot.slane %v1042, 4
  %v1044 = vadd.f32 %v1042, %v1043
  %v1045 = vrot.slane %v1044, 2
  %v1046 = vadd.f32 %v1044, %v1045
  %v1047 = vrot.slane %v1046, 1
  %v1048 = vadd.f32 %v1046, %v1047
  %s1049 = vtos %v1048
  %v1050 = vand.u32 2147483647, %v850
  %v1051 = vand.u32 2147483647, %v851
  %v1052 = vand.u32 2147483647, %v852
  %v1053 = vand.u32 2147483647, %v853
  %v1054 = vand.u32 2147483647, %v854
  %v1055 = vand.u32 2147483647, %v855
  %v1056 = vand.u32 2147483647, %v856
  %v1057 = vand.u32 2147483647, %v857
  %v1058 = vand.u32 2147483647, %v858
  %v1059 = vand.u32 2147483647, %v859
  %v1060 = vand.u32 2147483647, %v860
  %v1061 = vand.u32 2147483647, %v861
  %v1062 = vand.u32 2147483647, %v862
  %v1063 = vand.u32 2147483647, %v863
  %v1064 = vand.u32 2147483647, %v864
  %v1065 = vand.u32 2147483647, %v865
  %v1066 = vand.u32 2147483647, %v866
  %v1067 = vand.u32 2147483647, %v867
  %v1068 = vand.u32 2147483647, %v868
  %v1069 = vand.u32 2147483647, %v869
  %v1070 = vand.u32 2147483647, %v870
  %v1071 = vand.u32 2147483647, %v871
  %v1072 = vand.u32 2147483647, %v872
  %v1073 = vand.u32 2147483647, %v873
  %v1098 = vrot.slane %v1050, 1
  %v1099 = vrot.slane %v1051, 1
  %v1100 = vsel %vm551, %v1098, %v1099
  %v1101 = vrot.slane %v1052, 1
  %v1102 = vrot.slane %v1053, 1
  %v1103 = vsel %vm551, %v1101, %v1102
  %v1104 = vrot.slane %v1054, 1
  %v1105 = vrot.slane %v1055, 1
  %v1106 = vsel %vm551, %v1104, %v1105
  %v1107 = vrot.slane %v1056, 1
  %v1108 = vrot.slane %v1057, 1
  %v1109 = vsel %vm551, %v1107, %v1108
  %v1110 = vrot.slane %v1058, 1
  %v1111 = vrot.slane %v1059, 1
  %v1112 = vsel %vm551, %v1110, %v1111
  %v1113 = vrot.slane %v1060, 1
  %v1114 = vrot.slane %v1061, 1
  %v1115 = vsel %vm551, %v1113, %v1114
  %v1116 = vrot.slane %v1062, 1
  %v1117 = vrot.slane %v1063, 1
  %v1118 = vsel %vm551, %v1116, %v1117
  %v1119 = vrot.slane %v1064, 1
  %v1120 = vrot.slane %v1065, 1
  %v1121 = vsel %vm551, %v1119, %v1120
  %v1122 = vrot.slane %v1066, 1
  %v1123 = vrot.slane %v1067, 1
  %v1124 = vsel %vm551, %v1122, %v1123
  %v1125 = vrot.slane %v1068, 1
  %v1126 = vrot.slane %v1069, 1
  %v1127 = vsel %vm551, %v1125, %v1126
  %v1128 = vrot.slane %v1070, 1
  %v1129 = vrot.slane %v1071, 1
  %v1130 = vsel %vm551, %v1128, %v1129
  %v1131 = vrot.slane %v1072, 1
  %v1132 = vrot.slane %v1073, 1
  %v1133 = vsel %vm551, %v1131, %v1132
  %v1158 = vsel %vm612, %v1100, 0.0
  %v1159 = vsel %vm614, %v1099, 0.0
  %v1160 = vadd.f32 %v1158, %v1159
  %v1161 = vsel %vm612, %v1103, 0.0
  %v1162 = vadd.f32 %v1160, %v1161
  %v1163 = vsel %vm614, %v1102, 0.0
  %v1164 = vadd.f32 %v1162, %v1163
  %v1165 = vsel %vm612, %v1106, 0.0
  %v1166 = vadd.f32 %v1164, %v1165
  %v1167 = vsel %vm614, %v1105, 0.0
  %v1168 = vadd.f32 %v1166, %v1167
  %v1169 = vsel %vm612, %v1109, 0.0
  %v1170 = vadd.f32 %v1168, %v1169
  %v1171 = vsel %vm614, %v1108, 0.0
  %v1172 = vadd.f32 %v1170, %v1171
  %v1173 = vsel %vm612, %v1112, 0.0
  %v1174 = vadd.f32 %v1172, %v1173
  %v1175 = vsel %vm614, %v1111, 0.0
  %v1176 = vadd.f32 %v1174, %v1175
  %v1177 = vsel %vm612, %v1115, 0.0
  %v1178 = vadd.f32 %v1176, %v1177
  %v1179 = vsel %vm614, %v1114, 0.0
  %v1180 = vadd.f32 %v1178, %v1179
  %v1181 = vsel %vm612, %v1118, 0.0
  %v1182 = vadd.f32 %v1180, %v1181
  %v1183 = vsel %vm614, %v1117, 0.0
  %v1184 = vadd.f32 %v1182, %v1183
  %v1185 = vsel %vm612, %v1121, 0.0
  %v1186 = vadd.f32 %v1184, %v1185
  %v1187 = vsel %vm614, %v1120, 0.0
  %v1188 = vadd.f32 %v1186, %v1187
  %v1189 = vsel %vm612, %v1124, 0.0
  %v1190 = vadd.f32 %v1188, %v1189
  %v1191 = vsel %vm614, %v1123, 0.0
  %v1192 = vadd.f32 %v1190, %v1191
  %v1193 = vsel %vm612, %v1127, 0.0
  %v1194 = vadd.f32 %v1192, %v1193
  %v1195 = vsel %vm614, %v1126, 0.0
  %v1196 = vadd.f32 %v1194, %v1195
  %v1197 = vsel %vm612, %v1130, 0.0
  %v1198 = vadd.f32 %v1196, %v1197
  %v1199 = vsel %vm614, %v1129, 0.0
  %v1200 = vadd.f32 %v1198, %v1199
  %v1201 = vsel %vm612, %v1133, 0.0
  %v1202 = vadd.f32 %v1200, %v1201
  %v1203 = vsel %vm614, %v1132, 0.0
  %v1204 = vadd.f32 %v1202, %v1203
  %1205 = vadd.xlane.f32.xlu0 %v1204
  %v1206 = vpop.xlane.xlu0 %1205
  %v1207 = vrot.slane %v1206, 4
  %v1208 = vadd.f32 %v1206, %v1207
  %v1209 = vrot.slane %v1208, 2
  %v1210 = vadd.f32 %v1208, %v1209
  %v1211 = vrot.slane %v1210, 1
  %v1212 = vadd.f32 %v1210, %v1211
  %s1213 = vtos %v1212
  %v1214 = vld [vmem:[%s2] sm:$0xff]
  %v1215 = vstv %s502
  %v1216 = vadd.f32 %v1214, %v1215
  %1217 = vst [vmem:[%s2] sm:$0xff] %v1216
  %v1218 = vld [vmem:[%s3] sm:$0xff]
  %v1219 = vstv %s669
  %v1220 = vadd.f32 %v1218, %v1219
  %1221 = vst [vmem:[%s3] sm:$0xff] %v1220
  %v1222 = vld [vmem:[%s4] sm:$0xff]
  %v1223 = vstv %s1049
  %v1224 = vadd.f32 %v1222, %v1223
  %1225 = vst [vmem:[%s4] sm:$0xff] %v1224
  %v1226 = vld [vmem:[%s5] sm:$0xff]
  %v1227 = vstv %s1213
  %v1228 = vadd.f32 %v1226, %v1227
  %1229 = vst [vmem:[%s5] sm:$0xff] %v1228
  // Predicated region
  $region14: #{_lambda_.8} parent=0 // pred_check
    _
  $region15: #{_lambda_.8} parent=0 // pred_check_branch
    %1231 = sbr.rel (0) target = $region17
  $region16: #{_lambda_.8} parent=0 // pred_region
    _
  $region17: #{_lambda_.8} parent=0 // pred_fallthru
    _
  // Predicated region
  $region18: #{_lambda_.8} parent=0 // pred_check
    _
  $region19: #{_lambda_.8} parent=0 // pred_check_branch
    %1233 = sbr.rel (0) target = $region21
  $region20: #{_lambda_.8} parent=0 // pred_region
    _
  $region21: #{_lambda_.8} parent=0 // pred_fallthru
    _
  // Predicated region
  $region22: #{_lambda_.8} parent=0 // pred_check
    _
  $region23: #{_lambda_.8} parent=0 // pred_check_branch
    %1235 = sbr.rel (0) target = $region25
  $region24: #{_lambda_.8} parent=0 // pred_region
    _
  $region25: #{_lambda_.8} parent=0 // pred_fallthru
    _
  // Predicated region
  $region26: #{_lambda_.8} parent=0 // pred_check
    _
  $region27: #{_lambda_.8} parent=0 // pred_check_branch
    %1237 = sbr.rel (0) target = $region29
  $region28: #{_lambda_.8} parent=0 // pred_region
    _
  $region29: #{_lambda_.8} parent=0 // pred_fallthru
    _
  // Predicated region
  $region30: #{_lambda_.8} parent=0 // pred_check
    _
  $region31: #{_lambda_.8} parent=0 // pred_check_branch
    %1239 = sbr.rel (0) target = $region33
  $region32: #{_lambda_.8} parent=0 // pred_region
    _
  $region33: #{_lambda_.8} parent=0 // pred_fallthru
    _
  // Predicated region
  $region34: #{_lambda_.8} parent=0 // pred_check
    _
  $region35: #{_lambda_.8} parent=0 // pred_check_branch
    %1241 = sbr.rel (0) target = $region37
  $region36: #{_lambda_.8} parent=0 // pred_region
    _
  $region37: #{_lambda_.8} parent=0 // pred_fallthru
    _
  // Predicated region
  $region38: #{_lambda_.8} parent=0 // pred_check
    _
  $region39: #{_lambda_.8} parent=0 // pred_check_branch
    %1243 = sbr.rel (0) target = $region41
  $region40: #{_lambda_.8} parent=0 // pred_region
    _
  $region41: #{_lambda_.8} parent=0 // pred_fallthru
    _
  // Predicated region
  $region42: #{_lambda_.8} parent=0 // pred_check
    _
  $region43: #{_lambda_.8} parent=0 // pred_check_branch
    %1245 = sbr.rel (0) target = $region45
  $region44: #{_lambda_.8} parent=0 // pred_region
    _
  $region45: #{_lambda_.8} parent=0 // pred_fallthru
    _

// kernel: _lambda_.9
$region0: #{_lambda_.9}
  #allocation0 [shape = 'u32[]', space=smem, size = 0x4, offset = 0x4, fixed_abs, tag = 'smem constant byte address 0x4 - core index']
  #allocation1 [shape = 'u32[72,128]{1,0:T(1,128)}', space=vmem, size = 0x9000, scoped, tag = 'internal scratch']
  %s0 = inlined_call_operand.vmem [shape: f32[30,32,32], index: 0, kind: input, shape index: {}]
  %s1 = inlined_call_operand.vmem [shape: f32[30,32,32], index: 1, kind: input, shape index: {}]
  %s2 = inlined_call_operand.vmem [shape: f32[1,8,128], index: 2, kind: output, shape index: {}]
  %s3 = sld [smem:[#allocation0]]
  $region22: #{_lambda_.9} parent=0
    _
  %s5 = ssub.s32 1, %s3
  %s6 = scalar_select 0, %s5, %s3
  // Predicated region
  $region2: #{_lambda_.9} parent=0 // pred_check
    _
  $region3: #{_lambda_.9} parent=0 // pred_check_branch
    %8 = sbr.rel (0) target = $region5
  $region4: #{_lambda_.9} parent=0 // pred_region
    %s9 = sadd.s32 0, 0
    %s10 = smul.u32 30, %s9
    %p11 = scmp.lt.s32.totalorder %s10, 29
    %s12 = scalar_select %p11, %s10, 29
    %s13 = smul.addr %s12, 4
    %s14 = smul.addr %s13, 8
    %s15 = scalar_lea.vmem %s0, %s14
    %s16 = sadd.s32 0, 0
    %s17 = smul.u32 30, %s16
  $region5: #{_lambda_.9} parent=0 // pred_fallthru
    _
  // Predicated region
  $region6: #{_lambda_.9} parent=0 // pred_check
    _
  $region7: #{_lambda_.9} parent=0 // pred_check_branch
    %19 = sbr.rel (0) target = $region9
  $region8: #{_lambda_.9} parent=0 // pred_region
    %s20 = sadd.s32 0, 0
    %s21 = smul.u32 30, %s20
    %p22 = scmp.lt.s32.totalorder %s21, 29
    %s23 = scalar_select %p22, %s21, 29
    %s24 = smul.addr %s23, 4
    %s25 = smul.addr %s24, 8
    %s26 = scalar_lea.vmem %s1, %s25
    %s27 = sadd.s32 0, 0
    %s28 = smul.u32 30, %s27
  $region9: #{_lambda_.9} parent=0 // pred_fallthru
    _
  %s29 = sadd.s32 0, 0
  %s30 = smul.u32 30, %s29
  %p31 = scmp.lt.s32.totalorder %s30, 29
  %s32 = scalar_select %p31, %s30, 29
  %s33 = smul.addr %s32, 4
  %s34 = smul.addr %s33, 8
  %s35 = scalar_lea.vmem %s0, %s34
  %s36 = sadd.s32 0, 0
  %s37 = smul.u32 30, %s36
  %p38 = scmp.lt.s32.totalorder %s37, 29
  %s39 = scalar_select %p38, %s37, 29
  %s40 = smul.addr %s39, 4
  %s41 = smul.addr %s40, 8
  %s42 = scalar_lea.vmem %s1, %s41
  %s43 = sadd.s32 0, 0
  %s44 = smul.u32 30, %s43
  %p45 = scmp.lt.s32.totalorder %s44, 29
  %s46 = scalar_select %p45, %s44, 29
  %s47 = smul.addr %s46, 4
  %s48 = smul.addr %s47, 8
  %s49 = scalar_lea.vmem %s0, %s48
  %s50 = sadd.s32 0, 0
  %s51 = smul.u32 30, %s50
  %s52 = sadd.s32 0, 0
  %s53 = smul.u32 30, %s52
  %p54 = scmp.lt.s32.totalorder %s53, 29
  %s55 = scalar_select %p54, %s53, 29
  %s56 = smul.addr %s55, 4
  %s57 = smul.addr %s56, 8
  %s58 = scalar_lea.vmem %s1, %s57
  %s59 = sadd.s32 0, 0
  %s60 = smul.u32 30, %s59
  %p61 = scmp.eq.s32.totalorder 0, 0
  // Predicated region
  $region10: #{_lambda_.9} parent=0 // pred_check
    %p62 = pneg %p61
  $region11: #{_lambda_.9} parent=0 // pred_check_branch
    %64 = sbr.rel (%p62) target = $region13
  $region12: #{_lambda_.9} parent=0 // pred_region
    %65 = vst [vmem:[%s2] sm:$0xff] 0.0
  $region13: #{_lambda_.9} parent=0 // pred_fallthru
    _
  %v66 = vld [vmem:[%s49] sm:$0xff]
  %v67 = vld [vmem:[%s49 + $0x8] sm:$0xff]
  %v68 = vld [vmem:[%s49 + $0x10] sm:$0xff]
  %v69 = vld [vmem:[%s49 + $0x18] sm:$0xff]
  %v70 = vld [vmem:[%s49 + $0x20] sm:$0xff]
  %v71 = vld [vmem:[%s49 + $0x28] sm:$0xff]
  %v72 = vld [vmem:[%s49 + $0x30] sm:$0xff]
  %v73 = vld [vmem:[%s49 + $0x38] sm:$0xff]
  %v74 = vld [vmem:[%s49 + $0x40] sm:$0xff]
  %v75 = vld [vmem:[%s49 + $0x48] sm:$0xff]
  %v76 = vld [vmem:[%s49 + $0x50] sm:$0xff]
  %v77 = vld [vmem:[%s49 + $0x58] sm:$0xff]
  %v78 = vld [vmem:[%s49 + $0x60] sm:$0xff]
  %v79 = vld [vmem:[%s49 + $0x68] sm:$0xff]
  %v80 = vld [vmem:[%s49 + $0x70] sm:$0xff]
  %v81 = vld [vmem:[%s49 + $0x78] sm:$0xff]
  %v82 = vld [vmem:[%s49 + $0x80] sm:$0xff]
  %v83 = vld [vmem:[%s49 + $0x88] sm:$0xff]
  %v84 = vld [vmem:[%s49 + $0x90] sm:$0xff]
  %v85 = vld [vmem:[%s49 + $0x98] sm:$0xff]
  %v86 = vld [vmem:[%s49 + $0xa0] sm:$0xff]
  %v87 = vld [vmem:[%s49 + $0xa8] sm:$0xff]
  %v88 = vld [vmem:[%s49 + $0xb0] sm:$0xff]
  %v89 = vld [vmem:[%s49 + $0xb8] sm:$0xff]
  %v90 = vld [vmem:[%s49 + $0xc0] sm:$0xff]
  %v91 = vld [vmem:[%s49 + $0xc8] sm:$0xff]
  %v92 = vld [vmem:[%s49 + $0xd0] sm:$0xff]
  %v93 = vld [vmem:[%s49 + $0xd8] sm:$0xff]
  %v94 = vld [vmem:[%s49 + $0xe0] sm:$0xff]
  %v95 = vld [vmem:[%s49 + $0xe8] sm:$0xff]
  %v96 = vld [vmem:[%s49 + $0xf0] sm:$0xff]
  %v97 = vld [vmem:[%s49 + $0xf8] sm:$0xff]
  %v98 = vld [vmem:[%s49 + $0x100] sm:$0xff]
  %v99 = vld [vmem:[%s49 + $0x108] sm:$0xff]
  %v100 = vld [vmem:[%s49 + $0x110] sm:$0xff]
  %v101 = vld [vmem:[%s49 + $0x118] sm:$0xff]
  %v102 = vld [vmem:[%s49 + $0x120] sm:$0xff]
  %v103 = vld [vmem:[%s49 + $0x128] sm:$0xff]
  %v104 = vld [vmem:[%s49 + $0x130] sm:$0xff]
  %v105 = vld [vmem:[%s49 + $0x138] sm:$0xff]
  %v106 = vld [vmem:[%s49 + $0x140] sm:$0xff]
  %v107 = vld [vmem:[%s49 + $0x148] sm:$0xff]
  %v108 = vld [vmem:[%s49 + $0x150] sm:$0xff]
  %v109 = vld [vmem:[%s49 + $0x158] sm:$0xff]
  %v110 = vld [vmem:[%s49 + $0x160] sm:$0xff]
  %v111 = vld [vmem:[%s49 + $0x168] sm:$0xff]
  %v112 = vld [vmem:[%s49 + $0x170] sm:$0xff]
  %v113 = vld [vmem:[%s49 + $0x178] sm:$0xff]
  %v114 = vld [vmem:[%s49 + $0x180] sm:$0xff]
  %v115 = vld [vmem:[%s49 + $0x188] sm:$0xff]
  %v116 = vld [vmem:[%s49 + $0x190] sm:$0xff]
  %v117 = vld [vmem:[%s49 + $0x198] sm:$0xff]
  %v118 = vld [vmem:[%s49 + $0x1a0] sm:$0xff]
  %v119 = vld [vmem:[%s49 + $0x1a8] sm:$0xff]
  %v120 = vld [vmem:[%s49 + $0x1b0] sm:$0xff]
  %v121 = vld [vmem:[%s49 + $0x1b8] sm:$0xff]
  %v122 = vld [vmem:[%s49 + $0x1c0] sm:$0xff]
  %v123 = vld [vmem:[%s49 + $0x1c8] sm:$0xff]
  %v124 = vld [vmem:[%s49 + $0x1d0] sm:$0xff]
  %v125 = vld [vmem:[%s49 + $0x1d8] sm:$0xff]
  %v126 = vld [vmem:[%s49 + $0x1e0] sm:$0xff]
  %v127 = vld [vmem:[%s49 + $0x1e8] sm:$0xff]
  %v128 = vld [vmem:[%s49 + $0x1f0] sm:$0xff]
  %v129 = vld [vmem:[%s49 + $0x1f8] sm:$0xff]
  %v130 = vld [vmem:[%s49 + $0x200] sm:$0xff]
  %v131 = vld [vmem:[%s49 + $0x208] sm:$0xff]
  %v132 = vld [vmem:[%s49 + $0x210] sm:$0xff]
  %v133 = vld [vmem:[%s49 + $0x218] sm:$0xff]
  %v134 = vld [vmem:[%s49 + $0x220] sm:$0xff]
  %v135 = vld [vmem:[%s49 + $0x228] sm:$0xff]
  %v136 = vld [vmem:[%s49 + $0x230] sm:$0xff]
  %v137 = vld [vmem:[%s49 + $0x238] sm:$0xff]
  %v138 = vld [vmem:[%s49 + $0x240] sm:$0xff]
  %v139 = vld [vmem:[%s49 + $0x248] sm:$0xff]
  %v140 = vld [vmem:[%s49 + $0x250] sm:$0xff]
  %v141 = vld [vmem:[%s49 + $0x258] sm:$0xff]
  %v142 = vld [vmem:[%s49 + $0x260] sm:$0xff]
  %v143 = vld [vmem:[%s49 + $0x268] sm:$0xff]
  %v144 = vld [vmem:[%s49 + $0x270] sm:$0xff]
  %v145 = vld [vmem:[%s49 + $0x278] sm:$0xff]
  %v146 = vld [vmem:[%s49 + $0x280] sm:$0xff]
  %v147 = vld [vmem:[%s49 + $0x288] sm:$0xff]
  %v148 = vld [vmem:[%s49 + $0x290] sm:$0xff]
  %v149 = vld [vmem:[%s49 + $0x298] sm:$0xff]
  %v150 = vld [vmem:[%s49 + $0x2a0] sm:$0xff]
  %v151 = vld [vmem:[%s49 + $0x2a8] sm:$0xff]
  %v152 = vld [vmem:[%s49 + $0x2b0] sm:$0xff]
  %v153 = vld [vmem:[%s49 + $0x2b8] sm:$0xff]
  %v154 = vld [vmem:[%s49 + $0x2c0] sm:$0xff]
  %v155 = vld [vmem:[%s49 + $0x2c8] sm:$0xff]
  %v156 = vld [vmem:[%s49 + $0x2d0] sm:$0xff]
  %v157 = vld [vmem:[%s49 + $0x2d8] sm:$0xff]
  %v158 = vld [vmem:[%s49 + $0x2e0] sm:$0xff]
  %v159 = vld [vmem:[%s49 + $0x2e8] sm:$0xff]
  %v160 = vld [vmem:[%s49 + $0x2f0] sm:$0xff]
  %v161 = vld [vmem:[%s49 + $0x2f8] sm:$0xff]
  %v162 = vld [vmem:[%s49 + $0x300] sm:$0xff]
  %v163 = vld [vmem:[%s49 + $0x308] sm:$0xff]
  %v164 = vld [vmem:[%s49 + $0x310] sm:$0xff]
  %v165 = vld [vmem:[%s49 + $0x318] sm:$0xff]
  %v166 = vld [vmem:[%s49 + $0x320] sm:$0xff]
  %v167 = vld [vmem:[%s49 + $0x328] sm:$0xff]
  %v168 = vld [vmem:[%s49 + $0x330] sm:$0xff]
  %v169 = vld [vmem:[%s49 + $0x338] sm:$0xff]
  %v170 = vld [vmem:[%s49 + $0x340] sm:$0xff]
  %v171 = vld [vmem:[%s49 + $0x348] sm:$0xff]
  %v172 = vld [vmem:[%s49 + $0x350] sm:$0xff]
  %v173 = vld [vmem:[%s49 + $0x358] sm:$0xff]
  %v174 = vld [vmem:[%s49 + $0x360] sm:$0xff]
  %v175 = vld [vmem:[%s49 + $0x368] sm:$0xff]
  %v176 = vld [vmem:[%s49 + $0x370] sm:$0xff]
  %v177 = vld [vmem:[%s49 + $0x378] sm:$0xff]
  %v178 = vld [vmem:[%s49 + $0x380] sm:$0xff]
  %v179 = vld [vmem:[%s49 + $0x388] sm:$0xff]
  %v180 = vld [vmem:[%s49 + $0x390] sm:$0xff]
  %v181 = vld [vmem:[%s49 + $0x398] sm:$0xff]
  %v182 = vld [vmem:[%s49 + $0x3a0] sm:$0xff]
  %v183 = vld [vmem:[%s49 + $0x3a8] sm:$0xff]
  %v184 = vld [vmem:[%s49 + $0x3b0] sm:$0xff]
  %v185 = vld [vmem:[%s49 + $0x3b8] sm:$0xff]
  %v186 = vld [vmem:[%s58] sm:$0xff]
  %v187 = vld [vmem:[%s58 + $0x8] sm:$0xff]
  %v188 = vld [vmem:[%s58 + $0x10] sm:$0xff]
  %v189 = vld [vmem:[%s58 + $0x18] sm:$0xff]
  %v190 = vld [vmem:[%s58 + $0x20] sm:$0xff]
  %v191 = vld [vmem:[%s58 + $0x28] sm:$0xff]
  %v192 = vld [vmem:[%s58 + $0x30] sm:$0xff]
  %v193 = vld [vmem:[%s58 + $0x38] sm:$0xff]
  %v194 = vld [vmem:[%s58 + $0x40] sm:$0xff]
  %v195 = vld [vmem:[%s58 + $0x48] sm:$0xff]
  %v196 = vld [vmem:[%s58 + $0x50] sm:$0xff]
  %v197 = vld [vmem:[%s58 + $0x58] sm:$0xff]
  %v198 = vld [vmem:[%s58 + $0x60] sm:$0xff]
  %v199 = vld [vmem:[%s58 + $0x68] sm:$0xff]
  %v200 = vld [vmem:[%s58 + $0x70] sm:$0xff]
  %v201 = vld [vmem:[%s58 + $0x78] sm:$0xff]
  %v202 = vld [vmem:[%s58 + $0x80] sm:$0xff]
  %v203 = vld [vmem:[%s58 + $0x88] sm:$0xff]
  %v204 = vld [vmem:[%s58 + $0x90] sm:$0xff]
  %v205 = vld [vmem:[%s58 + $0x98] sm:$0xff]
  %v206 = vld [vmem:[%s58 + $0xa0] sm:$0xff]
  %v207 = vld [vmem:[%s58 + $0xa8] sm:$0xff]
  %v208 = vld [vmem:[%s58 + $0xb0] sm:$0xff]
  %v209 = vld [vmem:[%s58 + $0xb8] sm:$0xff]
  %v210 = vld [vmem:[%s58 + $0xc0] sm:$0xff]
  %v211 = vld [vmem:[%s58 + $0xc8] sm:$0xff]
  %v212 = vld [vmem:[%s58 + $0xd0] sm:$0xff]
  %v213 = vld [vmem:[%s58 + $0xd8] sm:$0xff]
  %v214 = vld [vmem:[%s58 + $0xe0] sm:$0xff]
  %v215 = vld [vmem:[%s58 + $0xe8] sm:$0xff]
  %v216 = vld [vmem:[%s58 + $0xf0] sm:$0xff]
  %v217 = vld [vmem:[%s58 + $0xf8] sm:$0xff]
  %v218 = vld [vmem:[%s58 + $0x100] sm:$0xff]
  %v219 = vld [vmem:[%s58 + $0x108] sm:$0xff]
  %v220 = vld [vmem:[%s58 + $0x110] sm:$0xff]
  %v221 = vld [vmem:[%s58 + $0x118] sm:$0xff]
  %v222 = vld [vmem:[%s58 + $0x120] sm:$0xff]
  %v223 = vld [vmem:[%s58 + $0x128] sm:$0xff]
  %v224 = vld [vmem:[%s58 + $0x130] sm:$0xff]
  %v225 = vld [vmem:[%s58 + $0x138] sm:$0xff]
  %v226 = vld [vmem:[%s58 + $0x140] sm:$0xff]
  %v227 = vld [vmem:[%s58 + $0x148] sm:$0xff]
  %v228 = vld [vmem:[%s58 + $0x150] sm:$0xff]
  %v229 = vld [vmem:[%s58 + $0x158] sm:$0xff]
  %v230 = vld [vmem:[%s58 + $0x160] sm:$0xff]
  %v231 = vld [vmem:[%s58 + $0x168] sm:$0xff]
  %v232 = vld [vmem:[%s58 + $0x170] sm:$0xff]
  %v233 = vld [vmem:[%s58 + $0x178] sm:$0xff]
  %v234 = vld [vmem:[%s58 + $0x180] sm:$0xff]
  %v235 = vld [vmem:[%s58 + $0x188] sm:$0xff]
  %v236 = vld [vmem:[%s58 + $0x190] sm:$0xff]
  %v237 = vld [vmem:[%s58 + $0x198] sm:$0xff]
  %v238 = vld [vmem:[%s58 + $0x1a0] sm:$0xff]
  %v239 = vld [vmem:[%s58 + $0x1a8] sm:$0xff]
  %v240 = vld [vmem:[%s58 + $0x1b0] sm:$0xff]
  %v241 = vld [vmem:[%s58 + $0x1b8] sm:$0xff]
  %v242 = vld [vmem:[%s58 + $0x1c0] sm:$0xff]
  %v243 = vld [vmem:[%s58 + $0x1c8] sm:$0xff]
  %v244 = vld [vmem:[%s58 + $0x1d0] sm:$0xff]
  %v245 = vld [vmem:[%s58 + $0x1d8] sm:$0xff]
  %v246 = vld [vmem:[%s58 + $0x1e0] sm:$0xff]
  %v247 = vld [vmem:[%s58 + $0x1e8] sm:$0xff]
  %v248 = vld [vmem:[%s58 + $0x1f0] sm:$0xff]
  %v249 = vld [vmem:[%s58 + $0x1f8] sm:$0xff]
  %v250 = vld [vmem:[%s58 + $0x200] sm:$0xff]
  %v251 = vld [vmem:[%s58 + $0x208] sm:$0xff]
  %v252 = vld [vmem:[%s58 + $0x210] sm:$0xff]
  %v253 = vld [vmem:[%s58 + $0x218] sm:$0xff]
  %v254 = vld [vmem:[%s58 + $0x220] sm:$0xff]
  %v255 = vld [vmem:[%s58 + $0x228] sm:$0xff]
  %v256 = vld [vmem:[%s58 + $0x230] sm:$0xff]
  %v257 = vld [vmem:[%s58 + $0x238] sm:$0xff]
  %v258 = vld [vmem:[%s58 + $0x240] sm:$0xff]
  %v259 = vld [vmem:[%s58 + $0x248] sm:$0xff]
  %v260 = vld [vmem:[%s58 + $0x250] sm:$0xff]
  %v261 = vld [vmem:[%s58 + $0x258] sm:$0xff]
  %v262 = vld [vmem:[%s58 + $0x260] sm:$0xff]
  %v263 = vld [vmem:[%s58 + $0x268] sm:$0xff]
  %v264 = vld [vmem:[%s58 + $0x270] sm:$0xff]
  %v265 = vld [vmem:[%s58 + $0x278] sm:$0xff]
  %v266 = vld [vmem:[%s58 + $0x280] sm:$0xff]
  %v267 = vld [vmem:[%s58 + $0x288] sm:$0xff]
  %v268 = vld [vmem:[%s58 + $0x290] sm:$0xff]
  %v269 = vld [vmem:[%s58 + $0x298] sm:$0xff]
  %v270 = vld [vmem:[%s58 + $0x2a0] sm:$0xff]
  %v271 = vld [vmem:[%s58 + $0x2a8] sm:$0xff]
  %v272 = vld [vmem:[%s58 + $0x2b0] sm:$0xff]
  %v273 = vld [vmem:[%s58 + $0x2b8] sm:$0xff]
  %v274 = vld [vmem:[%s58 + $0x2c0] sm:$0xff]
  %v275 = vld [vmem:[%s58 + $0x2c8] sm:$0xff]
  %v276 = vld [vmem:[%s58 + $0x2d0] sm:$0xff]
  %v277 = vld [vmem:[%s58 + $0x2d8] sm:$0xff]
  %v278 = vld [vmem:[%s58 + $0x2e0] sm:$0xff]
  %v279 = vld [vmem:[%s58 + $0x2e8] sm:$0xff]
  %v280 = vld [vmem:[%s58 + $0x2f0] sm:$0xff]
  %v281 = vld [vmem:[%s58 + $0x2f8] sm:$0xff]
  %v282 = vld [vmem:[%s58 + $0x300] sm:$0xff]
  %v283 = vld [vmem:[%s58 + $0x308] sm:$0xff]
  %v284 = vld [vmem:[%s58 + $0x310] sm:$0xff]
  %v285 = vld [vmem:[%s58 + $0x318] sm:$0xff]
  %v286 = vld [vmem:[%s58 + $0x320] sm:$0xff]
  %v287 = vld [vmem:[%s58 + $0x328] sm:$0xff]
  %v288 = vld [vmem:[%s58 + $0x330] sm:$0xff]
  %v289 = vld [vmem:[%s58 + $0x338] sm:$0xff]
  %v290 = vld [vmem:[%s58 + $0x340] sm:$0xff]
  %v291 = vld [vmem:[%s58 + $0x348] sm:$0xff]
  %v292 = vld [vmem:[%s58 + $0x350] sm:$0xff]
  %v293 = vld [vmem:[%s58 + $0x358] sm:$0xff]
  %v294 = vld [vmem:[%s58 + $0x360] sm:$0xff]
  %v295 = vld [vmem:[%s58 + $0x368] sm:$0xff]
  %v296 = vld [vmem:[%s58 + $0x370] sm:$0xff]
  %v297 = vld [vmem:[%s58 + $0x378] sm:$0xff]
  %v298 = vld [vmem:[%s58 + $0x380] sm:$0xff]
  %v299 = vld [vmem:[%s58 + $0x388] sm:$0xff]
  %v300 = vld [vmem:[%s58 + $0x390] sm:$0xff]
  %v301 = vld [vmem:[%s58 + $0x398] sm:$0xff]
  %v302 = vld [vmem:[%s58 + $0x3a0] sm:$0xff]
  %v303 = vld [vmem:[%s58 + $0x3a8] sm:$0xff]
  %v304 = vld [vmem:[%s58 + $0x3b0] sm:$0xff]
  %v305 = vld [vmem:[%s58 + $0x3b8] sm:$0xff]
  %v306 = vsub.f32 %v66, %v186
  %v307 = vsub.f32 %v67, %v187
  %v308 = vsub.f32 %v68, %v188
  %v309 = vsub.f32 %v69, %v189
  %v310 = vsub.f32 %v70, %v190
  %v311 = vsub.f32 %v71, %v191
  %v312 = vsub.f32 %v72, %v192
  %v313 = vsub.f32 %v73, %v193
  %v314 = vsub.f32 %v74, %v194
  %v315 = vsub.f32 %v75, %v195
  %v316 = vsub.f32 %v76, %v196
  %v317 = vsub.f32 %v77, %v197
  %v318 = vsub.f32 %v78, %v198
  %v319 = vsub.f32 %v79, %v199
  %v320 = vsub.f32 %v80, %v200
  %v321 = vsub.f32 %v81, %v201
  %v322 = vsub.f32 %v82, %v202
  %v323 = vsub.f32 %v83, %v203
  %v324 = vsub.f32 %v84, %v204
  %v325 = vsub.f32 %v85, %v205
  %v326 = vsub.f32 %v86, %v206
  %v327 = vsub.f32 %v87, %v207
  %v328 = vsub.f32 %v88, %v208
  %v329 = vsub.f32 %v89, %v209
  %v330 = vsub.f32 %v90, %v210
  %v331 = vsub.f32 %v91, %v211
  %v332 = vsub.f32 %v92, %v212
  %v333 = vsub.f32 %v93, %v213
  %v334 = vsub.f32 %v94, %v214
  %v335 = vsub.f32 %v95, %v215
  %v336 = vsub.f32 %v96, %v216
  %v337 = vsub.f32 %v97, %v217
  %v338 = vsub.f32 %v98, %v218
  %v339 = vsub.f32 %v99, %v219
  %v340 = vsub.f32 %v100, %v220
  %v341 = vsub.f32 %v101, %v221
  %v342 = vsub.f32 %v102, %v222
  %v343 = vsub.f32 %v103, %v223
  %v344 = vsub.f32 %v104, %v224
  %v345 = vsub.f32 %v105, %v225
  %v346 = vsub.f32 %v106, %v226
  %v347 = vsub.f32 %v107, %v227
  %v348 = vsub.f32 %v108, %v228
  %v349 = vsub.f32 %v109, %v229
  %v350 = vsub.f32 %v110, %v230
  %v351 = vsub.f32 %v111, %v231
  %v352 = vsub.f32 %v112, %v232
  %v353 = vsub.f32 %v113, %v233
  %v354 = vsub.f32 %v114, %v234
  %v355 = vsub.f32 %v115, %v235
  %v356 = vsub.f32 %v116, %v236
  %v357 = vsub.f32 %v117, %v237
  %v358 = vsub.f32 %v118, %v238
  %v359 = vsub.f32 %v119, %v239
  %v360 = vsub.f32 %v120, %v240
  %v361 = vsub.f32 %v121, %v241
  %v362 = vsub.f32 %v122, %v242
  %v363 = vsub.f32 %v123, %v243
  %v364 = vsub.f32 %v124, %v244
  %v365 = vsub.f32 %v125, %v245
  %v366 = vsub.f32 %v126, %v246
  %v367 = vsub.f32 %v127, %v247
  %v368 = vsub.f32 %v128, %v248
  %v369 = vsub.f32 %v129, %v249
  %v370 = vsub.f32 %v130, %v250
  %v371 = vsub.f32 %v131, %v251
  %v372 = vsub.f32 %v132, %v252
  %v373 = vsub.f32 %v133, %v253
  %v374 = vsub.f32 %v134, %v254
  %v375 = vsub.f32 %v135, %v255
  %v376 = vsub.f32 %v136, %v256
  %v377 = vsub.f32 %v137, %v257
  %v378 = vsub.f32 %v138, %v258
  %v379 = vsub.f32 %v139, %v259
  %v380 = vsub.f32 %v140, %v260
  %v381 = vsub.f32 %v141, %v261
  %v382 = vsub.f32 %v142, %v262
  %v383 = vsub.f32 %v143, %v263
  %v384 = vsub.f32 %v144, %v264
  %v385 = vsub.f32 %v145, %v265
  %v386 = vsub.f32 %v146, %v266
  %v387 = vsub.f32 %v147, %v267
  %v388 = vsub.f32 %v148, %v268
  %v389 = vsub.f32 %v149, %v269
  %v390 = vsub.f32 %v150, %v270
  %v391 = vsub.f32 %v151, %v271
  %v392 = vsub.f32 %v152, %v272
  %v393 = vsub.f32 %v153, %v273
  %v394 = vsub.f32 %v154, %v274
  %v395 = vsub.f32 %v155, %v275
  %v396 = vsub.f32 %v156, %v276
  %v397 = vsub.f32 %v157, %v277
  %v398 = vsub.f32 %v158, %v278
  %v399 = vsub.f32 %v159, %v279
  %v400 = vsub.f32 %v160, %v280
  %v401 = vsub.f32 %v161, %v281
  %v402 = vsub.f32 %v162, %v282
  %v403 = vsub.f32 %v163, %v283
  %v404 = vsub.f32 %v164, %v284
  %v405 = vsub.f32 %v165, %v285
  %v406 = vsub.f32 %v166, %v286
  %v407 = vsub.f32 %v167, %v287
  %v408 = vsub.f32 %v168, %v288
  %v409 = vsub.f32 %v169, %v289
  %v410 = vsub.f32 %v170, %v290
  %v411 = vsub.f32 %v171, %v291
  %v412 = vsub.f32 %v172, %v292
  %v413 = vsub.f32 %v173, %v293
  %v414 = vsub.f32 %v174, %v294
  %v415 = vsub.f32 %v175, %v295
  %v416 = vsub.f32 %v176, %v296
  %v417 = vsub.f32 %v177, %v297
  %v418 = vsub.f32 %v178, %v298
  %v419 = vsub.f32 %v179, %v299
  %v420 = vsub.f32 %v180, %v300
  %v421 = vsub.f32 %v181, %v301
  %v422 = vsub.f32 %v182, %v302
  %v423 = vsub.f32 %v183, %v303
  %v424 = vsub.f32 %v184, %v304
  %v425 = vsub.f32 %v185, %v305
  %v426 = vand.u32 2147483647, %v306
  %v427 = vand.u32 2147483647, %v307
  %v428 = vand.u32 2147483647, %v308
  %v429 = vand.u32 2147483647, %v309
  %v430 = vand.u32 2147483647, %v310
  %v431 = vand.u32 2147483647, %v311
  %v432 = vand.u32 2147483647, %v312
  %v433 = vand.u32 2147483647, %v313
  %v434 = vand.u32 2147483647, %v314
  %v435 = vand.u32 2147483647, %v315
  %v436 = vand.u32 2147483647, %v316
  %v437 = vand.u32 2147483647, %v317
  %v438 = vand.u32 2147483647, %v318
  %v439 = vand.u32 2147483647, %v319
  %v440 = vand.u32 2147483647, %v320
  %v441 = vand.u32 2147483647, %v321
  %v442 = vand.u32 2147483647, %v322
  %v443 = vand.u32 2147483647, %v323
  %v444 = vand.u32 2147483647, %v324
  %v445 = vand.u32 2147483647, %v325
  %v446 = vand.u32 2147483647, %v326
  %v447 = vand.u32 2147483647, %v327
  %v448 = vand.u32 2147483647, %v328
  %v449 = vand.u32 2147483647, %v329
  %v450 = vand.u32 2147483647, %v330
  %v451 = vand.u32 2147483647, %v331
  %v452 = vand.u32 2147483647, %v332
  %v453 = vand.u32 2147483647, %v333
  %v454 = vand.u32 2147483647, %v334
  %v455 = vand.u32 2147483647, %v335
  %v456 = vand.u32 2147483647, %v336
  %v457 = vand.u32 2147483647, %v337
  %v458 = vand.u32 2147483647, %v338
  %v459 = vand.u32 2147483647, %v339
  %v460 = vand.u32 2147483647, %v340
  %v461 = vand.u32 2147483647, %v341
  %v462 = vand.u32 2147483647, %v342
  %v463 = vand.u32 2147483647, %v343
  %v464 = vand.u32 2147483647, %v344
  %v465 = vand.u32 2147483647, %v345
  %v466 = vand.u32 2147483647, %v346
  %v467 = vand.u32 2147483647, %v347
  %v468 = vand.u32 2147483647, %v348
  %v469 = vand.u32 2147483647, %v349
  %v470 = vand.u32 2147483647, %v350
  %v471 = vand.u32 2147483647, %v351
  %v472 = vand.u32 2147483647, %v352
  %v473 = vand.u32 2147483647, %v353
  %v474 = vand.u32 2147483647, %v354
  %v475 = vand.u32 2147483647, %v355
  %v476 = vand.u32 2147483647, %v356
  %v477 = vand.u32 2147483647, %v357
  %v478 = vand.u32 2147483647, %v358
  %v479 = vand.u32 2147483647, %v359
  %v480 = vand.u32 2147483647, %v360
  %v481 = vand.u32 2147483647, %v361
  %v482 = vand.u32 2147483647, %v362
  %v483 = vand.u32 2147483647, %v363
  %v484 = vand.u32 2147483647, %v364
  %v485 = vand.u32 2147483647, %v365
  %v486 = vand.u32 2147483647, %v366
  %v487 = vand.u32 2147483647, %v367
  %v488 = vand.u32 2147483647, %v368
  %v489 = vand.u32 2147483647, %v369
  %v490 = vand.u32 2147483647, %v370
  %v491 = vand.u32 2147483647, %v371
  %v492 = vand.u32 2147483647, %v372
  %v493 = vand.u32 2147483647, %v373
  %v494 = vand.u32 2147483647, %v374
  %v495 = vand.u32 2147483647, %v375
  %v496 = vand.u32 2147483647, %v376
  %v497 = vand.u32 2147483647, %v377
  %v498 = vand.u32 2147483647, %v378
  %v499 = vand.u32 2147483647, %v379
  %v500 = vand.u32 2147483647, %v380
  %v501 = vand.u32 2147483647, %v381
  %v502 = vand.u32 2147483647, %v382
  %v503 = vand.u32 2147483647, %v383
  %v504 = vand.u32 2147483647, %v384
  %v505 = vand.u32 2147483647, %v385
  %v506 = vand.u32 2147483647, %v386
  %v507 = vand.u32 2147483647, %v387
  %v508 = vand.u32 2147483647, %v388
  %v509 = vand.u32 2147483647, %v389
  %v510 = vand.u32 2147483647, %v390
  %v511 = vand.u32 2147483647, %v391
  %v512 = vand.u32 2147483647, %v392
  %v513 = vand.u32 2147483647, %v393
  %v514 = vand.u32 2147483647, %v394
  %v515 = vand.u32 2147483647, %v395
  %v516 = vand.u32 2147483647, %v396
  %v517 = vand.u32 2147483647, %v397
  %v518 = vand.u32 2147483647, %v398
  %v519 = vand.u32 2147483647, %v399
  %v520 = vand.u32 2147483647, %v400
  %v521 = vand.u32 2147483647, %v401
  %v522 = vand.u32 2147483647, %v402
  %v523 = vand.u32 2147483647, %v403
  %v524 = vand.u32 2147483647, %v404
  %v525 = vand.u32 2147483647, %v405
  %v526 = vand.u32 2147483647, %v406
  %v527 = vand.u32 2147483647, %v407
  %v528 = vand.u32 2147483647, %v408
  %v529 = vand.u32 2147483647, %v409
  %v530 = vand.u32 2147483647, %v410
  %v531 = vand.u32 2147483647, %v411
  %v532 = vand.u32 2147483647, %v412
  %v533 = vand.u32 2147483647, %v413
  %v534 = vand.u32 2147483647, %v414
  %v535 = vand.u32 2147483647, %v415
  %v536 = vand.u32 2147483647, %v416
  %v537 = vand.u32 2147483647, %v417
  %v538 = vand.u32 2147483647, %v418
  %v539 = vand.u32 2147483647, %v419
  %v540 = vand.u32 2147483647, %v420
  %v541 = vand.u32 2147483647, %v421
  %v542 = vand.u32 2147483647, %v422
  %v543 = vand.u32 2147483647, %v423
  %v544 = vand.u32 2147483647, %v424
  %v545 = vand.u32 2147483647, %v425
  %vm546 = vcmask 261120
  %v547 = vsel %vm546, %v426, 0.0
  %v548 = vsel %vm546, %v427, 0.0
  %v549 = vadd.f32 %v547, %v548
  %v550 = vsel %vm546, %v428, 0.0
  %v551 = vadd.f32 %v549, %v550
  %v552 = vsel %vm546, %v429, 0.0
  %v553 = vadd.f32 %v551, %v552
  %v554 = vsel %vm546, %v430, 0.0
  %v555 = vadd.f32 %v553, %v554
  %v556 = vsel %vm546, %v431, 0.0
  %v557 = vadd.f32 %v555, %v556
  %v558 = vsel %vm546, %v432, 0.0
  %v559 = vadd.f32 %v557, %v558
  %v560 = vsel %vm546, %v433, 0.0
  %v561 = vadd.f32 %v559, %v560
  %v562 = vsel %vm546, %v434, 0.0
  %v563 = vadd.f32 %v561, %v562
  %v564 = vsel %vm546, %v435, 0.0
  %v565 = vadd.f32 %v563, %v564
  %v566 = vsel %vm546, %v436, 0.0
  %v567 = vadd.f32 %v565, %v566
  %v568 = vsel %vm546, %v437, 0.0
  %v569 = vadd.f32 %v567, %v568
  %v570 = vsel %vm546, %v438, 0.0
  %v571 = vadd.f32 %v569, %v570
  %v572 = vsel %vm546, %v439, 0.0
  %v573 = vadd.f32 %v571, %v572
  %v574 = vsel %vm546, %v440, 0.0
  %v575 = vadd.f32 %v573, %v574
  %v576 = vsel %vm546, %v441, 0.0
  %v577 = vadd.f32 %v575, %v576
  %v578 = vsel %vm546, %v442, 0.0
  %v579 = vadd.f32 %v577, %v578
  %v580 = vsel %vm546, %v443, 0.0
  %v581 = vadd.f32 %v579, %v580
  %v582 = vsel %vm546, %v444, 0.0
  %v583 = vadd.f32 %v581, %v582
  %v584 = vsel %vm546, %v445, 0.0
  %v585 = vadd.f32 %v583, %v584
  %v586 = vsel %vm546, %v446, 0.0
  %v587 = vadd.f32 %v585, %v586
  %v588 = vsel %vm546, %v447, 0.0
  %v589 = vadd.f32 %v587, %v588
  %v590 = vsel %vm546, %v448, 0.0
  %v591 = vadd.f32 %v589, %v590
  %v592 = vsel %vm546, %v449, 0.0
  %v593 = vadd.f32 %v591, %v592
  %v594 = vsel %vm546, %v450, 0.0
  %v595 = vadd.f32 %v593, %v594
  %v596 = vsel %vm546, %v451, 0.0
  %v597 = vadd.f32 %v595, %v596
  %v598 = vsel %vm546, %v452, 0.0
  %v599 = vadd.f32 %v597, %v598
  %v600 = vsel %vm546, %v453, 0.0
  %v601 = vadd.f32 %v599, %v600
  %v602 = vsel %vm546, %v454, 0.0
  %v603 = vadd.f32 %v601, %v602
  %v604 = vsel %vm546, %v455, 0.0
  %v605 = vadd.f32 %v603, %v604
  %v606 = vsel %vm546, %v456, 0.0
  %v607 = vadd.f32 %v605, %v606
  %v608 = vsel %vm546, %v457, 0.0
  %v609 = vadd.f32 %v607, %v608
  %v610 = vsel %vm546, %v458, 0.0
  %v611 = vadd.f32 %v609, %v610
  %v612 = vsel %vm546, %v459, 0.0
  %v613 = vadd.f32 %v611, %v612
  %v614 = vsel %vm546, %v460, 0.0
  %v615 = vadd.f32 %v613, %v614
  %v616 = vsel %vm546, %v461, 0.0
  %v617 = vadd.f32 %v615, %v616
  %v618 = vsel %vm546, %v462, 0.0
  %v619 = vadd.f32 %v617, %v618
  %v620 = vsel %vm546, %v463, 0.0
  %v621 = vadd.f32 %v619, %v620
  %v622 = vsel %vm546, %v464, 0.0
  %v623 = vadd.f32 %v621, %v622
  %v624 = vsel %vm546, %v465, 0.0
  %v625 = vadd.f32 %v623, %v624
  %v626 = vsel %vm546, %v466, 0.0
  %v627 = vadd.f32 %v625, %v626
  %v628 = vsel %vm546, %v467, 0.0
  %v629 = vadd.f32 %v627, %v628
  %v630 = vsel %vm546, %v468, 0.0
  %v631 = vadd.f32 %v629, %v630
  %v632 = vsel %vm546, %v469, 0.0
  %v633 = vadd.f32 %v631, %v632
  %v634 = vsel %vm546, %v470, 0.0
  %v635 = vadd.f32 %v633, %v634
  %v636 = vsel %vm546, %v471, 0.0
  %v637 = vadd.f32 %v635, %v636
  %v638 = vsel %vm546, %v472, 0.0
  %v639 = vadd.f32 %v637, %v638
  %v640 = vsel %vm546, %v473, 0.0
  %v641 = vadd.f32 %v639, %v640
  %v642 = vsel %vm546, %v474, 0.0
  %v643 = vadd.f32 %v641, %v642
  %v644 = vsel %vm546, %v475, 0.0
  %v645 = vadd.f32 %v643, %v644
  %v646 = vsel %vm546, %v476, 0.0
  %v647 = vadd.f32 %v645, %v646
  %v648 = vsel %vm546, %v477, 0.0
  %v649 = vadd.f32 %v647, %v648
  %v650 = vsel %vm546, %v478, 0.0
  %v651 = vadd.f32 %v649, %v650
  %v652 = vsel %vm546, %v479, 0.0
  %v653 = vadd.f32 %v651, %v652
  %v654 = vsel %vm546, %v480, 0.0
  %v655 = vadd.f32 %v653, %v654
  %v656 = vsel %vm546, %v481, 0.0
  %v657 = vadd.f32 %v655, %v656
  %v658 = vsel %vm546, %v482, 0.0
  %v659 = vadd.f32 %v657, %v658
  %v660 = vsel %vm546, %v483, 0.0
  %v661 = vadd.f32 %v659, %v660
  %v662 = vsel %vm546, %v484, 0.0
  %v663 = vadd.f32 %v661, %v662
  %v664 = vsel %vm546, %v485, 0.0
  %v665 = vadd.f32 %v663, %v664
  %v666 = vsel %vm546, %v486, 0.0
  %v667 = vadd.f32 %v665, %v666
  %v668 = vsel %vm546, %v487, 0.0
  %v669 = vadd.f32 %v667, %v668
  %v670 = vsel %vm546, %v488, 0.0
  %v671 = vadd.f32 %v669, %v670
  %v672 = vsel %vm546, %v489, 0.0
  %v673 = vadd.f32 %v671, %v672
  %v674 = vsel %vm546, %v490, 0.0
  %v675 = vadd.f32 %v673, %v674
  %v676 = vsel %vm546, %v491, 0.0
  %v677 = vadd.f32 %v675, %v676
  %v678 = vsel %vm546, %v492, 0.0
  %v679 = vadd.f32 %v677, %v678
  %v680 = vsel %vm546, %v493, 0.0
  %v681 = vadd.f32 %v679, %v680
  %v682 = vsel %vm546, %v494, 0.0
  %v683 = vadd.f32 %v681, %v682
  %v684 = vsel %vm546, %v495, 0.0
  %v685 = vadd.f32 %v683, %v684
  %v686 = vsel %vm546, %v496, 0.0
  %v687 = vadd.f32 %v685, %v686
  %v688 = vsel %vm546, %v497, 0.0
  %v689 = vadd.f32 %v687, %v688
  %v690 = vsel %vm546, %v498, 0.0
  %v691 = vadd.f32 %v689, %v690
  %v692 = vsel %vm546, %v499, 0.0
  %v693 = vadd.f32 %v691, %v692
  %v694 = vsel %vm546, %v500, 0.0
  %v695 = vadd.f32 %v693, %v694
  %v696 = vsel %vm546, %v501, 0.0
  %v697 = vadd.f32 %v695, %v696
  %v698 = vsel %vm546, %v502, 0.0
  %v699 = vadd.f32 %v697, %v698
  %v700 = vsel %vm546, %v503, 0.0
  %v701 = vadd.f32 %v699, %v700
  %v702 = vsel %vm546, %v504, 0.0
  %v703 = vadd.f32 %v701, %v702
  %v704 = vsel %vm546, %v505, 0.0
  %v705 = vadd.f32 %v703, %v704
  %v706 = vsel %vm546, %v506, 0.0
  %v707 = vadd.f32 %v705, %v706
  %v708 = vsel %vm546, %v507, 0.0
  %v709 = vadd.f32 %v707, %v708
  %v710 = vsel %vm546, %v508, 0.0
  %v711 = vadd.f32 %v709, %v710
  %v712 = vsel %vm546, %v509, 0.0
  %v713 = vadd.f32 %v711, %v712
  %v714 = vsel %vm546, %v510, 0.0
  %v715 = vadd.f32 %v713, %v714
  %v716 = vsel %vm546, %v511, 0.0
  %v717 = vadd.f32 %v715, %v716
  %v718 = vsel %vm546, %v512, 0.0
  %v719 = vadd.f32 %v717, %v718
  %v720 = vsel %vm546, %v513, 0.0
  %v721 = vadd.f32 %v719, %v720
  %v722 = vsel %vm546, %v514, 0.0
  %v723 = vadd.f32 %v721, %v722
  %v724 = vsel %vm546, %v515, 0.0
  %v725 = vadd.f32 %v723, %v724
  %v726 = vsel %vm546, %v516, 0.0
  %v727 = vadd.f32 %v725, %v726
  %v728 = vsel %vm546, %v517, 0.0
  %v729 = vadd.f32 %v727, %v728
  %v730 = vsel %vm546, %v518, 0.0
  %v731 = vadd.f32 %v729, %v730
  %v732 = vsel %vm546, %v519, 0.0
  %v733 = vadd.f32 %v731, %v732
  %v734 = vsel %vm546, %v520, 0.0
  %v735 = vadd.f32 %v733, %v734
  %v736 = vsel %vm546, %v521, 0.0
  %v737 = vadd.f32 %v735, %v736
  %v738 = vsel %vm546, %v522, 0.0
  %v739 = vadd.f32 %v737, %v738
  %v740 = vsel %vm546, %v523, 0.0
  %v741 = vadd.f32 %v739, %v740
  %v742 = vsel %vm546, %v524, 0.0
  %v743 = vadd.f32 %v741, %v742
  %v744 = vsel %vm546, %v525, 0.0
  %v745 = vadd.f32 %v743, %v744
  %v746 = vsel %vm546, %v526, 0.0
  %v747 = vadd.f32 %v745, %v746
  %v748 = vsel %vm546, %v527, 0.0
  %v749 = vadd.f32 %v747, %v748
  %v750 = vsel %vm546, %v528, 0.0
  %v751 = vadd.f32 %v749, %v750
  %v752 = vsel %vm546, %v529, 0.0
  %v753 = vadd.f32 %v751, %v752
  %v754 = vsel %vm546, %v530, 0.0
  %v755 = vadd.f32 %v753, %v754
  %v756 = vsel %vm546, %v531, 0.0
  %v757 = vadd.f32 %v755, %v756
  %v758 = vsel %vm546, %v532, 0.0
  %v759 = vadd.f32 %v757, %v758
  %v760 = vsel %vm546, %v533, 0.0
  %v761 = vadd.f32 %v759, %v760
  %v762 = vsel %vm546, %v534, 0.0
  %v763 = vadd.f32 %v761, %v762
  %v764 = vsel %vm546, %v535, 0.0
  %v765 = vadd.f32 %v763, %v764
  %v766 = vsel %vm546, %v536, 0.0
  %v767 = vadd.f32 %v765, %v766
  %v768 = vsel %vm546, %v537, 0.0
  %v769 = vadd.f32 %v767, %v768
  %v770 = vsel %vm546, %v538, 0.0
  %v771 = vadd.f32 %v769, %v770
  %v772 = vsel %vm546, %v539, 0.0
  %v773 = vadd.f32 %v771, %v772
  %v774 = vsel %vm546, %v540, 0.0
  %v775 = vadd.f32 %v773, %v774
  %v776 = vsel %vm546, %v541, 0.0
  %v777 = vadd.f32 %v775, %v776
  %v778 = vsel %vm546, %v542, 0.0
  %v779 = vadd.f32 %v777, %v778
  %v780 = vsel %vm546, %v543, 0.0
  %v781 = vadd.f32 %v779, %v780
  %v782 = vsel %vm546, %v544, 0.0
  %v783 = vadd.f32 %v781, %v782
  %v784 = vsel %vm546, %v545, 0.0
  %v785 = vadd.f32 %v783, %v784
  %786 = vadd.xlane.f32.xlu0 %v785
  %v787 = vpop.xlane.xlu0 %786
  %v788 = vrot.slane %v787, 4
  %v789 = vadd.f32 %v787, %v788
  %v790 = vrot.slane %v789, 2
  %v791 = vadd.f32 %v789, %v790
  %v792 = vrot.slane %v791, 1
  %v793 = vadd.f32 %v791, %v792
  %s794 = vtos %v793
  %v795 = vld [vmem:[%s2] sm:$0xff]
  %v796 = vstv %s794
  %v797 = vadd.f32 %v795, %v796
  %798 = vst [vmem:[%s2] sm:$0xff] %v797
  // Predicated region
  $region14: #{_lambda_.9} parent=0 // pred_check
    _
  $region15: #{_lambda_.9} parent=0 // pred_check_branch
    %800 = sbr.rel (0) target = $region17
  $region16: #{_lambda_.9} parent=0 // pred_region
    _
  $region17: #{_lambda_.9} parent=0 // pred_fallthru
    _
  // Predicated region
  $region18: #{_lambda_.9} parent=0 // pred_check
    _
  $region19: #{_lambda_.9} parent=0 // pred_check_branch
    %802 = sbr.rel (0) target = $region21
  $region20: #{_lambda_.9} parent=0 // pred_region
    _
  $region21: #{_lambda_.9} parent=0 // pred_fallthru
    _

</llo_original>
